<compile_context>
chip_gen: v7x
topology: tpu7x:2x2x1
jax: 0.10.0
libtpu: 0.0.40
codegen_flags: <defaults>
</compile_context>

<pallas_src>
import jax
import jax.numpy as jnp
from jax.experimental import pallas as pl
from jax.experimental.pallas import tpu as pltpu

INPUT_NC = 512                     # forward() hard-codes view(-1, 512*40*12)
IN_FEATURES = INPUT_NC * 40 * 12   # 245760
HID = INPUT_NC                     # 512
KT = 3840                          # fc1 K-tile (multiple of 128; 245760/3840 = 64 steps)


# ------------------------------ Pallas kernel ------------------------------ #

def mlp_kernel(scal_ref,            # SMEM (2,): [prelu_alpha, fc3_bias]
               x_ref,               # VMEM (N, KT)        input K-tile
               w1_ref,              # VMEM (KT, HID)      fc1 weight K-tile (in x out)
               b1_ref,              # VMEM (1, HID)
               w2_ref,              # VMEM (HID, HID)     fc2 weight (in x out)
               b2_ref,              # VMEM (1, HID)
               w3_ref,              # VMEM (1, HID)       fc3 weight row
               o_ref,               # VMEM (N, 1)         output
               acc_ref):            # VMEM scratch (N, HID) f32 accumulator
    k = pl.program_id(0)

    @pl.when(k == 0)
    def _():
        acc_ref[...] = jnp.zeros_like(acc_ref)

    # fc1 partial: (N, KT) @ (KT, HID) with f32 accumulation.
    acc_ref[...] += jnp.dot(x_ref[...], w1_ref[...],
                            preferred_element_type=jnp.float32)

    @pl.when(k == pl.num_programs(0) - 1)
    def _():
        a = scal_ref[0]            # shared PReLU weight
        b3 = scal_ref[1]           # fc3 bias

        h1 = acc_ref[...] + b1_ref[...]
        h1 = jnp.where(h1 >= 0, h1, a * h1)                      # PReLU

        h2 = jnp.dot(h1, w2_ref[...],
                     preferred_element_type=jnp.float32) + b2_ref[...]
        h2 = jnp.where(h2 >= 0, h2, a * h2)                      # PReLU (same alpha)

        # fc3 (512 -> 1): lane reduction instead of an N=1 matmul.
        out = jnp.sum(h2 * w3_ref[...], axis=1, keepdims=True) + b3
        o_ref[...] = out.astype(o_ref.dtype)


# --------------------------------- wrapper ---------------------------------- #

def feature_discriminator(x, params):
    """Forward pass of _FeatureDiscriminator.

    x: any shape with N * IN_FEATURES elements (e.g. (N, 512, 40, 12)).
    params: (w1t, b1, w2t, b2, w3, b3, alpha)
      w1t: (IN_FEATURES, HID)  == fc1.weight.T
      b1 : (HID,)
      w2t: (HID, HID)          == fc2.weight.T
      b2 : (HID,)
      w3 : (1, HID)            == fc3.weight
      b3 : (1,)
      alpha: scalar shared PReLU weight
    Returns a list with the single (N, 1) output (matching the PyTorch module).
    """
    w1t, b1, w2t, b2, w3, b3, alpha = params
    xf = x.reshape(-1, IN_FEATURES).astype(jnp.float32)
    n = xf.shape[0]
    ksteps = IN_FEATURES // KT

    scal = jnp.stack([jnp.asarray(alpha, jnp.float32).reshape(()),
                      jnp.asarray(b3, jnp.float32).reshape(())])

    out = pl.pallas_call(
        mlp_kernel,
        out_shape=jax.ShapeDtypeStruct((n, 1), jnp.float32),
        grid=(ksteps,),
        in_specs=[
            pl.BlockSpec(memory_space=pltpu.MemorySpace.SMEM),        # scal
            pl.BlockSpec((n, KT), lambda k: (0, k)),                  # x K-tile
            pl.BlockSpec((KT, HID), lambda k: (k, 0)),                # w1 K-tile
            pl.BlockSpec((1, HID), lambda k: (0, 0)),                 # b1
            pl.BlockSpec((HID, HID), lambda k: (0, 0)),               # w2
            pl.BlockSpec((1, HID), lambda k: (0, 0)),                 # b2
            pl.BlockSpec((1, HID), lambda k: (0, 0)),                 # w3 row
        ],
        out_specs=pl.BlockSpec((n, 1), lambda k: (0, 0)),
        scratch_shapes=[pltpu.VMEM((n, HID), jnp.float32)],
        compiler_params=pltpu.CompilerParams(
            dimension_semantics=("arbitrary",),     # K reduction, resident acc
            vmem_limit_bytes=40 * 1024 * 1024),
    )(scal, xf, w1t, b1.reshape(1, HID), w2t, b2.reshape(1, HID), w3)

    return [out]


# --------------------------- pure-JAX reference ----------------------------- #

def ref_forward(x, w1t, b1, w2t, b2, w3, b3, alpha):
    xf = x.reshape(-1, IN_FEATURES)
    h = xf @ w1t + b1
    h = jnp.where(h >= 0, h, alpha * h)
    h = h @ w2t + b2
    h = jnp.where(h >= 0, h, alpha * h)
    return h @ w3.T + b3


# ----------------------------------- main ----------------------------------- #

if __name__ == "__main__":
    key = jax.random.PRNGKey(0)
    ks = jax.random.split(key, 8)

    N = 2
    x = jax.random.normal(ks[0], (N, INPUT_NC, 40, 12), jnp.float32)

    def uinit(k, shape, fan_in):
        bound = 1.0 / float(fan_in) ** 0.5
        return jax.random.uniform(k, shape, jnp.float32, -bound, bound)

    # PyTorch nn.Linear default init (U(-1/sqrt(fan_in), 1/sqrt(fan_in))).
    w1t = uinit(ks[1], (IN_FEATURES, HID), IN_FEATURES)   # fc1.weight.T
    b1 = uinit(ks[2], (HID,), IN_FEATURES)
    w2t = uinit(ks[3], (HID, HID), HID)                   # fc2.weight.T
    b2 = uinit(ks[4], (HID,), HID)
    w3 = uinit(ks[5], (1, HID), HID)                      # fc3.weight
    b3 = uinit(ks[6], (1,), HID)
    alpha = jnp.float32(0.25)                             # single shared nn.PReLU weight

    params = (w1t, b1, w2t, b2, w3, b3, alpha)

    fwd = jax.jit(feature_discriminator)
    result = fwd(x, params)
    out = jax.block_until_ready(result[0])

    ref = ref_forward(x, w1t, b1, w2t, b2, w3, b3, alpha)
    assert out.shape == (N, 1)
    assert jnp.allclose(out, ref, atol=2e-3, rtol=2e-3), float(jnp.max(jnp.abs(out - ref)))

    print("KERNEL_OK")
</pallas_src>

<mosaic_0001>
module attributes {stable_mosaic.version = 11 : i64} {
  func.func @mlp_kernel(%arg0: i32, %arg1: memref<2xf32, #tpu.memory_space<smem>>, %arg2: memref<2x3840xf32, #tpu.memory_space<vmem>>, %arg3: memref<3840x512xf32, #tpu.memory_space<vmem>>, %arg4: memref<1x512xf32, #tpu.memory_space<vmem>>, %arg5: memref<512x512xf32, #tpu.memory_space<vmem>>, %arg6: memref<1x512xf32, #tpu.memory_space<vmem>>, %arg7: memref<1x512xf32, #tpu.memory_space<vmem>>, %arg8: memref<2x1xf32, #tpu.memory_space<vmem>>, %arg9: memref<2x512xf32, #tpu.memory_space<vmem>>) attributes {dimension_semantics = [#tpu.dimension_semantics<arbitrary>], iteration_bounds = array<i64: 64>, scalar_prefetch = 0 : i64, scratch_operands = 1 : i64, tpu.core_type = #tpu.core_type<tc>, window_params = [{transform_indices = @transform_0, window_bounds = array<i64: 2>}, {transform_indices = @transform_1, window_bounds = array<i64: 2, 3840>}, {transform_indices = @transform_2, window_bounds = array<i64: 3840, 512>}, {pipeline_mode = #tpu.pipeline_mode<synchronous>, transform_indices = @transform_3, window_bounds = array<i64: 1, 512>}, {pipeline_mode = #tpu.pipeline_mode<synchronous>, transform_indices = @transform_4, window_bounds = array<i64: 512, 512>}, {pipeline_mode = #tpu.pipeline_mode<synchronous>, transform_indices = @transform_5, window_bounds = array<i64: 1, 512>}, {pipeline_mode = #tpu.pipeline_mode<synchronous>, transform_indices = @transform_6, window_bounds = array<i64: 1, 512>}, {pipeline_mode = #tpu.pipeline_mode<synchronous>, transform_indices = @transform_7, window_bounds = array<i64: 2, 1>}]} {
    %c0_i32 = arith.constant 0 : i32
    %0 = arith.cmpi eq, %arg0, %c0_i32 : i32
    %1 = arith.extui %0 : i1 to i32
    %c0_i32_0 = arith.constant 0 : i32
    %2 = arith.cmpi ne, %1, %c0_i32_0 : i32
    scf.if %2 {
      %cst_9 = arith.constant 0.000000e+00 : f32
      %12 = vector.broadcast %cst_9 : f32 to vector<2x512xf32>
      %c0_10 = arith.constant 0 : index
      %c0_11 = arith.constant 0 : index
      %13 = vector.load %arg9[%c0_10, %c0_11] : memref<2x512xf32, #tpu.memory_space<vmem>>, vector<2x512xf32>
      tpu.vector_store %arg9[%c0_10, %c0_11], %12 {strides = array<i32>} : memref<2x512xf32, #tpu.memory_space<vmem>>, vector<2x512xf32>,
    } else {
    }
    %c0 = arith.constant 0 : index
    %c0_1 = arith.constant 0 : index
    %3 = vector.load %arg9[%c0, %c0_1] : memref<2x512xf32, #tpu.memory_space<vmem>>, vector<2x512xf32>
    %c0_2 = arith.constant 0 : index
    %c0_3 = arith.constant 0 : index
    %4 = vector.load %arg2[%c0_2, %c0_3] : memref<2x3840xf32, #tpu.memory_space<vmem>>, vector<2x3840xf32>
    %c0_4 = arith.constant 0 : index
    %c0_5 = arith.constant 0 : index
    %5 = vector.load %arg3[%c0_4, %c0_5] : memref<3840x512xf32, #tpu.memory_space<vmem>>, vector<3840x512xf32>
    %cst = arith.constant dense<0.000000e+00> : vector<2x512xf32>
    %6 = tpu.matmul %4, %5, %cst {dimension_numbers = #tpu.dot_dimension_numbers<[1], [0], [0], [1], [0, 0, 1, 1], [], []>} : vector<2x3840xf32>, vector<3840x512xf32>, vector<2x512xf32> -> vector<2x512xf32>
    %7 = arith.addf %3, %6 : vector<2x512xf32>
    %c0_6 = arith.constant 0 : index
    %c0_7 = arith.constant 0 : index
    %8 = vector.load %arg9[%c0_6, %c0_7] : memref<2x512xf32, #tpu.memory_space<vmem>>, vector<2x512xf32>
    tpu.vector_store %arg9[%c0_6, %c0_7], %7 {strides = array<i32>} : memref<2x512xf32, #tpu.memory_space<vmem>>, vector<2x512xf32>,
    %c63_i32 = arith.constant 63 : i32
    %9 = arith.cmpi eq, %arg0, %c63_i32 : i32
    %10 = arith.extui %9 : i1 to i32
    %c0_i32_8 = arith.constant 0 : i32
    %11 = arith.cmpi ne, %10, %c0_i32_8 : i32
    scf.if %11 {
      %c0_9 = arith.constant 0 : index
      %12 = memref.load %arg1[%c0_9] : memref<2xf32, #tpu.memory_space<smem>>
      %c1 = arith.constant 1 : index
      %13 = memref.load %arg1[%c1] : memref<2xf32, #tpu.memory_space<smem>>
      %c0_10 = arith.constant 0 : index
      %c0_11 = arith.constant 0 : index
      %14 = vector.load %arg9[%c0_10, %c0_11] : memref<2x512xf32, #tpu.memory_space<vmem>>, vector<2x512xf32>
      %c0_12 = arith.constant 0 : index
      %c0_13 = arith.constant 0 : index
      %15 = vector.load %arg4[%c0_12, %c0_13] : memref<1x512xf32, #tpu.memory_space<vmem>>, vector<1x512xf32>
      %16 = vector.broadcast %15 : vector<1x512xf32> to vector<2x512xf32>
      %17 = arith.addf %14, %16 : vector<2x512xf32>
      %cst_14 = arith.constant 0.000000e+00 : f32
      %18 = vector.broadcast %cst_14 : f32 to vector<2x512xf32>
      %19 = arith.cmpf oge, %17, %18 : vector<2x512xf32>
      %20 = vector.broadcast %12 : f32 to vector<2x512xf32>
      %21 = arith.mulf %20, %17 : vector<2x512xf32>
      %22 = arith.select %19, %17, %21 : vector<2x512xi1>, vector<2x512xf32>
      %c0_15 = arith.constant 0 : index
      %c0_16 = arith.constant 0 : index
      %23 = vector.load %arg5[%c0_15, %c0_16] : memref<512x512xf32, #tpu.memory_space<vmem>>, vector<512x512xf32>
      %cst_17 = arith.constant dense<0.000000e+00> : vector<2x512xf32>
      %24 = tpu.matmul %22, %23, %cst_17 {dimension_numbers = #tpu.dot_dimension_numbers<[1], [0], [0], [1], [0, 0, 1, 1], [], []>} : vector<2x512xf32>, vector<512x512xf32>, vector<2x512xf32> -> vector<2x512xf32>
      %c0_18 = arith.constant 0 : index
      %c0_19 = arith.constant 0 : index
      %25 = vector.load %arg6[%c0_18, %c0_19] : memref<1x512xf32, #tpu.memory_space<vmem>>, vector<1x512xf32>
      %26 = vector.broadcast %25 : vector<1x512xf32> to vector<2x512xf32>
      %27 = arith.addf %24, %26 : vector<2x512xf32>
      %cst_20 = arith.constant 0.000000e+00 : f32
      %28 = vector.broadcast %cst_20 : f32 to vector<2x512xf32>
      %29 = arith.cmpf oge, %27, %28 : vector<2x512xf32>
      %30 = vector.broadcast %12 : f32 to vector<2x512xf32>
      %31 = arith.mulf %30, %27 : vector<2x512xf32>
      %32 = arith.select %29, %27, %31 : vector<2x512xi1>, vector<2x512xf32>
      %c0_21 = arith.constant 0 : index
      %c0_22 = arith.constant 0 : index
      %33 = vector.load %arg7[%c0_21, %c0_22] : memref<1x512xf32, #tpu.memory_space<vmem>>, vector<1x512xf32>
      %34 = vector.broadcast %33 : vector<1x512xf32> to vector<2x512xf32>
      %35 = arith.mulf %32, %34 : vector<2x512xf32>
      %cst_23 = arith.constant dense<0.000000e+00> : vector<2xf32>
      %36 = vector.multi_reduction <add>, %35, %cst_23 [1] : vector<2x512xf32> to vector<2xf32>
      %37 = vector.shape_cast %36 : vector<2xf32> to vector<2x1xf32>
      %38 = vector.broadcast %13 : f32 to vector<2x1xf32>
      %39 = arith.addf %37, %38 : vector<2x1xf32>
      %c0_24 = arith.constant 0 : index
      %c0_25 = arith.constant 0 : index
      %40 = vector.load %arg8[%c0_24, %c0_25] : memref<2x1xf32, #tpu.memory_space<vmem>>, vector<2x1xf32>
      tpu.vector_store %arg8[%c0_24, %c0_25], %39 {strides = array<i32>} : memref<2x1xf32, #tpu.memory_space<vmem>>, vector<2x1xf32>,
    } else {
    }
    return
  }
  func.func @transform_0(%arg0: i32) -> i32 {
    %c0_i32 = arith.constant 0 : i32
    %c0_i32_0 = arith.constant 0 : i32
    return %c0_i32 : i32
  }
  func.func @transform_1(%arg0: i32) -> (i32, i32) {
    %c0_i32 = arith.constant 0 : i32
    %c0_i32_0 = arith.constant 0 : i32
    return %c0_i32, %arg0 : i32, i32
  }
  func.func @transform_2(%arg0: i32) -> (i32, i32) {
    %c0_i32 = arith.constant 0 : i32
    %c0_i32_0 = arith.constant 0 : i32
    return %arg0, %c0_i32 : i32, i32
  }
  func.func @transform_3(%arg0: i32) -> (i32, i32) {
    %c0_i32 = arith.constant 0 : i32
    %c0_i32_0 = arith.constant 0 : i32
    %c0_i32_1 = arith.constant 0 : i32
    return %c0_i32, %c0_i32_0 : i32, i32
  }
  func.func @transform_4(%arg0: i32) -> (i32, i32) {
    %c0_i32 = arith.constant 0 : i32
    %c0_i32_0 = arith.constant 0 : i32
    %c0_i32_1 = arith.constant 0 : i32
    return %c0_i32, %c0_i32_0 : i32, i32
  }
  func.func @transform_5(%arg0: i32) -> (i32, i32) {
    %c0_i32 = arith.constant 0 : i32
    %c0_i32_0 = arith.constant 0 : i32
    %c0_i32_1 = arith.constant 0 : i32
    return %c0_i32, %c0_i32_0 : i32, i32
  }
  func.func @transform_6(%arg0: i32) -> (i32, i32) {
    %c0_i32 = arith.constant 0 : i32
    %c0_i32_0 = arith.constant 0 : i32
    %c0_i32_1 = arith.constant 0 : i32
    return %c0_i32, %c0_i32_0 : i32, i32
  }
  func.func @transform_7(%arg0: i32) -> (i32, i32) {
    %c0_i32 = arith.constant 0 : i32
    %c0_i32_0 = arith.constant 0 : i32
    %c0_i32_1 = arith.constant 0 : i32
    return %c0_i32, %c0_i32_0 : i32, i32
  }
}

</mosaic_0001>

<llo_original>
// kernel: feature_discriminator.1
$region0: #{feature_discriminator.1}
  #allocation0 [shape = 'u32[]', space=smem, size = 0x4, offset = 0x4, fixed_abs, tag = 'smem constant byte address 0x4 - core index']
  #allocation1 [shape = 'u32[144,128]{1,0:T(1,128)}', space=vmem, size = 0x12000, scoped, tag = 'internal scratch']
  #allocation2 [shape = 'f32[2,512]{1,0:T(2,128)}', space=vmem, size = 0x1000, scoped, tag = 'scratch operand']
  %s0 = inlined_call_operand.vmem [shape: f32[2], index: 0, kind: input, shape index: {}]
  %s1 = inlined_call_operand.vmem [shape: f32[2,245760], index: 1, kind: input, shape index: {}]
  %s2 = inlined_call_operand.hbm [shape: f32[245760,512], index: 2, kind: input, shape index: {}]
  %s3 = inlined_call_operand.vmem [shape: f32[1,512], index: 3, kind: input, shape index: {}]
  %s4 = inlined_call_operand.vmem [shape: f32[512,512], index: 4, kind: input, shape index: {}]
  %s5 = inlined_call_operand.vmem [shape: f32[1,512], index: 5, kind: input, shape index: {}]
  %s6 = inlined_call_operand.vmem [shape: f32[1,512], index: 6, kind: input, shape index: {}]
  %s7 = inlined_call_operand.vmem [shape: f32[2,1], index: 7, kind: output, shape index: {}]
  %s8 = sld [smem:[#allocation0]]
  $region77: #{feature_discriminator.1} parent=0
    _
  %s10 = ssub.s32 1, %s8
  %s11 = scalar_select 0, %s10, %s8
  $region1: #{feature_discriminator.1} parent=0
    #allocation3 [shape = 'u8[512]{0}', space=smem, size = 0x200, scoped, tag = 'input window, operand 0, single buffered']
    #allocation4 [shape = 's32[2]{0}', space=sflag, size = 0x8, scoped, tag = 'scoped memory for feature_discriminator.1']
    #allocation5 [shape = 's32[2]{0}', space=sflag, size = 0x8, scoped, tag = 'scoped memory for feature_discriminator.1']
    #allocation6 [shape = 'u8[15728640]{0}', space=vmem, size = 0xf00000, scoped, tag = 'input window, operand 2']
    %12 = vsyncpa [#allocation5], 0
    %13 = vsyncpa [#allocation4], 0
    %s14 = scalar_lea.sflag [#allocation4], 1
    %15 = vsyncpa %s14, 0
    loop: start=0, step=1, limit=66
    $region2: #{feature_discriminator.1} parent=1 // loop_pre_header
      _
    $region3: #{feature_discriminator.1} parent=1 // loop_header
      %s17 = sphi 0, %s21
      %p18 = scmp.ge.s32.totalorder %s17, 66
      %s25 = sphi 0, %s25
      %s27 = sphi 0, %s25
      %s28 = sphi 0, %s27
      %s42 = sphi 0, %s28
      %s48 = sphi 0, %s50
      %s51 = sphi 0, %s48
      %s52 = sphi 0, %s51
      %s68 = sphi 0, %s52
      %s74 = sphi 0, %s76
      %s77 = sphi 0, %s74
      %s78 = sphi 0, %s77
      %s94 = sphi 0, %s78
      %s98 = sphi 0, %s98
      %s100 = sphi 0, %s98
      %s101 = sphi 0, %s100
      %s115 = sphi 0, %s101
      %s119 = sphi 0, %s119
      %s121 = sphi 0, %s119
      %s122 = sphi 0, %s121
      %s136 = sphi 0, %s122
      %s140 = sphi 0, %s140
      %s142 = sphi 0, %s140
      %s143 = sphi 0, %s142
      %s157 = sphi 0, %s143
      %s161 = sphi 0, %s161
      %s163 = sphi 0, %s161
      %s164 = sphi 0, %s163
      %s178 = sphi 0, %s164
      %s182 = sphi 0, %s182
      %s184 = sphi 0, %s182
      %s185 = sphi 0, %s184
      %s199 = sphi 0, %s185
    $region4: #{feature_discriminator.1} parent=1 // loop_header_branch
      %20 = sbr.rel (%p18) target = $region8
    $region5: #{feature_discriminator.1} parent=1 // loop_body
      %s22 = ssub.s32 %s17, 1
      %s23 = ssub.s32 %s17, 2
      %s24 = sadd.s32 %s17, 1
      %s26 = sadd.s32 %s25, 1
      %p29 = scmp.eq.s32.totalorder %s17, 63
      %p30 = scmp.ne.s32.totalorder %s25, %s27
      %p31 = scmp.eq.s32.totalorder %s17, 0
      %p32 = por %p30, %p31
      %p33 = scmp.ne.s32.totalorder %s25, %s27
      %p34 = scmp.eq.s32.totalorder %s22, 63
      %p35 = por %p33, %p34
      %p36 = scmp.ne.s32.totalorder %s27, %s28
      %p37 = scmp.eq.s32.totalorder %s22, 0
      %p38 = por %p36, %p37
      %p39 = scmp.ne.s32.totalorder %s27, %s28
      %p40 = scmp.eq.s32.totalorder %s23, 63
      %p41 = por %p39, %p40
      %p43 = scmp.ne.s32.totalorder %s28, %s42
      %p44 = scmp.eq.s32.totalorder %s23, 0
      %p45 = por %p43, %p44
      %s46 = ssub.s32 %s17, %s24
      %p47 = scmp.eq.s32.totalorder %s46, 0
      %s49 = sadd.s32 %s48, 1
      %s50 = scalar_select %p47, %s48, %s49
      %p53 = pneg %p47
      %p54 = scmp.eq.s32.totalorder %s17, 63
      %p55 = por %p53, %p54
      %p56 = scmp.ne.s32.totalorder %s48, %s51
      %p57 = scmp.eq.s32.totalorder %s17, 0
      %p58 = por %p56, %p57
      %p59 = scmp.ne.s32.totalorder %s48, %s51
      %p60 = scmp.eq.s32.totalorder %s22, 63
      %p61 = por %p59, %p60
      %p62 = scmp.ne.s32.totalorder %s51, %s52
      %p63 = scmp.eq.s32.totalorder %s22, 0
      %p64 = por %p62, %p63
      %p65 = scmp.ne.s32.totalorder %s51, %s52
      %p66 = scmp.eq.s32.totalorder %s23, 63
      %p67 = por %p65, %p66
      %p69 = scmp.ne.s32.totalorder %s52, %s68
      %p70 = scmp.eq.s32.totalorder %s23, 0
      %p71 = por %p69, %p70
      %s72 = ssub.s32 %s17, %s24
      %p73 = scmp.eq.s32.totalorder %s72, 0
      %s75 = sadd.s32 %s74, 1
      %s76 = scalar_select %p73, %s74, %s75
      %p79 = pneg %p73
      %p80 = scmp.eq.s32.totalorder %s17, 63
      %p81 = por %p79, %p80
      %p82 = scmp.ne.s32.totalorder %s74, %s77
      %p83 = scmp.eq.s32.totalorder %s17, 0
      %p84 = por %p82, %p83
      %p85 = scmp.ne.s32.totalorder %s74, %s77
      %p86 = scmp.eq.s32.totalorder %s22, 63
      %p87 = por %p85, %p86
      %p88 = scmp.ne.s32.totalorder %s77, %s78
      %p89 = scmp.eq.s32.totalorder %s22, 0
      %p90 = por %p88, %p89
      %p91 = scmp.ne.s32.totalorder %s77, %s78
      %p92 = scmp.eq.s32.totalorder %s23, 63
      %p93 = por %p91, %p92
      %p95 = scmp.ne.s32.totalorder %s78, %s94
      %p96 = scmp.eq.s32.totalorder %s23, 0
      %p97 = por %p95, %p96
      %s99 = sadd.s32 %s98, 1
      %p102 = scmp.eq.s32.totalorder %s17, 63
      %p103 = scmp.ne.s32.totalorder %s98, %s100
      %p104 = scmp.eq.s32.totalorder %s17, 0
      %p105 = por %p103, %p104
      %p106 = scmp.ne.s32.totalorder %s98, %s100
      %p107 = scmp.eq.s32.totalorder %s22, 63
      %p108 = por %p106, %p107
      %p109 = scmp.ne.s32.totalorder %s100, %s101
      %p110 = scmp.eq.s32.totalorder %s22, 0
      %p111 = por %p109, %p110
      %p112 = scmp.ne.s32.totalorder %s100, %s101
      %p113 = scmp.eq.s32.totalorder %s23, 63
      %p114 = por %p112, %p113
      %p116 = scmp.ne.s32.totalorder %s101, %s115
      %p117 = scmp.eq.s32.totalorder %s23, 0
      %p118 = por %p116, %p117
      %s120 = sadd.s32 %s119, 1
      %p123 = scmp.eq.s32.totalorder %s17, 63
      %p124 = scmp.ne.s32.totalorder %s119, %s121
      %p125 = scmp.eq.s32.totalorder %s17, 0
      %p126 = por %p124, %p125
      %p127 = scmp.ne.s32.totalorder %s119, %s121
      %p128 = scmp.eq.s32.totalorder %s22, 63
      %p129 = por %p127, %p128
      %p130 = scmp.ne.s32.totalorder %s121, %s122
      %p131 = scmp.eq.s32.totalorder %s22, 0
      %p132 = por %p130, %p131
      %p133 = scmp.ne.s32.totalorder %s121, %s122
      %p134 = scmp.eq.s32.totalorder %s23, 63
      %p135 = por %p133, %p134
      %p137 = scmp.ne.s32.totalorder %s122, %s136
      %p138 = scmp.eq.s32.totalorder %s23, 0
      %p139 = por %p137, %p138
      %s141 = sadd.s32 %s140, 1
      %p144 = scmp.eq.s32.totalorder %s17, 63
      %p145 = scmp.ne.s32.totalorder %s140, %s142
      %p146 = scmp.eq.s32.totalorder %s17, 0
      %p147 = por %p145, %p146
      %p148 = scmp.ne.s32.totalorder %s140, %s142
      %p149 = scmp.eq.s32.totalorder %s22, 63
      %p150 = por %p148, %p149
      %p151 = scmp.ne.s32.totalorder %s142, %s143
      %p152 = scmp.eq.s32.totalorder %s22, 0
      %p153 = por %p151, %p152
      %p154 = scmp.ne.s32.totalorder %s142, %s143
      %p155 = scmp.eq.s32.totalorder %s23, 63
      %p156 = por %p154, %p155
      %p158 = scmp.ne.s32.totalorder %s143, %s157
      %p159 = scmp.eq.s32.totalorder %s23, 0
      %p160 = por %p158, %p159
      %s162 = sadd.s32 %s161, 1
      %p165 = scmp.eq.s32.totalorder %s17, 63
      %p166 = scmp.ne.s32.totalorder %s161, %s163
      %p167 = scmp.eq.s32.totalorder %s17, 0
      %p168 = por %p166, %p167
      %p169 = scmp.ne.s32.totalorder %s161, %s163
      %p170 = scmp.eq.s32.totalorder %s22, 63
      %p171 = por %p169, %p170
      %p172 = scmp.ne.s32.totalorder %s163, %s164
      %p173 = scmp.eq.s32.totalorder %s22, 0
      %p174 = por %p172, %p173
      %p175 = scmp.ne.s32.totalorder %s163, %s164
      %p176 = scmp.eq.s32.totalorder %s23, 63
      %p177 = por %p175, %p176
      %p179 = scmp.ne.s32.totalorder %s164, %s178
      %p180 = scmp.eq.s32.totalorder %s23, 0
      %p181 = por %p179, %p180
      %s183 = sadd.s32 %s182, 1
      %p186 = scmp.eq.s32.totalorder %s17, 63
      %p187 = scmp.ne.s32.totalorder %s182, %s184
      %p188 = scmp.eq.s32.totalorder %s17, 0
      %p189 = por %p187, %p188
      %p190 = scmp.ne.s32.totalorder %s182, %s184
      %p191 = scmp.eq.s32.totalorder %s22, 63
      %p192 = por %p190, %p191
      %p193 = scmp.ne.s32.totalorder %s184, %s185
      %p194 = scmp.eq.s32.totalorder %s22, 0
      %p195 = por %p193, %p194
      %p196 = scmp.ne.s32.totalorder %s184, %s185
      %p197 = scmp.eq.s32.totalorder %s23, 63
      %p198 = por %p196, %p197
      %p200 = scmp.ne.s32.totalorder %s185, %s199
      %p201 = scmp.eq.s32.totalorder %s23, 0
      %p202 = por %p200, %p201
      %p203 = scmp.le.s32.totalorder 1, %s17
      %p204 = scmp.lt.s32.totalorder %s17, 65
      %p205 = pnand %p203, %p204
      %p206 = pneg %p205
      // Predicated region
      $region9: #{feature_discriminator.1} parent=5 // pred_check
        _
      $region10: #{feature_discriminator.1} parent=5 // pred_check_branch
        %208 = sbr.rel (%p205) target = $region12
      $region11: #{feature_discriminator.1} parent=5 // pred_region
        %s209 = ssub.s32 %s17, 1
        // Predicated region
        $region13: #{feature_discriminator.1} parent=11 // pred_check
          %p210 = pneg %p38
        $region14: #{feature_discriminator.1} parent=11 // pred_check_branch
          %212 = sbr.rel (%p210) target = $region16
        $region15: #{feature_discriminator.1} parent=11 // pred_region
          %s214 = ssub.s32 16, 16
          %215 = vsyncadd [#allocation5], %s214
          %s217 = sshll.u32 %s0, 4
          %s218 = int_to_ptr.vmem [resolvable:$true] %s217
          %220 = dma.vmem_to_smem %s218, 16, [#allocation3], [#allocation5]
        $region16: #{feature_discriminator.1} parent=11 // pred_fallthru
          _
        // Predicated region
        $region17: #{feature_discriminator.1} parent=11 // pred_check
          %p221 = pneg %p111
        $region18: #{feature_discriminator.1} parent=11 // pred_check_branch
          %223 = sbr.rel (%p221) target = $region20
        $region19: #{feature_discriminator.1} parent=11 // pred_region
          _
        $region20: #{feature_discriminator.1} parent=11 // pred_fallthru
          _
        // Predicated region
        $region21: #{feature_discriminator.1} parent=11 // pred_check
          %p224 = pneg %p132
        $region22: #{feature_discriminator.1} parent=11 // pred_check_branch
          %226 = sbr.rel (%p224) target = $region24
        $region23: #{feature_discriminator.1} parent=11 // pred_region
          _
        $region24: #{feature_discriminator.1} parent=11 // pred_fallthru
          _
        // Predicated region
        $region25: #{feature_discriminator.1} parent=11 // pred_check
          %p227 = pneg %p153
        $region26: #{feature_discriminator.1} parent=11 // pred_check_branch
          %229 = sbr.rel (%p227) target = $region28
        $region27: #{feature_discriminator.1} parent=11 // pred_region
          _
        $region28: #{feature_discriminator.1} parent=11 // pred_fallthru
          _
        // Predicated region
        $region29: #{feature_discriminator.1} parent=11 // pred_check
          %p230 = pneg %p174
        $region30: #{feature_discriminator.1} parent=11 // pred_check_branch
          %232 = sbr.rel (%p230) target = $region32
        $region31: #{feature_discriminator.1} parent=11 // pred_region
          _
        $region32: #{feature_discriminator.1} parent=11 // pred_fallthru
          _
      $region12: #{feature_discriminator.1} parent=5 // pred_fallthru
        _
      %p233 = scmp.lt.s32.totalorder %s17, 64
      // Predicated region
      $region33: #{feature_discriminator.1} parent=5 // pred_check
        %p234 = pneg %p233
      $region34: #{feature_discriminator.1} parent=5 // pred_check_branch
        %236 = sbr.rel (%p234) target = $region36
      $region35: #{feature_discriminator.1} parent=5 // pred_region
        // Predicated region
        $region37: #{feature_discriminator.1} parent=35 // pred_check
          %p237 = pneg %p58
        $region38: #{feature_discriminator.1} parent=35 // pred_check_branch
          %239 = sbr.rel (%p237) target = $region40
        $region39: #{feature_discriminator.1} parent=35 // pred_region
          %s240 = smul.u32 30, %s17
          %p241 = scmp.lt.s32.totalorder %s240, 1919
          %s242 = scalar_select %p241, %s240, 1919
          %s243 = smul.addr %s242, 2
          %s244 = scalar_lea.vmem %s1, %s243
          %s245 = smul.u32 30, %s17
        $region40: #{feature_discriminator.1} parent=35 // pred_fallthru
          _
        // Predicated region
        $region41: #{feature_discriminator.1} parent=35 // pred_check
          %p246 = pneg %p84
        $region42: #{feature_discriminator.1} parent=35 // pred_check_branch
          %248 = sbr.rel (%p246) target = $region44
        $region43: #{feature_discriminator.1} parent=35 // pred_region
          %s249 = sand.u32 %s74, 1
          %s250 = scalar_lea.sflag [#allocation4], %s249
          %s251 = sand.u32 %s74, 1
          %s252 = smul.addr %s251, 15360
          %s253 = scalar_lea.vmem [#allocation6], %s252
          %s254 = smul.u32 480, %s17
          %s256 = ssub.s32 245760, 245760
          %257 = vsyncadd %s250, %s256
          %s258 = smul.addr %s254, 4
          %s259 = smul.addr %s258, 128
          %s260 = scalar_lea.hbm %s2, %s259
          %s261 = sshll.u32 %s253, 4
          %s262 = int_to_ptr.vmem [resolvable:$true] %s261
          %267 = dma.hbm_to_vmem [thread:$0]  %s260, 245760, %s262, %s250, 512, 512, 32
        $region44: #{feature_discriminator.1} parent=35 // pred_fallthru
          _
      $region36: #{feature_discriminator.1} parent=5 // pred_fallthru
        _
      %p268 = scmp.le.s32.totalorder 1, %s17
      %p269 = scmp.lt.s32.totalorder %s17, 65
      %p270 = pnand %p268, %p269
      %p271 = pneg %p270
      // Predicated region
      $region45: #{feature_discriminator.1} parent=5 // pred_check
        _
      $region46: #{feature_discriminator.1} parent=5 // pred_check_branch
        %273 = sbr.rel (%p270) target = $region48
      $region47: #{feature_discriminator.1} parent=5 // pred_region
        %s274 = ssub.s32 %s17, 1
        // Predicated region
        $region49: #{feature_discriminator.1} parent=47 // pred_check
          %p275 = pneg %p38
        $region50: #{feature_discriminator.1} parent=47 // pred_check_branch
          %277 = sbr.rel (%p275) target = $region52
        $region51: #{feature_discriminator.1} parent=47 // pred_region
          %278 = dma.done [#allocation5], 16
        $region52: #{feature_discriminator.1} parent=47 // pred_fallthru
          _
        %s279 = sand.u32 %s77, 1
        %s280 = scalar_lea.sflag [#allocation4], %s279
        %s281 = sand.u32 %s77, 1
        %s282 = smul.addr %s281, 15360
        %s283 = scalar_lea.vmem [#allocation6], %s282
        // Predicated region
        $region53: #{feature_discriminator.1} parent=47 // pred_check
          %p284 = pneg %p90
        $region54: #{feature_discriminator.1} parent=47 // pred_check_branch
          %286 = sbr.rel (%p284) target = $region56
        $region55: #{feature_discriminator.1} parent=47 // pred_region
          %287 = dma.done %s280, 245760
        $region56: #{feature_discriminator.1} parent=47 // pred_fallthru
          _
        %288 = sfence
        %p289 = pneg %p38
        %p290 = pneg %p35
        %s291 = smul.u32 30, %s22
        %p292 = scmp.lt.s32.totalorder %s291, 1919
        %s293 = scalar_select %p292, %s291, 1919
        %s294 = smul.addr %s293, 2
        %s295 = scalar_lea.vmem %s1, %s294
        %p296 = pneg %p64
        %p297 = pneg %p61
        %s298 = sand.u32 %s77, 1
        %s299 = scalar_lea.sflag [#allocation4], %s298
        %s300 = sand.u32 %s77, 1
        %s301 = smul.addr %s300, 15360
        %s302 = scalar_lea.vmem [#allocation6], %s301
        %p303 = pneg %p90
        %p304 = pneg %p87
        %p305 = pneg %p111
        %p306 = pneg %p108
        %p307 = pneg %p132
        %p308 = pneg %p129
        %p309 = pneg %p153
        %p310 = pneg %p150
        %p311 = pneg %p174
        %p312 = pneg %p171
        %p313 = pneg %p195
        %p314 = pneg %p192
        %s315 = smul.u32 30, %s22
        %p316 = scmp.lt.s32.totalorder %s315, 1919
        %s317 = scalar_select %p316, %s315, 1919
        %s318 = smul.addr %s317, 2
        %s319 = scalar_lea.vmem %s1, %s318
        %s320 = smul.u32 30, %s22
        %s321 = smul.u32 480, %s22
        %p322 = scmp.eq.s32.totalorder %s22, 0
        // Predicated region
        $region57: #{feature_discriminator.1} parent=47 // pred_check
          %p323 = pneg %p322
        $region58: #{feature_discriminator.1} parent=47 // pred_check_branch
          %325 = sbr.rel (%p323) target = $region60
        $region59: #{feature_discriminator.1} parent=47 // pred_region
          %326 = vst [vmem:[#allocation2] sm:$0xff] 0.0
        $region60: #{feature_discriminator.1} parent=47 // pred_fallthru
          _
        %v327 = vld [vmem:[#allocation2] sm:$0xff]
        %v328 = vld [vmem:[%s319] sm:$0xff]
        %v329 = vld [vmem:[%s319 + $0x8] sm:$0xff]
        %v330 = vld [vmem:[%s319 + $0x10] sm:$0xff]
        %v331 = vld [vmem:[%s319 + $0x18] sm:$0xff]
        %v332 = vld [vmem:[%s319 + $0x20] sm:$0xff]
        %v333 = vld [vmem:[%s319 + $0x28] sm:$0xff]
        %v334 = vld [vmem:[%s319 + $0x30] sm:$0xff]
        %v335 = vld [vmem:[%s319 + $0x38] sm:$0xf]
        %v336 = vld [vmem:[%s283] sm:$0xff]
        %v337 = vld [vmem:[%s283 + $0x8] sm:$0xff]
        %v338 = vld [vmem:[%s283 + $0x10] sm:$0xff]
        %v339 = vld [vmem:[%s283 + $0x18] sm:$0xff]
        %v340 = vld [vmem:[%s283 + $0x20] sm:$0xff]
        %v341 = vld [vmem:[%s283 + $0x28] sm:$0xff]
        %v342 = vld [vmem:[%s283 + $0x30] sm:$0xff]
        %v343 = vld [vmem:[%s283 + $0x38] sm:$0xff]
        %v344 = vld [vmem:[%s283 + $0x40] sm:$0xff]
        %v345 = vld [vmem:[%s283 + $0x48] sm:$0xff]
        %v346 = vld [vmem:[%s283 + $0x50] sm:$0xff]
        %v347 = vld [vmem:[%s283 + $0x58] sm:$0xff]
        %v348 = vld [vmem:[%s283 + $0x60] sm:$0xff]
        %v349 = vld [vmem:[%s283 + $0x68] sm:$0xff]
        %v350 = vld [vmem:[%s283 + $0x70] sm:$0xff]
        %v351 = vld [vmem:[%s283 + $0x78] sm:$0xff]
        %v352 = vld [vmem:[%s283 + $0x80] sm:$0xff]
        %v353 = vld [vmem:[%s283 + $0x88] sm:$0xff]
        %v354 = vld [vmem:[%s283 + $0x90] sm:$0xff]
        %v355 = vld [vmem:[%s283 + $0x98] sm:$0xff]
        %v356 = vld [vmem:[%s283 + $0xa0] sm:$0xff]
        %v357 = vld [vmem:[%s283 + $0xa8] sm:$0xff]
        %v358 = vld [vmem:[%s283 + $0xb0] sm:$0xff]
        %v359 = vld [vmem:[%s283 + $0xb8] sm:$0xff]
        %v360 = vld [vmem:[%s283 + $0xc0] sm:$0xff]
        %v361 = vld [vmem:[%s283 + $0xc8] sm:$0xff]
        %v362 = vld [vmem:[%s283 + $0xd0] sm:$0xff]
        %v363 = vld [vmem:[%s283 + $0xd8] sm:$0xff]
        %v364 = vld [vmem:[%s283 + $0xe0] sm:$0xff]
        %v365 = vld [vmem:[%s283 + $0xe8] sm:$0xff]
        %v366 = vld [vmem:[%s283 + $0xf0] sm:$0xff]
        %v367 = vld [vmem:[%s283 + $0xf8] sm:$0xff]
        %v368 = vld [vmem:[%s283 + $0x100] sm:$0xff]
        %v369 = vld [vmem:[%s283 + $0x108] sm:$0xff]
        %v370 = vld [vmem:[%s283 + $0x110] sm:$0xff]
        %v371 = vld [vmem:[%s283 + $0x118] sm:$0xff]
        %v372 = vld [vmem:[%s283 + $0x120] sm:$0xff]
        %v373 = vld [vmem:[%s283 + $0x128] sm:$0xff]
        %v374 = vld [vmem:[%s283 + $0x130] sm:$0xff]
        %v375 = vld [vmem:[%s283 + $0x138] sm:$0xff]
        %v376 = vld [vmem:[%s283 + $0x140] sm:$0xff]
        %v377 = vld [vmem:[%s283 + $0x148] sm:$0xff]
        %v378 = vld [vmem:[%s283 + $0x150] sm:$0xff]
        %v379 = vld [vmem:[%s283 + $0x158] sm:$0xff]
        %v380 = vld [vmem:[%s283 + $0x160] sm:$0xff]
        %v381 = vld [vmem:[%s283 + $0x168] sm:$0xff]
        %v382 = vld [vmem:[%s283 + $0x170] sm:$0xff]
        %v383 = vld [vmem:[%s283 + $0x178] sm:$0xff]
        %v384 = vld [vmem:[%s283 + $0x180] sm:$0xff]
        %v385 = vld [vmem:[%s283 + $0x188] sm:$0xff]
        %v386 = vld [vmem:[%s283 + $0x190] sm:$0xff]
        %v387 = vld [vmem:[%s283 + $0x198] sm:$0xff]
        %v388 = vld [vmem:[%s283 + $0x1a0] sm:$0xff]
        %v389 = vld [vmem:[%s283 + $0x1a8] sm:$0xff]
        %v390 = vld [vmem:[%s283 + $0x1b0] sm:$0xff]
        %v391 = vld [vmem:[%s283 + $0x1b8] sm:$0xff]
        %v392 = vld [vmem:[%s283 + $0x1c0] sm:$0xff]
        %v393 = vld [vmem:[%s283 + $0x1c8] sm:$0xff]
        %v394 = vld [vmem:[%s283 + $0x1d0] sm:$0xff]
        %v395 = vld [vmem:[%s283 + $0x1d8] sm:$0xff]
        %v396 = vld [vmem:[%s283 + $0x1e0] sm:$0xff]
        %v397 = vld [vmem:[%s283 + $0x1e8] sm:$0xff]
        %v398 = vld [vmem:[%s283 + $0x1f0] sm:$0xff]
        %v399 = vld [vmem:[%s283 + $0x1f8] sm:$0xff]
        %v400 = vld [vmem:[%s283 + $0x200] sm:$0xff]
        %v401 = vld [vmem:[%s283 + $0x208] sm:$0xff]
        %v402 = vld [vmem:[%s283 + $0x210] sm:$0xff]
        %v403 = vld [vmem:[%s283 + $0x218] sm:$0xff]
        %v404 = vld [vmem:[%s283 + $0x220] sm:$0xff]
        %v405 = vld [vmem:[%s283 + $0x228] sm:$0xff]
        %v406 = vld [vmem:[%s283 + $0x230] sm:$0xff]
        %v407 = vld [vmem:[%s283 + $0x238] sm:$0xff]
        %v408 = vld [vmem:[%s283 + $0x240] sm:$0xff]
        %v409 = vld [vmem:[%s283 + $0x248] sm:$0xff]
        %v410 = vld [vmem:[%s283 + $0x250] sm:$0xff]
        %v411 = vld [vmem:[%s283 + $0x258] sm:$0xff]
        %v412 = vld [vmem:[%s283 + $0x260] sm:$0xff]
        %v413 = vld [vmem:[%s283 + $0x268] sm:$0xff]
        %v414 = vld [vmem:[%s283 + $0x270] sm:$0xff]
        %v415 = vld [vmem:[%s283 + $0x278] sm:$0xff]
        %v416 = vld [vmem:[%s283 + $0x280] sm:$0xff]
        %v417 = vld [vmem:[%s283 + $0x288] sm:$0xff]
        %v418 = vld [vmem:[%s283 + $0x290] sm:$0xff]
        %v419 = vld [vmem:[%s283 + $0x298] sm:$0xff]
        %v420 = vld [vmem:[%s283 + $0x2a0] sm:$0xff]
        %v421 = vld [vmem:[%s283 + $0x2a8] sm:$0xff]
        %v422 = vld [vmem:[%s283 + $0x2b0] sm:$0xff]
        %v423 = vld [vmem:[%s283 + $0x2b8] sm:$0xff]
        %v424 = vld [vmem:[%s283 + $0x2c0] sm:$0xff]
        %v425 = vld [vmem:[%s283 + $0x2c8] sm:$0xff]
        %v426 = vld [vmem:[%s283 + $0x2d0] sm:$0xff]
        %v427 = vld [vmem:[%s283 + $0x2d8] sm:$0xff]
        %v428 = vld [vmem:[%s283 + $0x2e0] sm:$0xff]
        %v429 = vld [vmem:[%s283 + $0x2e8] sm:$0xff]
        %v430 = vld [vmem:[%s283 + $0x2f0] sm:$0xff]
        %v431 = vld [vmem:[%s283 + $0x2f8] sm:$0xff]
        %v432 = vld [vmem:[%s283 + $0x300] sm:$0xff]
        %v433 = vld [vmem:[%s283 + $0x308] sm:$0xff]
        %v434 = vld [vmem:[%s283 + $0x310] sm:$0xff]
        %v435 = vld [vmem:[%s283 + $0x318] sm:$0xff]
        %v436 = vld [vmem:[%s283 + $0x320] sm:$0xff]
        %v437 = vld [vmem:[%s283 + $0x328] sm:$0xff]
        %v438 = vld [vmem:[%s283 + $0x330] sm:$0xff]
        %v439 = vld [vmem:[%s283 + $0x338] sm:$0xff]
        %v440 = vld [vmem:[%s283 + $0x340] sm:$0xff]
        %v441 = vld [vmem:[%s283 + $0x348] sm:$0xff]
        %v442 = vld [vmem:[%s283 + $0x350] sm:$0xff]
        %v443 = vld [vmem:[%s283 + $0x358] sm:$0xff]
        %v444 = vld [vmem:[%s283 + $0x360] sm:$0xff]
        %v445 = vld [vmem:[%s283 + $0x368] sm:$0xff]
        %v446 = vld [vmem:[%s283 + $0x370] sm:$0xff]
        %v447 = vld [vmem:[%s283 + $0x378] sm:$0xff]
        %v448 = vld [vmem:[%s283 + $0x380] sm:$0xff]
        %v449 = vld [vmem:[%s283 + $0x388] sm:$0xff]
        %v450 = vld [vmem:[%s283 + $0x390] sm:$0xff]
        %v451 = vld [vmem:[%s283 + $0x398] sm:$0xff]
        %v452 = vld [vmem:[%s283 + $0x3a0] sm:$0xff]
        %v453 = vld [vmem:[%s283 + $0x3a8] sm:$0xff]
        %v454 = vld [vmem:[%s283 + $0x3b0] sm:$0xff]
        %v455 = vld [vmem:[%s283 + $0x3b8] sm:$0xff]
        %v456 = vld [vmem:[%s283 + $0x3c0] sm:$0xff]
        %v457 = vld [vmem:[%s283 + $0x3c8] sm:$0xff]
        %v458 = vld [vmem:[%s283 + $0x3d0] sm:$0xff]
        %v459 = vld [vmem:[%s283 + $0x3d8] sm:$0xff]
        %v460 = vld [vmem:[%s283 + $0x3e0] sm:$0xff]
        %v461 = vld [vmem:[%s283 + $0x3e8] sm:$0xff]
        %v462 = vld [vmem:[%s283 + $0x3f0] sm:$0xff]
        %v463 = vld [vmem:[%s283 + $0x3f8] sm:$0xff]
        %v464 = vld [vmem:[%s283 + $0x400] sm:$0xff]
        %v465 = vld [vmem:[%s283 + $0x408] sm:$0xff]
        %v466 = vld [vmem:[%s283 + $0x410] sm:$0xff]
        %v467 = vld [vmem:[%s283 + $0x418] sm:$0xff]
        %v468 = vld [vmem:[%s283 + $0x420] sm:$0xff]
        %v469 = vld [vmem:[%s283 + $0x428] sm:$0xff]
        %v470 = vld [vmem:[%s283 + $0x430] sm:$0xff]
        %v471 = vld [vmem:[%s283 + $0x438] sm:$0xff]
        %v472 = vld [vmem:[%s283 + $0x440] sm:$0xff]
        %v473 = vld [vmem:[%s283 + $0x448] sm:$0xff]
        %v474 = vld [vmem:[%s283 + $0x450] sm:$0xff]
        %v475 = vld [vmem:[%s283 + $0x458] sm:$0xff]
        %v476 = vld [vmem:[%s283 + $0x460] sm:$0xff]
        %v477 = vld [vmem:[%s283 + $0x468] sm:$0xff]
        %v478 = vld [vmem:[%s283 + $0x470] sm:$0xff]
        %v479 = vld [vmem:[%s283 + $0x478] sm:$0xff]
        %v480 = vld [vmem:[%s283 + $0x480] sm:$0xff]
        %v481 = vld [vmem:[%s283 + $0x488] sm:$0xff]
        %v482 = vld [vmem:[%s283 + $0x490] sm:$0xff]
        %v483 = vld [vmem:[%s283 + $0x498] sm:$0xff]
        %v484 = vld [vmem:[%s283 + $0x4a0] sm:$0xff]
        %v485 = vld [vmem:[%s283 + $0x4a8] sm:$0xff]
        %v486 = vld [vmem:[%s283 + $0x4b0] sm:$0xff]
        %v487 = vld [vmem:[%s283 + $0x4b8] sm:$0xff]
        %v488 = vld [vmem:[%s283 + $0x4c0] sm:$0xff]
        %v489 = vld [vmem:[%s283 + $0x4c8] sm:$0xff]
        %v490 = vld [vmem:[%s283 + $0x4d0] sm:$0xff]
        %v491 = vld [vmem:[%s283 + $0x4d8] sm:$0xff]
        %v492 = vld [vmem:[%s283 + $0x4e0] sm:$0xff]
        %v493 = vld [vmem:[%s283 + $0x4e8] sm:$0xff]
        %v494 = vld [vmem:[%s283 + $0x4f0] sm:$0xff]
        %v495 = vld [vmem:[%s283 + $0x4f8] sm:$0xff]
        %v496 = vld [vmem:[%s283 + $0x500] sm:$0xff]
        %v497 = vld [vmem:[%s283 + $0x508] sm:$0xff]
        %v498 = vld [vmem:[%s283 + $0x510] sm:$0xff]
        %v499 = vld [vmem:[%s283 + $0x518] sm:$0xff]
        %v500 = vld [vmem:[%s283 + $0x520] sm:$0xff]
        %v501 = vld [vmem:[%s283 + $0x528] sm:$0xff]
        %v502 = vld [vmem:[%s283 + $0x530] sm:$0xff]
        %v503 = vld [vmem:[%s283 + $0x538] sm:$0xff]
        %v504 = vld [vmem:[%s283 + $0x540] sm:$0xff]
        %v505 = vld [vmem:[%s283 + $0x548] sm:$0xff]
        %v506 = vld [vmem:[%s283 + $0x550] sm:$0xff]
        %v507 = vld [vmem:[%s283 + $0x558] sm:$0xff]
        %v508 = vld [vmem:[%s283 + $0x560] sm:$0xff]
        %v509 = vld [vmem:[%s283 + $0x568] sm:$0xff]
        %v510 = vld [vmem:[%s283 + $0x570] sm:$0xff]
        %v511 = vld [vmem:[%s283 + $0x578] sm:$0xff]
        %v512 = vld [vmem:[%s283 + $0x580] sm:$0xff]
        %v513 = vld [vmem:[%s283 + $0x588] sm:$0xff]
        %v514 = vld [vmem:[%s283 + $0x590] sm:$0xff]
        %v515 = vld [vmem:[%s283 + $0x598] sm:$0xff]
        %v516 = vld [vmem:[%s283 + $0x5a0] sm:$0xff]
        %v517 = vld [vmem:[%s283 + $0x5a8] sm:$0xff]
        %v518 = vld [vmem:[%s283 + $0x5b0] sm:$0xff]
        %v519 = vld [vmem:[%s283 + $0x5b8] sm:$0xff]
        %v520 = vld [vmem:[%s283 + $0x5c0] sm:$0xff]
        %v521 = vld [vmem:[%s283 + $0x5c8] sm:$0xff]
        %v522 = vld [vmem:[%s283 + $0x5d0] sm:$0xff]
        %v523 = vld [vmem:[%s283 + $0x5d8] sm:$0xff]
        %v524 = vld [vmem:[%s283 + $0x5e0] sm:$0xff]
        %v525 = vld [vmem:[%s283 + $0x5e8] sm:$0xff]
        %v526 = vld [vmem:[%s283 + $0x5f0] sm:$0xff]
        %v527 = vld [vmem:[%s283 + $0x5f8] sm:$0xff]
        %v528 = vld [vmem:[%s283 + $0x600] sm:$0xff]
        %v529 = vld [vmem:[%s283 + $0x608] sm:$0xff]
        %v530 = vld [vmem:[%s283 + $0x610] sm:$0xff]
        %v531 = vld [vmem:[%s283 + $0x618] sm:$0xff]
        %v532 = vld [vmem:[%s283 + $0x620] sm:$0xff]
        %v533 = vld [vmem:[%s283 + $0x628] sm:$0xff]
        %v534 = vld [vmem:[%s283 + $0x630] sm:$0xff]
        %v535 = vld [vmem:[%s283 + $0x638] sm:$0xff]
        %v536 = vld [vmem:[%s283 + $0x640] sm:$0xff]
        %v537 = vld [vmem:[%s283 + $0x648] sm:$0xff]
        %v538 = vld [vmem:[%s283 + $0x650] sm:$0xff]
        %v539 = vld [vmem:[%s283 + $0x658] sm:$0xff]
        %v540 = vld [vmem:[%s283 + $0x660] sm:$0xff]
        %v541 = vld [vmem:[%s283 + $0x668] sm:$0xff]
        %v542 = vld [vmem:[%s283 + $0x670] sm:$0xff]
        %v543 = vld [vmem:[%s283 + $0x678] sm:$0xff]
        %v544 = vld [vmem:[%s283 + $0x680] sm:$0xff]
        %v545 = vld [vmem:[%s283 + $0x688] sm:$0xff]
        %v546 = vld [vmem:[%s283 + $0x690] sm:$0xff]
        %v547 = vld [vmem:[%s283 + $0x698] sm:$0xff]
        %v548 = vld [vmem:[%s283 + $0x6a0] sm:$0xff]
        %v549 = vld [vmem:[%s283 + $0x6a8] sm:$0xff]
        %v550 = vld [vmem:[%s283 + $0x6b0] sm:$0xff]
        %v551 = vld [vmem:[%s283 + $0x6b8] sm:$0xff]
        %v552 = vld [vmem:[%s283 + $0x6c0] sm:$0xff]
        %v553 = vld [vmem:[%s283 + $0x6c8] sm:$0xff]
        %v554 = vld [vmem:[%s283 + $0x6d0] sm:$0xff]
        %v555 = vld [vmem:[%s283 + $0x6d8] sm:$0xff]
        %v556 = vld [vmem:[%s283 + $0x6e0] sm:$0xff]
        %v557 = vld [vmem:[%s283 + $0x6e8] sm:$0xff]
        %v558 = vld [vmem:[%s283 + $0x6f0] sm:$0xff]
        %v559 = vld [vmem:[%s283 + $0x6f8] sm:$0xff]
        %v560 = vld [vmem:[%s283 + $0x700] sm:$0xff]
        %v561 = vld [vmem:[%s283 + $0x708] sm:$0xff]
        %v562 = vld [vmem:[%s283 + $0x710] sm:$0xff]
        %v563 = vld [vmem:[%s283 + $0x718] sm:$0xff]
        %v564 = vld [vmem:[%s283 + $0x720] sm:$0xff]
        %v565 = vld [vmem:[%s283 + $0x728] sm:$0xff]
        %v566 = vld [vmem:[%s283 + $0x730] sm:$0xff]
        %v567 = vld [vmem:[%s283 + $0x738] sm:$0xff]
        %v568 = vld [vmem:[%s283 + $0x740] sm:$0xff]
        %v569 = vld [vmem:[%s283 + $0x748] sm:$0xff]
        %v570 = vld [vmem:[%s283 + $0x750] sm:$0xff]
        %v571 = vld [vmem:[%s283 + $0x758] sm:$0xff]
        %v572 = vld [vmem:[%s283 + $0x760] sm:$0xff]
        %v573 = vld [vmem:[%s283 + $0x768] sm:$0xff]
        %v574 = vld [vmem:[%s283 + $0x770] sm:$0xff]
        %v575 = vld [vmem:[%s283 + $0x778] sm:$0xff]
        %v576 = vld [vmem:[%s283 + $0x780] sm:$0xff]
        %v577 = vld [vmem:[%s283 + $0x788] sm:$0xff]
        %v578 = vld [vmem:[%s283 + $0x790] sm:$0xff]
        %v579 = vld [vmem:[%s283 + $0x798] sm:$0xff]
        %v580 = vld [vmem:[%s283 + $0x7a0] sm:$0xff]
        %v581 = vld [vmem:[%s283 + $0x7a8] sm:$0xff]
        %v582 = vld [vmem:[%s283 + $0x7b0] sm:$0xff]
        %v583 = vld [vmem:[%s283 + $0x7b8] sm:$0xff]
        %v584 = vld [vmem:[%s283 + $0x7c0] sm:$0xff]
        %v585 = vld [vmem:[%s283 + $0x7c8] sm:$0xff]
        %v586 = vld [vmem:[%s283 + $0x7d0] sm:$0xff]
        %v587 = vld [vmem:[%s283 + $0x7d8] sm:$0xff]
        %v588 = vld [vmem:[%s283 + $0x7e0] sm:$0xff]
        %v589 = vld [vmem:[%s283 + $0x7e8] sm:$0xff]
        %v590 = vld [vmem:[%s283 + $0x7f0] sm:$0xff]
        %v591 = vld [vmem:[%s283 + $0x7f8] sm:$0xff]
        %v592 = vld [vmem:[%s283 + $0x800] sm:$0xff]
        %v593 = vld [vmem:[%s283 + $0x808] sm:$0xff]
        %v594 = vld [vmem:[%s283 + $0x810] sm:$0xff]
        %v595 = vld [vmem:[%s283 + $0x818] sm:$0xff]
        %v596 = vld [vmem:[%s283 + $0x820] sm:$0xff]
        %v597 = vld [vmem:[%s283 + $0x828] sm:$0xff]
        %v598 = vld [vmem:[%s283 + $0x830] sm:$0xff]
        %v599 = vld [vmem:[%s283 + $0x838] sm:$0xff]
        %v600 = vld [vmem:[%s283 + $0x840] sm:$0xff]
        %v601 = vld [vmem:[%s283 + $0x848] sm:$0xff]
        %v602 = vld [vmem:[%s283 + $0x850] sm:$0xff]
        %v603 = vld [vmem:[%s283 + $0x858] sm:$0xff]
        %v604 = vld [vmem:[%s283 + $0x860] sm:$0xff]
        %v605 = vld [vmem:[%s283 + $0x868] sm:$0xff]
        %v606 = vld [vmem:[%s283 + $0x870] sm:$0xff]
        %v607 = vld [vmem:[%s283 + $0x878] sm:$0xff]
        %v608 = vld [vmem:[%s283 + $0x880] sm:$0xff]
        %v609 = vld [vmem:[%s283 + $0x888] sm:$0xff]
        %v610 = vld [vmem:[%s283 + $0x890] sm:$0xff]
        %v611 = vld [vmem:[%s283 + $0x898] sm:$0xff]
        %v612 = vld [vmem:[%s283 + $0x8a0] sm:$0xff]
        %v613 = vld [vmem:[%s283 + $0x8a8] sm:$0xff]
        %v614 = vld [vmem:[%s283 + $0x8b0] sm:$0xff]
        %v615 = vld [vmem:[%s283 + $0x8b8] sm:$0xff]
        %v616 = vld [vmem:[%s283 + $0x8c0] sm:$0xff]
        %v617 = vld [vmem:[%s283 + $0x8c8] sm:$0xff]
        %v618 = vld [vmem:[%s283 + $0x8d0] sm:$0xff]
        %v619 = vld [vmem:[%s283 + $0x8d8] sm:$0xff]
        %v620 = vld [vmem:[%s283 + $0x8e0] sm:$0xff]
        %v621 = vld [vmem:[%s283 + $0x8e8] sm:$0xff]
        %v622 = vld [vmem:[%s283 + $0x8f0] sm:$0xff]
        %v623 = vld [vmem:[%s283 + $0x8f8] sm:$0xff]
        %v624 = vld [vmem:[%s283 + $0x900] sm:$0xff]
        %v625 = vld [vmem:[%s283 + $0x908] sm:$0xff]
        %v626 = vld [vmem:[%s283 + $0x910] sm:$0xff]
        %v627 = vld [vmem:[%s283 + $0x918] sm:$0xff]
        %v628 = vld [vmem:[%s283 + $0x920] sm:$0xff]
        %v629 = vld [vmem:[%s283 + $0x928] sm:$0xff]
        %v630 = vld [vmem:[%s283 + $0x930] sm:$0xff]
        %v631 = vld [vmem:[%s283 + $0x938] sm:$0xff]
        %v632 = vld [vmem:[%s283 + $0x940] sm:$0xff]
        %v633 = vld [vmem:[%s283 + $0x948] sm:$0xff]
        %v634 = vld [vmem:[%s283 + $0x950] sm:$0xff]
        %v635 = vld [vmem:[%s283 + $0x958] sm:$0xff]
        %v636 = vld [vmem:[%s283 + $0x960] sm:$0xff]
        %v637 = vld [vmem:[%s283 + $0x968] sm:$0xff]
        %v638 = vld [vmem:[%s283 + $0x970] sm:$0xff]
        %v639 = vld [vmem:[%s283 + $0x978] sm:$0xff]
        %v640 = vld [vmem:[%s283 + $0x980] sm:$0xff]
        %v641 = vld [vmem:[%s283 + $0x988] sm:$0xff]
        %v642 = vld [vmem:[%s283 + $0x990] sm:$0xff]
        %v643 = vld [vmem:[%s283 + $0x998] sm:$0xff]
        %v644 = vld [vmem:[%s283 + $0x9a0] sm:$0xff]
        %v645 = vld [vmem:[%s283 + $0x9a8] sm:$0xff]
        %v646 = vld [vmem:[%s283 + $0x9b0] sm:$0xff]
        %v647 = vld [vmem:[%s283 + $0x9b8] sm:$0xff]
        %v648 = vld [vmem:[%s283 + $0x9c0] sm:$0xff]
        %v649 = vld [vmem:[%s283 + $0x9c8] sm:$0xff]
        %v650 = vld [vmem:[%s283 + $0x9d0] sm:$0xff]
        %v651 = vld [vmem:[%s283 + $0x9d8] sm:$0xff]
        %v652 = vld [vmem:[%s283 + $0x9e0] sm:$0xff]
        %v653 = vld [vmem:[%s283 + $0x9e8] sm:$0xff]
        %v654 = vld [vmem:[%s283 + $0x9f0] sm:$0xff]
        %v655 = vld [vmem:[%s283 + $0x9f8] sm:$0xff]
        %v656 = vld [vmem:[%s283 + $0xa00] sm:$0xff]
        %v657 = vld [vmem:[%s283 + $0xa08] sm:$0xff]
        %v658 = vld [vmem:[%s283 + $0xa10] sm:$0xff]
        %v659 = vld [vmem:[%s283 + $0xa18] sm:$0xff]
        %v660 = vld [vmem:[%s283 + $0xa20] sm:$0xff]
        %v661 = vld [vmem:[%s283 + $0xa28] sm:$0xff]
        %v662 = vld [vmem:[%s283 + $0xa30] sm:$0xff]
        %v663 = vld [vmem:[%s283 + $0xa38] sm:$0xff]
        %v664 = vld [vmem:[%s283 + $0xa40] sm:$0xff]
        %v665 = vld [vmem:[%s283 + $0xa48] sm:$0xff]
        %v666 = vld [vmem:[%s283 + $0xa50] sm:$0xff]
        %v667 = vld [vmem:[%s283 + $0xa58] sm:$0xff]
        %v668 = vld [vmem:[%s283 + $0xa60] sm:$0xff]
        %v669 = vld [vmem:[%s283 + $0xa68] sm:$0xff]
        %v670 = vld [vmem:[%s283 + $0xa70] sm:$0xff]
        %v671 = vld [vmem:[%s283 + $0xa78] sm:$0xff]
        %v672 = vld [vmem:[%s283 + $0xa80] sm:$0xff]
        %v673 = vld [vmem:[%s283 + $0xa88] sm:$0xff]
        %v674 = vld [vmem:[%s283 + $0xa90] sm:$0xff]
        %v675 = vld [vmem:[%s283 + $0xa98] sm:$0xff]
        %v676 = vld [vmem:[%s283 + $0xaa0] sm:$0xff]
        %v677 = vld [vmem:[%s283 + $0xaa8] sm:$0xff]
        %v678 = vld [vmem:[%s283 + $0xab0] sm:$0xff]
        %v679 = vld [vmem:[%s283 + $0xab8] sm:$0xff]
        %v680 = vld [vmem:[%s283 + $0xac0] sm:$0xff]
        %v681 = vld [vmem:[%s283 + $0xac8] sm:$0xff]
        %v682 = vld [vmem:[%s283 + $0xad0] sm:$0xff]
        %v683 = vld [vmem:[%s283 + $0xad8] sm:$0xff]
        %v684 = vld [vmem:[%s283 + $0xae0] sm:$0xff]
        %v685 = vld [vmem:[%s283 + $0xae8] sm:$0xff]
        %v686 = vld [vmem:[%s283 + $0xaf0] sm:$0xff]
        %v687 = vld [vmem:[%s283 + $0xaf8] sm:$0xff]
        %v688 = vld [vmem:[%s283 + $0xb00] sm:$0xff]
        %v689 = vld [vmem:[%s283 + $0xb08] sm:$0xff]
        %v690 = vld [vmem:[%s283 + $0xb10] sm:$0xff]
        %v691 = vld [vmem:[%s283 + $0xb18] sm:$0xff]
        %v692 = vld [vmem:[%s283 + $0xb20] sm:$0xff]
        %v693 = vld [vmem:[%s283 + $0xb28] sm:$0xff]
        %v694 = vld [vmem:[%s283 + $0xb30] sm:$0xff]
        %v695 = vld [vmem:[%s283 + $0xb38] sm:$0xff]
        %v696 = vld [vmem:[%s283 + $0xb40] sm:$0xff]
        %v697 = vld [vmem:[%s283 + $0xb48] sm:$0xff]
        %v698 = vld [vmem:[%s283 + $0xb50] sm:$0xff]
        %v699 = vld [vmem:[%s283 + $0xb58] sm:$0xff]
        %v700 = vld [vmem:[%s283 + $0xb60] sm:$0xff]
        %v701 = vld [vmem:[%s283 + $0xb68] sm:$0xff]
        %v702 = vld [vmem:[%s283 + $0xb70] sm:$0xff]
        %v703 = vld [vmem:[%s283 + $0xb78] sm:$0xff]
        %v704 = vld [vmem:[%s283 + $0xb80] sm:$0xff]
        %v705 = vld [vmem:[%s283 + $0xb88] sm:$0xff]
        %v706 = vld [vmem:[%s283 + $0xb90] sm:$0xff]
        %v707 = vld [vmem:[%s283 + $0xb98] sm:$0xff]
        %v708 = vld [vmem:[%s283 + $0xba0] sm:$0xff]
        %v709 = vld [vmem:[%s283 + $0xba8] sm:$0xff]
        %v710 = vld [vmem:[%s283 + $0xbb0] sm:$0xff]
        %v711 = vld [vmem:[%s283 + $0xbb8] sm:$0xff]
        %v712 = vld [vmem:[%s283 + $0xbc0] sm:$0xff]
        %v713 = vld [vmem:[%s283 + $0xbc8] sm:$0xff]
        %v714 = vld [vmem:[%s283 + $0xbd0] sm:$0xff]
        %v715 = vld [vmem:[%s283 + $0xbd8] sm:$0xff]
        %v716 = vld [vmem:[%s283 + $0xbe0] sm:$0xff]
        %v717 = vld [vmem:[%s283 + $0xbe8] sm:$0xff]
        %v718 = vld [vmem:[%s283 + $0xbf0] sm:$0xff]
        %v719 = vld [vmem:[%s283 + $0xbf8] sm:$0xff]
        %v720 = vld [vmem:[%s283 + $0xc00] sm:$0xff]
        %v721 = vld [vmem:[%s283 + $0xc08] sm:$0xff]
        %v722 = vld [vmem:[%s283 + $0xc10] sm:$0xff]
        %v723 = vld [vmem:[%s283 + $0xc18] sm:$0xff]
        %v724 = vld [vmem:[%s283 + $0xc20] sm:$0xff]
        %v725 = vld [vmem:[%s283 + $0xc28] sm:$0xff]
        %v726 = vld [vmem:[%s283 + $0xc30] sm:$0xff]
        %v727 = vld [vmem:[%s283 + $0xc38] sm:$0xff]
        %v728 = vld [vmem:[%s283 + $0xc40] sm:$0xff]
        %v729 = vld [vmem:[%s283 + $0xc48] sm:$0xff]
        %v730 = vld [vmem:[%s283 + $0xc50] sm:$0xff]
        %v731 = vld [vmem:[%s283 + $0xc58] sm:$0xff]
        %v732 = vld [vmem:[%s283 + $0xc60] sm:$0xff]
        %v733 = vld [vmem:[%s283 + $0xc68] sm:$0xff]
        %v734 = vld [vmem:[%s283 + $0xc70] sm:$0xff]
        %v735 = vld [vmem:[%s283 + $0xc78] sm:$0xff]
        %v736 = vld [vmem:[%s283 + $0xc80] sm:$0xff]
        %v737 = vld [vmem:[%s283 + $0xc88] sm:$0xff]
        %v738 = vld [vmem:[%s283 + $0xc90] sm:$0xff]
        %v739 = vld [vmem:[%s283 + $0xc98] sm:$0xff]
        %v740 = vld [vmem:[%s283 + $0xca0] sm:$0xff]
        %v741 = vld [vmem:[%s283 + $0xca8] sm:$0xff]
        %v742 = vld [vmem:[%s283 + $0xcb0] sm:$0xff]
        %v743 = vld [vmem:[%s283 + $0xcb8] sm:$0xff]
        %v744 = vld [vmem:[%s283 + $0xcc0] sm:$0xff]
        %v745 = vld [vmem:[%s283 + $0xcc8] sm:$0xff]
        %v746 = vld [vmem:[%s283 + $0xcd0] sm:$0xff]
        %v747 = vld [vmem:[%s283 + $0xcd8] sm:$0xff]
        %v748 = vld [vmem:[%s283 + $0xce0] sm:$0xff]
        %v749 = vld [vmem:[%s283 + $0xce8] sm:$0xff]
        %v750 = vld [vmem:[%s283 + $0xcf0] sm:$0xff]
        %v751 = vld [vmem:[%s283 + $0xcf8] sm:$0xff]
        %v752 = vld [vmem:[%s283 + $0xd00] sm:$0xff]
        %v753 = vld [vmem:[%s283 + $0xd08] sm:$0xff]
        %v754 = vld [vmem:[%s283 + $0xd10] sm:$0xff]
        %v755 = vld [vmem:[%s283 + $0xd18] sm:$0xff]
        %v756 = vld [vmem:[%s283 + $0xd20] sm:$0xff]
        %v757 = vld [vmem:[%s283 + $0xd28] sm:$0xff]
        %v758 = vld [vmem:[%s283 + $0xd30] sm:$0xff]
        %v759 = vld [vmem:[%s283 + $0xd38] sm:$0xff]
        %v760 = vld [vmem:[%s283 + $0xd40] sm:$0xff]
        %v761 = vld [vmem:[%s283 + $0xd48] sm:$0xff]
        %v762 = vld [vmem:[%s283 + $0xd50] sm:$0xff]
        %v763 = vld [vmem:[%s283 + $0xd58] sm:$0xff]
        %v764 = vld [vmem:[%s283 + $0xd60] sm:$0xff]
        %v765 = vld [vmem:[%s283 + $0xd68] sm:$0xff]
        %v766 = vld [vmem:[%s283 + $0xd70] sm:$0xff]
        %v767 = vld [vmem:[%s283 + $0xd78] sm:$0xff]
        %v768 = vld [vmem:[%s283 + $0xd80] sm:$0xff]
        %v769 = vld [vmem:[%s283 + $0xd88] sm:$0xff]
        %v770 = vld [vmem:[%s283 + $0xd90] sm:$0xff]
        %v771 = vld [vmem:[%s283 + $0xd98] sm:$0xff]
        %v772 = vld [vmem:[%s283 + $0xda0] sm:$0xff]
        %v773 = vld [vmem:[%s283 + $0xda8] sm:$0xff]
        %v774 = vld [vmem:[%s283 + $0xdb0] sm:$0xff]
        %v775 = vld [vmem:[%s283 + $0xdb8] sm:$0xff]
        %v776 = vld [vmem:[%s283 + $0xdc0] sm:$0xff]
        %v777 = vld [vmem:[%s283 + $0xdc8] sm:$0xff]
        %v778 = vld [vmem:[%s283 + $0xdd0] sm:$0xff]
        %v779 = vld [vmem:[%s283 + $0xdd8] sm:$0xff]
        %v780 = vld [vmem:[%s283 + $0xde0] sm:$0xff]
        %v781 = vld [vmem:[%s283 + $0xde8] sm:$0xff]
        %v782 = vld [vmem:[%s283 + $0xdf0] sm:$0xff]
        %v783 = vld [vmem:[%s283 + $0xdf8] sm:$0xff]
        %v784 = vld [vmem:[%s283 + $0xe00] sm:$0xff]
        %v785 = vld [vmem:[%s283 + $0xe08] sm:$0xff]
        %v786 = vld [vmem:[%s283 + $0xe10] sm:$0xff]
        %v787 = vld [vmem:[%s283 + $0xe18] sm:$0xff]
        %v788 = vld [vmem:[%s283 + $0xe20] sm:$0xff]
        %v789 = vld [vmem:[%s283 + $0xe28] sm:$0xff]
        %v790 = vld [vmem:[%s283 + $0xe30] sm:$0xff]
        %v791 = vld [vmem:[%s283 + $0xe38] sm:$0xff]
        %v792 = vld [vmem:[%s283 + $0xe40] sm:$0xff]
        %v793 = vld [vmem:[%s283 + $0xe48] sm:$0xff]
        %v794 = vld [vmem:[%s283 + $0xe50] sm:$0xff]
        %v795 = vld [vmem:[%s283 + $0xe58] sm:$0xff]
        %v796 = vld [vmem:[%s283 + $0xe60] sm:$0xff]
        %v797 = vld [vmem:[%s283 + $0xe68] sm:$0xff]
        %v798 = vld [vmem:[%s283 + $0xe70] sm:$0xff]
        %v799 = vld [vmem:[%s283 + $0xe78] sm:$0xff]
        %v800 = vld [vmem:[%s283 + $0xe80] sm:$0xff]
        %v801 = vld [vmem:[%s283 + $0xe88] sm:$0xff]
        %v802 = vld [vmem:[%s283 + $0xe90] sm:$0xff]
        %v803 = vld [vmem:[%s283 + $0xe98] sm:$0xff]
        %v804 = vld [vmem:[%s283 + $0xea0] sm:$0xff]
        %v805 = vld [vmem:[%s283 + $0xea8] sm:$0xff]
        %v806 = vld [vmem:[%s283 + $0xeb0] sm:$0xff]
        %v807 = vld [vmem:[%s283 + $0xeb8] sm:$0xff]
        %v808 = vld [vmem:[%s283 + $0xec0] sm:$0xff]
        %v809 = vld [vmem:[%s283 + $0xec8] sm:$0xff]
        %v810 = vld [vmem:[%s283 + $0xed0] sm:$0xff]
        %v811 = vld [vmem:[%s283 + $0xed8] sm:$0xff]
        %v812 = vld [vmem:[%s283 + $0xee0] sm:$0xff]
        %v813 = vld [vmem:[%s283 + $0xee8] sm:$0xff]
        %v814 = vld [vmem:[%s283 + $0xef0] sm:$0xff]
        %v815 = vld [vmem:[%s283 + $0xef8] sm:$0xff]
        %v816 = vld [vmem:[%s283 + $0xf00] sm:$0xff]
        %v817 = vld [vmem:[%s283 + $0xf08] sm:$0xff]
        %v818 = vld [vmem:[%s283 + $0xf10] sm:$0xff]
        %v819 = vld [vmem:[%s283 + $0xf18] sm:$0xff]
        %v820 = vld [vmem:[%s283 + $0xf20] sm:$0xff]
        %v821 = vld [vmem:[%s283 + $0xf28] sm:$0xff]
        %v822 = vld [vmem:[%s283 + $0xf30] sm:$0xff]
        %v823 = vld [vmem:[%s283 + $0xf38] sm:$0xff]
        %v824 = vld [vmem:[%s283 + $0xf40] sm:$0xff]
        %v825 = vld [vmem:[%s283 + $0xf48] sm:$0xff]
        %v826 = vld [vmem:[%s283 + $0xf50] sm:$0xff]
        %v827 = vld [vmem:[%s283 + $0xf58] sm:$0xff]
        %v828 = vld [vmem:[%s283 + $0xf60] sm:$0xff]
        %v829 = vld [vmem:[%s283 + $0xf68] sm:$0xff]
        %v830 = vld [vmem:[%s283 + $0xf70] sm:$0xff]
        %v831 = vld [vmem:[%s283 + $0xf78] sm:$0xff]
        %v832 = vld [vmem:[%s283 + $0xf80] sm:$0xff]
        %v833 = vld [vmem:[%s283 + $0xf88] sm:$0xff]
        %v834 = vld [vmem:[%s283 + $0xf90] sm:$0xff]
        %v835 = vld [vmem:[%s283 + $0xf98] sm:$0xff]
        %v836 = vld [vmem:[%s283 + $0xfa0] sm:$0xff]
        %v837 = vld [vmem:[%s283 + $0xfa8] sm:$0xff]
        %v838 = vld [vmem:[%s283 + $0xfb0] sm:$0xff]
        %v839 = vld [vmem:[%s283 + $0xfb8] sm:$0xff]
        %v840 = vld [vmem:[%s283 + $0xfc0] sm:$0xff]
        %v841 = vld [vmem:[%s283 + $0xfc8] sm:$0xff]
        %v842 = vld [vmem:[%s283 + $0xfd0] sm:$0xff]
        %v843 = vld [vmem:[%s283 + $0xfd8] sm:$0xff]
        %v844 = vld [vmem:[%s283 + $0xfe0] sm:$0xff]
        %v845 = vld [vmem:[%s283 + $0xfe8] sm:$0xff]
        %v846 = vld [vmem:[%s283 + $0xff0] sm:$0xff]
        %v847 = vld [vmem:[%s283 + $0xff8] sm:$0xff]
        %v848 = vld [vmem:[%s283 + $0x1000] sm:$0xff]
        %v849 = vld [vmem:[%s283 + $0x1008] sm:$0xff]
        %v850 = vld [vmem:[%s283 + $0x1010] sm:$0xff]
        %v851 = vld [vmem:[%s283 + $0x1018] sm:$0xff]
        %v852 = vld [vmem:[%s283 + $0x1020] sm:$0xff]
        %v853 = vld [vmem:[%s283 + $0x1028] sm:$0xff]
        %v854 = vld [vmem:[%s283 + $0x1030] sm:$0xff]
        %v855 = vld [vmem:[%s283 + $0x1038] sm:$0xff]
        %v856 = vld [vmem:[%s283 + $0x1040] sm:$0xff]
        %v857 = vld [vmem:[%s283 + $0x1048] sm:$0xff]
        %v858 = vld [vmem:[%s283 + $0x1050] sm:$0xff]
        %v859 = vld [vmem:[%s283 + $0x1058] sm:$0xff]
        %v860 = vld [vmem:[%s283 + $0x1060] sm:$0xff]
        %v861 = vld [vmem:[%s283 + $0x1068] sm:$0xff]
        %v862 = vld [vmem:[%s283 + $0x1070] sm:$0xff]
        %v863 = vld [vmem:[%s283 + $0x1078] sm:$0xff]
        %v864 = vld [vmem:[%s283 + $0x1080] sm:$0xff]
        %v865 = vld [vmem:[%s283 + $0x1088] sm:$0xff]
        %v866 = vld [vmem:[%s283 + $0x1090] sm:$0xff]
        %v867 = vld [vmem:[%s283 + $0x1098] sm:$0xff]
        %v868 = vld [vmem:[%s283 + $0x10a0] sm:$0xff]
        %v869 = vld [vmem:[%s283 + $0x10a8] sm:$0xff]
        %v870 = vld [vmem:[%s283 + $0x10b0] sm:$0xff]
        %v871 = vld [vmem:[%s283 + $0x10b8] sm:$0xff]
        %v872 = vld [vmem:[%s283 + $0x10c0] sm:$0xff]
        %v873 = vld [vmem:[%s283 + $0x10c8] sm:$0xff]
        %v874 = vld [vmem:[%s283 + $0x10d0] sm:$0xff]
        %v875 = vld [vmem:[%s283 + $0x10d8] sm:$0xff]
        %v876 = vld [vmem:[%s283 + $0x10e0] sm:$0xff]
        %v877 = vld [vmem:[%s283 + $0x10e8] sm:$0xff]
        %v878 = vld [vmem:[%s283 + $0x10f0] sm:$0xff]
        %v879 = vld [vmem:[%s283 + $0x10f8] sm:$0xff]
        %v880 = vld [vmem:[%s283 + $0x1100] sm:$0xff]
        %v881 = vld [vmem:[%s283 + $0x1108] sm:$0xff]
        %v882 = vld [vmem:[%s283 + $0x1110] sm:$0xff]
        %v883 = vld [vmem:[%s283 + $0x1118] sm:$0xff]
        %v884 = vld [vmem:[%s283 + $0x1120] sm:$0xff]
        %v885 = vld [vmem:[%s283 + $0x1128] sm:$0xff]
        %v886 = vld [vmem:[%s283 + $0x1130] sm:$0xff]
        %v887 = vld [vmem:[%s283 + $0x1138] sm:$0xff]
        %v888 = vld [vmem:[%s283 + $0x1140] sm:$0xff]
        %v889 = vld [vmem:[%s283 + $0x1148] sm:$0xff]
        %v890 = vld [vmem:[%s283 + $0x1150] sm:$0xff]
        %v891 = vld [vmem:[%s283 + $0x1158] sm:$0xff]
        %v892 = vld [vmem:[%s283 + $0x1160] sm:$0xff]
        %v893 = vld [vmem:[%s283 + $0x1168] sm:$0xff]
        %v894 = vld [vmem:[%s283 + $0x1170] sm:$0xff]
        %v895 = vld [vmem:[%s283 + $0x1178] sm:$0xff]
        %v896 = vld [vmem:[%s283 + $0x1180] sm:$0xff]
        %v897 = vld [vmem:[%s283 + $0x1188] sm:$0xff]
        %v898 = vld [vmem:[%s283 + $0x1190] sm:$0xff]
        %v899 = vld [vmem:[%s283 + $0x1198] sm:$0xff]
        %v900 = vld [vmem:[%s283 + $0x11a0] sm:$0xff]
        %v901 = vld [vmem:[%s283 + $0x11a8] sm:$0xff]
        %v902 = vld [vmem:[%s283 + $0x11b0] sm:$0xff]
        %v903 = vld [vmem:[%s283 + $0x11b8] sm:$0xff]
        %v904 = vld [vmem:[%s283 + $0x11c0] sm:$0xff]
        %v905 = vld [vmem:[%s283 + $0x11c8] sm:$0xff]
        %v906 = vld [vmem:[%s283 + $0x11d0] sm:$0xff]
        %v907 = vld [vmem:[%s283 + $0x11d8] sm:$0xff]
        %v908 = vld [vmem:[%s283 + $0x11e0] sm:$0xff]
        %v909 = vld [vmem:[%s283 + $0x11e8] sm:$0xff]
        %v910 = vld [vmem:[%s283 + $0x11f0] sm:$0xff]
        %v911 = vld [vmem:[%s283 + $0x11f8] sm:$0xff]
        %v912 = vld [vmem:[%s283 + $0x1200] sm:$0xff]
        %v913 = vld [vmem:[%s283 + $0x1208] sm:$0xff]
        %v914 = vld [vmem:[%s283 + $0x1210] sm:$0xff]
        %v915 = vld [vmem:[%s283 + $0x1218] sm:$0xff]
        %v916 = vld [vmem:[%s283 + $0x1220] sm:$0xff]
        %v917 = vld [vmem:[%s283 + $0x1228] sm:$0xff]
        %v918 = vld [vmem:[%s283 + $0x1230] sm:$0xff]
        %v919 = vld [vmem:[%s283 + $0x1238] sm:$0xff]
        %v920 = vld [vmem:[%s283 + $0x1240] sm:$0xff]
        %v921 = vld [vmem:[%s283 + $0x1248] sm:$0xff]
        %v922 = vld [vmem:[%s283 + $0x1250] sm:$0xff]
        %v923 = vld [vmem:[%s283 + $0x1258] sm:$0xff]
        %v924 = vld [vmem:[%s283 + $0x1260] sm:$0xff]
        %v925 = vld [vmem:[%s283 + $0x1268] sm:$0xff]
        %v926 = vld [vmem:[%s283 + $0x1270] sm:$0xff]
        %v927 = vld [vmem:[%s283 + $0x1278] sm:$0xff]
        %v928 = vld [vmem:[%s283 + $0x1280] sm:$0xff]
        %v929 = vld [vmem:[%s283 + $0x1288] sm:$0xff]
        %v930 = vld [vmem:[%s283 + $0x1290] sm:$0xff]
        %v931 = vld [vmem:[%s283 + $0x1298] sm:$0xff]
        %v932 = vld [vmem:[%s283 + $0x12a0] sm:$0xff]
        %v933 = vld [vmem:[%s283 + $0x12a8] sm:$0xff]
        %v934 = vld [vmem:[%s283 + $0x12b0] sm:$0xff]
        %v935 = vld [vmem:[%s283 + $0x12b8] sm:$0xff]
        %v936 = vld [vmem:[%s283 + $0x12c0] sm:$0xff]
        %v937 = vld [vmem:[%s283 + $0x12c8] sm:$0xff]
        %v938 = vld [vmem:[%s283 + $0x12d0] sm:$0xff]
        %v939 = vld [vmem:[%s283 + $0x12d8] sm:$0xff]
        %v940 = vld [vmem:[%s283 + $0x12e0] sm:$0xff]
        %v941 = vld [vmem:[%s283 + $0x12e8] sm:$0xff]
        %v942 = vld [vmem:[%s283 + $0x12f0] sm:$0xff]
        %v943 = vld [vmem:[%s283 + $0x12f8] sm:$0xff]
        %v944 = vld [vmem:[%s283 + $0x1300] sm:$0xff]
        %v945 = vld [vmem:[%s283 + $0x1308] sm:$0xff]
        %v946 = vld [vmem:[%s283 + $0x1310] sm:$0xff]
        %v947 = vld [vmem:[%s283 + $0x1318] sm:$0xff]
        %v948 = vld [vmem:[%s283 + $0x1320] sm:$0xff]
        %v949 = vld [vmem:[%s283 + $0x1328] sm:$0xff]
        %v950 = vld [vmem:[%s283 + $0x1330] sm:$0xff]
        %v951 = vld [vmem:[%s283 + $0x1338] sm:$0xff]
        %v952 = vld [vmem:[%s283 + $0x1340] sm:$0xff]
        %v953 = vld [vmem:[%s283 + $0x1348] sm:$0xff]
        %v954 = vld [vmem:[%s283 + $0x1350] sm:$0xff]
        %v955 = vld [vmem:[%s283 + $0x1358] sm:$0xff]
        %v956 = vld [vmem:[%s283 + $0x1360] sm:$0xff]
        %v957 = vld [vmem:[%s283 + $0x1368] sm:$0xff]
        %v958 = vld [vmem:[%s283 + $0x1370] sm:$0xff]
        %v959 = vld [vmem:[%s283 + $0x1378] sm:$0xff]
        %v960 = vld [vmem:[%s283 + $0x1380] sm:$0xff]
        %v961 = vld [vmem:[%s283 + $0x1388] sm:$0xff]
        %v962 = vld [vmem:[%s283 + $0x1390] sm:$0xff]
        %v963 = vld [vmem:[%s283 + $0x1398] sm:$0xff]
        %v964 = vld [vmem:[%s283 + $0x13a0] sm:$0xff]
        %v965 = vld [vmem:[%s283 + $0x13a8] sm:$0xff]
        %v966 = vld [vmem:[%s283 + $0x13b0] sm:$0xff]
        %v967 = vld [vmem:[%s283 + $0x13b8] sm:$0xff]
        %v968 = vld [vmem:[%s283 + $0x13c0] sm:$0xff]
        %v969 = vld [vmem:[%s283 + $0x13c8] sm:$0xff]
        %v970 = vld [vmem:[%s283 + $0x13d0] sm:$0xff]
        %v971 = vld [vmem:[%s283 + $0x13d8] sm:$0xff]
        %v972 = vld [vmem:[%s283 + $0x13e0] sm:$0xff]
        %v973 = vld [vmem:[%s283 + $0x13e8] sm:$0xff]
        %v974 = vld [vmem:[%s283 + $0x13f0] sm:$0xff]
        %v975 = vld [vmem:[%s283 + $0x13f8] sm:$0xff]
        %v976 = vld [vmem:[%s283 + $0x1400] sm:$0xff]
        %v977 = vld [vmem:[%s283 + $0x1408] sm:$0xff]
        %v978 = vld [vmem:[%s283 + $0x1410] sm:$0xff]
        %v979 = vld [vmem:[%s283 + $0x1418] sm:$0xff]
        %v980 = vld [vmem:[%s283 + $0x1420] sm:$0xff]
        %v981 = vld [vmem:[%s283 + $0x1428] sm:$0xff]
        %v982 = vld [vmem:[%s283 + $0x1430] sm:$0xff]
        %v983 = vld [vmem:[%s283 + $0x1438] sm:$0xff]
        %v984 = vld [vmem:[%s283 + $0x1440] sm:$0xff]
        %v985 = vld [vmem:[%s283 + $0x1448] sm:$0xff]
        %v986 = vld [vmem:[%s283 + $0x1450] sm:$0xff]
        %v987 = vld [vmem:[%s283 + $0x1458] sm:$0xff]
        %v988 = vld [vmem:[%s283 + $0x1460] sm:$0xff]
        %v989 = vld [vmem:[%s283 + $0x1468] sm:$0xff]
        %v990 = vld [vmem:[%s283 + $0x1470] sm:$0xff]
        %v991 = vld [vmem:[%s283 + $0x1478] sm:$0xff]
        %v992 = vld [vmem:[%s283 + $0x1480] sm:$0xff]
        %v993 = vld [vmem:[%s283 + $0x1488] sm:$0xff]
        %v994 = vld [vmem:[%s283 + $0x1490] sm:$0xff]
        %v995 = vld [vmem:[%s283 + $0x1498] sm:$0xff]
        %v996 = vld [vmem:[%s283 + $0x14a0] sm:$0xff]
        %v997 = vld [vmem:[%s283 + $0x14a8] sm:$0xff]
        %v998 = vld [vmem:[%s283 + $0x14b0] sm:$0xff]
        %v999 = vld [vmem:[%s283 + $0x14b8] sm:$0xff]
        %v1000 = vld [vmem:[%s283 + $0x14c0] sm:$0xff]
        %v1001 = vld [vmem:[%s283 + $0x14c8] sm:$0xff]
        %v1002 = vld [vmem:[%s283 + $0x14d0] sm:$0xff]
        %v1003 = vld [vmem:[%s283 + $0x14d8] sm:$0xff]
        %v1004 = vld [vmem:[%s283 + $0x14e0] sm:$0xff]
        %v1005 = vld [vmem:[%s283 + $0x14e8] sm:$0xff]
        %v1006 = vld [vmem:[%s283 + $0x14f0] sm:$0xff]
        %v1007 = vld [vmem:[%s283 + $0x14f8] sm:$0xff]
        %v1008 = vld [vmem:[%s283 + $0x1500] sm:$0xff]
        %v1009 = vld [vmem:[%s283 + $0x1508] sm:$0xff]
        %v1010 = vld [vmem:[%s283 + $0x1510] sm:$0xff]
        %v1011 = vld [vmem:[%s283 + $0x1518] sm:$0xff]
        %v1012 = vld [vmem:[%s283 + $0x1520] sm:$0xff]
        %v1013 = vld [vmem:[%s283 + $0x1528] sm:$0xff]
        %v1014 = vld [vmem:[%s283 + $0x1530] sm:$0xff]
        %v1015 = vld [vmem:[%s283 + $0x1538] sm:$0xff]
        %v1016 = vld [vmem:[%s283 + $0x1540] sm:$0xff]
        %v1017 = vld [vmem:[%s283 + $0x1548] sm:$0xff]
        %v1018 = vld [vmem:[%s283 + $0x1550] sm:$0xff]
        %v1019 = vld [vmem:[%s283 + $0x1558] sm:$0xff]
        %v1020 = vld [vmem:[%s283 + $0x1560] sm:$0xff]
        %v1021 = vld [vmem:[%s283 + $0x1568] sm:$0xff]
        %v1022 = vld [vmem:[%s283 + $0x1570] sm:$0xff]
        %v1023 = vld [vmem:[%s283 + $0x1578] sm:$0xff]
        %v1024 = vld [vmem:[%s283 + $0x1580] sm:$0xff]
        %v1025 = vld [vmem:[%s283 + $0x1588] sm:$0xff]
        %v1026 = vld [vmem:[%s283 + $0x1590] sm:$0xff]
        %v1027 = vld [vmem:[%s283 + $0x1598] sm:$0xff]
        %v1028 = vld [vmem:[%s283 + $0x15a0] sm:$0xff]
        %v1029 = vld [vmem:[%s283 + $0x15a8] sm:$0xff]
        %v1030 = vld [vmem:[%s283 + $0x15b0] sm:$0xff]
        %v1031 = vld [vmem:[%s283 + $0x15b8] sm:$0xff]
        %v1032 = vld [vmem:[%s283 + $0x15c0] sm:$0xff]
        %v1033 = vld [vmem:[%s283 + $0x15c8] sm:$0xff]
        %v1034 = vld [vmem:[%s283 + $0x15d0] sm:$0xff]
        %v1035 = vld [vmem:[%s283 + $0x15d8] sm:$0xff]
        %v1036 = vld [vmem:[%s283 + $0x15e0] sm:$0xff]
        %v1037 = vld [vmem:[%s283 + $0x15e8] sm:$0xff]
        %v1038 = vld [vmem:[%s283 + $0x15f0] sm:$0xff]
        %v1039 = vld [vmem:[%s283 + $0x15f8] sm:$0xff]
        %v1040 = vld [vmem:[%s283 + $0x1600] sm:$0xff]
        %v1041 = vld [vmem:[%s283 + $0x1608] sm:$0xff]
        %v1042 = vld [vmem:[%s283 + $0x1610] sm:$0xff]
        %v1043 = vld [vmem:[%s283 + $0x1618] sm:$0xff]
        %v1044 = vld [vmem:[%s283 + $0x1620] sm:$0xff]
        %v1045 = vld [vmem:[%s283 + $0x1628] sm:$0xff]
        %v1046 = vld [vmem:[%s283 + $0x1630] sm:$0xff]
        %v1047 = vld [vmem:[%s283 + $0x1638] sm:$0xff]
        %v1048 = vld [vmem:[%s283 + $0x1640] sm:$0xff]
        %v1049 = vld [vmem:[%s283 + $0x1648] sm:$0xff]
        %v1050 = vld [vmem:[%s283 + $0x1650] sm:$0xff]
        %v1051 = vld [vmem:[%s283 + $0x1658] sm:$0xff]
        %v1052 = vld [vmem:[%s283 + $0x1660] sm:$0xff]
        %v1053 = vld [vmem:[%s283 + $0x1668] sm:$0xff]
        %v1054 = vld [vmem:[%s283 + $0x1670] sm:$0xff]
        %v1055 = vld [vmem:[%s283 + $0x1678] sm:$0xff]
        %v1056 = vld [vmem:[%s283 + $0x1680] sm:$0xff]
        %v1057 = vld [vmem:[%s283 + $0x1688] sm:$0xff]
        %v1058 = vld [vmem:[%s283 + $0x1690] sm:$0xff]
        %v1059 = vld [vmem:[%s283 + $0x1698] sm:$0xff]
        %v1060 = vld [vmem:[%s283 + $0x16a0] sm:$0xff]
        %v1061 = vld [vmem:[%s283 + $0x16a8] sm:$0xff]
        %v1062 = vld [vmem:[%s283 + $0x16b0] sm:$0xff]
        %v1063 = vld [vmem:[%s283 + $0x16b8] sm:$0xff]
        %v1064 = vld [vmem:[%s283 + $0x16c0] sm:$0xff]
        %v1065 = vld [vmem:[%s283 + $0x16c8] sm:$0xff]
        %v1066 = vld [vmem:[%s283 + $0x16d0] sm:$0xff]
        %v1067 = vld [vmem:[%s283 + $0x16d8] sm:$0xff]
        %v1068 = vld [vmem:[%s283 + $0x16e0] sm:$0xff]
        %v1069 = vld [vmem:[%s283 + $0x16e8] sm:$0xff]
        %v1070 = vld [vmem:[%s283 + $0x16f0] sm:$0xff]
        %v1071 = vld [vmem:[%s283 + $0x16f8] sm:$0xff]
        %v1072 = vld [vmem:[%s283 + $0x1700] sm:$0xff]
        %v1073 = vld [vmem:[%s283 + $0x1708] sm:$0xff]
        %v1074 = vld [vmem:[%s283 + $0x1710] sm:$0xff]
        %v1075 = vld [vmem:[%s283 + $0x1718] sm:$0xff]
        %v1076 = vld [vmem:[%s283 + $0x1720] sm:$0xff]
        %v1077 = vld [vmem:[%s283 + $0x1728] sm:$0xff]
        %v1078 = vld [vmem:[%s283 + $0x1730] sm:$0xff]
        %v1079 = vld [vmem:[%s283 + $0x1738] sm:$0xff]
        %v1080 = vld [vmem:[%s283 + $0x1740] sm:$0xff]
        %v1081 = vld [vmem:[%s283 + $0x1748] sm:$0xff]
        %v1082 = vld [vmem:[%s283 + $0x1750] sm:$0xff]
        %v1083 = vld [vmem:[%s283 + $0x1758] sm:$0xff]
        %v1084 = vld [vmem:[%s283 + $0x1760] sm:$0xff]
        %v1085 = vld [vmem:[%s283 + $0x1768] sm:$0xff]
        %v1086 = vld [vmem:[%s283 + $0x1770] sm:$0xff]
        %v1087 = vld [vmem:[%s283 + $0x1778] sm:$0xff]
        %v1088 = vld [vmem:[%s283 + $0x1780] sm:$0xff]
        %v1089 = vld [vmem:[%s283 + $0x1788] sm:$0xff]
        %v1090 = vld [vmem:[%s283 + $0x1790] sm:$0xff]
        %v1091 = vld [vmem:[%s283 + $0x1798] sm:$0xff]
        %v1092 = vld [vmem:[%s283 + $0x17a0] sm:$0xff]
        %v1093 = vld [vmem:[%s283 + $0x17a8] sm:$0xff]
        %v1094 = vld [vmem:[%s283 + $0x17b0] sm:$0xff]
        %v1095 = vld [vmem:[%s283 + $0x17b8] sm:$0xff]
        %v1096 = vld [vmem:[%s283 + $0x17c0] sm:$0xff]
        %v1097 = vld [vmem:[%s283 + $0x17c8] sm:$0xff]
        %v1098 = vld [vmem:[%s283 + $0x17d0] sm:$0xff]
        %v1099 = vld [vmem:[%s283 + $0x17d8] sm:$0xff]
        %v1100 = vld [vmem:[%s283 + $0x17e0] sm:$0xff]
        %v1101 = vld [vmem:[%s283 + $0x17e8] sm:$0xff]
        %v1102 = vld [vmem:[%s283 + $0x17f0] sm:$0xff]
        %v1103 = vld [vmem:[%s283 + $0x17f8] sm:$0xff]
        %v1104 = vld [vmem:[%s283 + $0x1800] sm:$0xff]
        %v1105 = vld [vmem:[%s283 + $0x1808] sm:$0xff]
        %v1106 = vld [vmem:[%s283 + $0x1810] sm:$0xff]
        %v1107 = vld [vmem:[%s283 + $0x1818] sm:$0xff]
        %v1108 = vld [vmem:[%s283 + $0x1820] sm:$0xff]
        %v1109 = vld [vmem:[%s283 + $0x1828] sm:$0xff]
        %v1110 = vld [vmem:[%s283 + $0x1830] sm:$0xff]
        %v1111 = vld [vmem:[%s283 + $0x1838] sm:$0xff]
        %v1112 = vld [vmem:[%s283 + $0x1840] sm:$0xff]
        %v1113 = vld [vmem:[%s283 + $0x1848] sm:$0xff]
        %v1114 = vld [vmem:[%s283 + $0x1850] sm:$0xff]
        %v1115 = vld [vmem:[%s283 + $0x1858] sm:$0xff]
        %v1116 = vld [vmem:[%s283 + $0x1860] sm:$0xff]
        %v1117 = vld [vmem:[%s283 + $0x1868] sm:$0xff]
        %v1118 = vld [vmem:[%s283 + $0x1870] sm:$0xff]
        %v1119 = vld [vmem:[%s283 + $0x1878] sm:$0xff]
        %v1120 = vld [vmem:[%s283 + $0x1880] sm:$0xff]
        %v1121 = vld [vmem:[%s283 + $0x1888] sm:$0xff]
        %v1122 = vld [vmem:[%s283 + $0x1890] sm:$0xff]
        %v1123 = vld [vmem:[%s283 + $0x1898] sm:$0xff]
        %v1124 = vld [vmem:[%s283 + $0x18a0] sm:$0xff]
        %v1125 = vld [vmem:[%s283 + $0x18a8] sm:$0xff]
        %v1126 = vld [vmem:[%s283 + $0x18b0] sm:$0xff]
        %v1127 = vld [vmem:[%s283 + $0x18b8] sm:$0xff]
        %v1128 = vld [vmem:[%s283 + $0x18c0] sm:$0xff]
        %v1129 = vld [vmem:[%s283 + $0x18c8] sm:$0xff]
        %v1130 = vld [vmem:[%s283 + $0x18d0] sm:$0xff]
        %v1131 = vld [vmem:[%s283 + $0x18d8] sm:$0xff]
        %v1132 = vld [vmem:[%s283 + $0x18e0] sm:$0xff]
        %v1133 = vld [vmem:[%s283 + $0x18e8] sm:$0xff]
        %v1134 = vld [vmem:[%s283 + $0x18f0] sm:$0xff]
        %v1135 = vld [vmem:[%s283 + $0x18f8] sm:$0xff]
        %v1136 = vld [vmem:[%s283 + $0x1900] sm:$0xff]
        %v1137 = vld [vmem:[%s283 + $0x1908] sm:$0xff]
        %v1138 = vld [vmem:[%s283 + $0x1910] sm:$0xff]
        %v1139 = vld [vmem:[%s283 + $0x1918] sm:$0xff]
        %v1140 = vld [vmem:[%s283 + $0x1920] sm:$0xff]
        %v1141 = vld [vmem:[%s283 + $0x1928] sm:$0xff]
        %v1142 = vld [vmem:[%s283 + $0x1930] sm:$0xff]
        %v1143 = vld [vmem:[%s283 + $0x1938] sm:$0xff]
        %v1144 = vld [vmem:[%s283 + $0x1940] sm:$0xff]
        %v1145 = vld [vmem:[%s283 + $0x1948] sm:$0xff]
        %v1146 = vld [vmem:[%s283 + $0x1950] sm:$0xff]
        %v1147 = vld [vmem:[%s283 + $0x1958] sm:$0xff]
        %v1148 = vld [vmem:[%s283 + $0x1960] sm:$0xff]
        %v1149 = vld [vmem:[%s283 + $0x1968] sm:$0xff]
        %v1150 = vld [vmem:[%s283 + $0x1970] sm:$0xff]
        %v1151 = vld [vmem:[%s283 + $0x1978] sm:$0xff]
        %v1152 = vld [vmem:[%s283 + $0x1980] sm:$0xff]
        %v1153 = vld [vmem:[%s283 + $0x1988] sm:$0xff]
        %v1154 = vld [vmem:[%s283 + $0x1990] sm:$0xff]
        %v1155 = vld [vmem:[%s283 + $0x1998] sm:$0xff]
        %v1156 = vld [vmem:[%s283 + $0x19a0] sm:$0xff]
        %v1157 = vld [vmem:[%s283 + $0x19a8] sm:$0xff]
        %v1158 = vld [vmem:[%s283 + $0x19b0] sm:$0xff]
        %v1159 = vld [vmem:[%s283 + $0x19b8] sm:$0xff]
        %v1160 = vld [vmem:[%s283 + $0x19c0] sm:$0xff]
        %v1161 = vld [vmem:[%s283 + $0x19c8] sm:$0xff]
        %v1162 = vld [vmem:[%s283 + $0x19d0] sm:$0xff]
        %v1163 = vld [vmem:[%s283 + $0x19d8] sm:$0xff]
        %v1164 = vld [vmem:[%s283 + $0x19e0] sm:$0xff]
        %v1165 = vld [vmem:[%s283 + $0x19e8] sm:$0xff]
        %v1166 = vld [vmem:[%s283 + $0x19f0] sm:$0xff]
        %v1167 = vld [vmem:[%s283 + $0x19f8] sm:$0xff]
        %v1168 = vld [vmem:[%s283 + $0x1a00] sm:$0xff]
        %v1169 = vld [vmem:[%s283 + $0x1a08] sm:$0xff]
        %v1170 = vld [vmem:[%s283 + $0x1a10] sm:$0xff]
        %v1171 = vld [vmem:[%s283 + $0x1a18] sm:$0xff]
        %v1172 = vld [vmem:[%s283 + $0x1a20] sm:$0xff]
        %v1173 = vld [vmem:[%s283 + $0x1a28] sm:$0xff]
        %v1174 = vld [vmem:[%s283 + $0x1a30] sm:$0xff]
        %v1175 = vld [vmem:[%s283 + $0x1a38] sm:$0xff]
        %v1176 = vld [vmem:[%s283 + $0x1a40] sm:$0xff]
        %v1177 = vld [vmem:[%s283 + $0x1a48] sm:$0xff]
        %v1178 = vld [vmem:[%s283 + $0x1a50] sm:$0xff]
        %v1179 = vld [vmem:[%s283 + $0x1a58] sm:$0xff]
        %v1180 = vld [vmem:[%s283 + $0x1a60] sm:$0xff]
        %v1181 = vld [vmem:[%s283 + $0x1a68] sm:$0xff]
        %v1182 = vld [vmem:[%s283 + $0x1a70] sm:$0xff]
        %v1183 = vld [vmem:[%s283 + $0x1a78] sm:$0xff]
        %v1184 = vld [vmem:[%s283 + $0x1a80] sm:$0xff]
        %v1185 = vld [vmem:[%s283 + $0x1a88] sm:$0xff]
        %v1186 = vld [vmem:[%s283 + $0x1a90] sm:$0xff]
        %v1187 = vld [vmem:[%s283 + $0x1a98] sm:$0xff]
        %v1188 = vld [vmem:[%s283 + $0x1aa0] sm:$0xff]
        %v1189 = vld [vmem:[%s283 + $0x1aa8] sm:$0xff]
        %v1190 = vld [vmem:[%s283 + $0x1ab0] sm:$0xff]
        %v1191 = vld [vmem:[%s283 + $0x1ab8] sm:$0xff]
        %v1192 = vld [vmem:[%s283 + $0x1ac0] sm:$0xff]
        %v1193 = vld [vmem:[%s283 + $0x1ac8] sm:$0xff]
        %v1194 = vld [vmem:[%s283 + $0x1ad0] sm:$0xff]
        %v1195 = vld [vmem:[%s283 + $0x1ad8] sm:$0xff]
        %v1196 = vld [vmem:[%s283 + $0x1ae0] sm:$0xff]
        %v1197 = vld [vmem:[%s283 + $0x1ae8] sm:$0xff]
        %v1198 = vld [vmem:[%s283 + $0x1af0] sm:$0xff]
        %v1199 = vld [vmem:[%s283 + $0x1af8] sm:$0xff]
        %v1200 = vld [vmem:[%s283 + $0x1b00] sm:$0xff]
        %v1201 = vld [vmem:[%s283 + $0x1b08] sm:$0xff]
        %v1202 = vld [vmem:[%s283 + $0x1b10] sm:$0xff]
        %v1203 = vld [vmem:[%s283 + $0x1b18] sm:$0xff]
        %v1204 = vld [vmem:[%s283 + $0x1b20] sm:$0xff]
        %v1205 = vld [vmem:[%s283 + $0x1b28] sm:$0xff]
        %v1206 = vld [vmem:[%s283 + $0x1b30] sm:$0xff]
        %v1207 = vld [vmem:[%s283 + $0x1b38] sm:$0xff]
        %v1208 = vld [vmem:[%s283 + $0x1b40] sm:$0xff]
        %v1209 = vld [vmem:[%s283 + $0x1b48] sm:$0xff]
        %v1210 = vld [vmem:[%s283 + $0x1b50] sm:$0xff]
        %v1211 = vld [vmem:[%s283 + $0x1b58] sm:$0xff]
        %v1212 = vld [vmem:[%s283 + $0x1b60] sm:$0xff]
        %v1213 = vld [vmem:[%s283 + $0x1b68] sm:$0xff]
        %v1214 = vld [vmem:[%s283 + $0x1b70] sm:$0xff]
        %v1215 = vld [vmem:[%s283 + $0x1b78] sm:$0xff]
        %v1216 = vld [vmem:[%s283 + $0x1b80] sm:$0xff]
        %v1217 = vld [vmem:[%s283 + $0x1b88] sm:$0xff]
        %v1218 = vld [vmem:[%s283 + $0x1b90] sm:$0xff]
        %v1219 = vld [vmem:[%s283 + $0x1b98] sm:$0xff]
        %v1220 = vld [vmem:[%s283 + $0x1ba0] sm:$0xff]
        %v1221 = vld [vmem:[%s283 + $0x1ba8] sm:$0xff]
        %v1222 = vld [vmem:[%s283 + $0x1bb0] sm:$0xff]
        %v1223 = vld [vmem:[%s283 + $0x1bb8] sm:$0xff]
        %v1224 = vld [vmem:[%s283 + $0x1bc0] sm:$0xff]
        %v1225 = vld [vmem:[%s283 + $0x1bc8] sm:$0xff]
        %v1226 = vld [vmem:[%s283 + $0x1bd0] sm:$0xff]
        %v1227 = vld [vmem:[%s283 + $0x1bd8] sm:$0xff]
        %v1228 = vld [vmem:[%s283 + $0x1be0] sm:$0xff]
        %v1229 = vld [vmem:[%s283 + $0x1be8] sm:$0xff]
        %v1230 = vld [vmem:[%s283 + $0x1bf0] sm:$0xff]
        %v1231 = vld [vmem:[%s283 + $0x1bf8] sm:$0xff]
        %v1232 = vld [vmem:[%s283 + $0x1c00] sm:$0xff]
        %v1233 = vld [vmem:[%s283 + $0x1c08] sm:$0xff]
        %v1234 = vld [vmem:[%s283 + $0x1c10] sm:$0xff]
        %v1235 = vld [vmem:[%s283 + $0x1c18] sm:$0xff]
        %v1236 = vld [vmem:[%s283 + $0x1c20] sm:$0xff]
        %v1237 = vld [vmem:[%s283 + $0x1c28] sm:$0xff]
        %v1238 = vld [vmem:[%s283 + $0x1c30] sm:$0xff]
        %v1239 = vld [vmem:[%s283 + $0x1c38] sm:$0xff]
        %v1240 = vld [vmem:[%s283 + $0x1c40] sm:$0xff]
        %v1241 = vld [vmem:[%s283 + $0x1c48] sm:$0xff]
        %v1242 = vld [vmem:[%s283 + $0x1c50] sm:$0xff]
        %v1243 = vld [vmem:[%s283 + $0x1c58] sm:$0xff]
        %v1244 = vld [vmem:[%s283 + $0x1c60] sm:$0xff]
        %v1245 = vld [vmem:[%s283 + $0x1c68] sm:$0xff]
        %v1246 = vld [vmem:[%s283 + $0x1c70] sm:$0xff]
        %v1247 = vld [vmem:[%s283 + $0x1c78] sm:$0xff]
        %v1248 = vld [vmem:[%s283 + $0x1c80] sm:$0xff]
        %v1249 = vld [vmem:[%s283 + $0x1c88] sm:$0xff]
        %v1250 = vld [vmem:[%s283 + $0x1c90] sm:$0xff]
        %v1251 = vld [vmem:[%s283 + $0x1c98] sm:$0xff]
        %v1252 = vld [vmem:[%s283 + $0x1ca0] sm:$0xff]
        %v1253 = vld [vmem:[%s283 + $0x1ca8] sm:$0xff]
        %v1254 = vld [vmem:[%s283 + $0x1cb0] sm:$0xff]
        %v1255 = vld [vmem:[%s283 + $0x1cb8] sm:$0xff]
        %v1256 = vld [vmem:[%s283 + $0x1cc0] sm:$0xff]
        %v1257 = vld [vmem:[%s283 + $0x1cc8] sm:$0xff]
        %v1258 = vld [vmem:[%s283 + $0x1cd0] sm:$0xff]
        %v1259 = vld [vmem:[%s283 + $0x1cd8] sm:$0xff]
        %v1260 = vld [vmem:[%s283 + $0x1ce0] sm:$0xff]
        %v1261 = vld [vmem:[%s283 + $0x1ce8] sm:$0xff]
        %v1262 = vld [vmem:[%s283 + $0x1cf0] sm:$0xff]
        %v1263 = vld [vmem:[%s283 + $0x1cf8] sm:$0xff]
        %v1264 = vld [vmem:[%s283 + $0x1d00] sm:$0xff]
        %v1265 = vld [vmem:[%s283 + $0x1d08] sm:$0xff]
        %v1266 = vld [vmem:[%s283 + $0x1d10] sm:$0xff]
        %v1267 = vld [vmem:[%s283 + $0x1d18] sm:$0xff]
        %v1268 = vld [vmem:[%s283 + $0x1d20] sm:$0xff]
        %v1269 = vld [vmem:[%s283 + $0x1d28] sm:$0xff]
        %v1270 = vld [vmem:[%s283 + $0x1d30] sm:$0xff]
        %v1271 = vld [vmem:[%s283 + $0x1d38] sm:$0xff]
        %v1272 = vld [vmem:[%s283 + $0x1d40] sm:$0xff]
        %v1273 = vld [vmem:[%s283 + $0x1d48] sm:$0xff]
        %v1274 = vld [vmem:[%s283 + $0x1d50] sm:$0xff]
        %v1275 = vld [vmem:[%s283 + $0x1d58] sm:$0xff]
        %v1276 = vld [vmem:[%s283 + $0x1d60] sm:$0xff]
        %v1277 = vld [vmem:[%s283 + $0x1d68] sm:$0xff]
        %v1278 = vld [vmem:[%s283 + $0x1d70] sm:$0xff]
        %v1279 = vld [vmem:[%s283 + $0x1d78] sm:$0xff]
        %v1280 = vld [vmem:[%s283 + $0x1d80] sm:$0xff]
        %v1281 = vld [vmem:[%s283 + $0x1d88] sm:$0xff]
        %v1282 = vld [vmem:[%s283 + $0x1d90] sm:$0xff]
        %v1283 = vld [vmem:[%s283 + $0x1d98] sm:$0xff]
        %v1284 = vld [vmem:[%s283 + $0x1da0] sm:$0xff]
        %v1285 = vld [vmem:[%s283 + $0x1da8] sm:$0xff]
        %v1286 = vld [vmem:[%s283 + $0x1db0] sm:$0xff]
        %v1287 = vld [vmem:[%s283 + $0x1db8] sm:$0xff]
        %v1288 = vld [vmem:[%s283 + $0x1dc0] sm:$0xff]
        %v1289 = vld [vmem:[%s283 + $0x1dc8] sm:$0xff]
        %v1290 = vld [vmem:[%s283 + $0x1dd0] sm:$0xff]
        %v1291 = vld [vmem:[%s283 + $0x1dd8] sm:$0xff]
        %v1292 = vld [vmem:[%s283 + $0x1de0] sm:$0xff]
        %v1293 = vld [vmem:[%s283 + $0x1de8] sm:$0xff]
        %v1294 = vld [vmem:[%s283 + $0x1df0] sm:$0xff]
        %v1295 = vld [vmem:[%s283 + $0x1df8] sm:$0xff]
        %v1296 = vld [vmem:[%s283 + $0x1e00] sm:$0xff]
        %v1297 = vld [vmem:[%s283 + $0x1e08] sm:$0xff]
        %v1298 = vld [vmem:[%s283 + $0x1e10] sm:$0xff]
        %v1299 = vld [vmem:[%s283 + $0x1e18] sm:$0xff]
        %v1300 = vld [vmem:[%s283 + $0x1e20] sm:$0xff]
        %v1301 = vld [vmem:[%s283 + $0x1e28] sm:$0xff]
        %v1302 = vld [vmem:[%s283 + $0x1e30] sm:$0xff]
        %v1303 = vld [vmem:[%s283 + $0x1e38] sm:$0xff]
        %v1304 = vld [vmem:[%s283 + $0x1e40] sm:$0xff]
        %v1305 = vld [vmem:[%s283 + $0x1e48] sm:$0xff]
        %v1306 = vld [vmem:[%s283 + $0x1e50] sm:$0xff]
        %v1307 = vld [vmem:[%s283 + $0x1e58] sm:$0xff]
        %v1308 = vld [vmem:[%s283 + $0x1e60] sm:$0xff]
        %v1309 = vld [vmem:[%s283 + $0x1e68] sm:$0xff]
        %v1310 = vld [vmem:[%s283 + $0x1e70] sm:$0xff]
        %v1311 = vld [vmem:[%s283 + $0x1e78] sm:$0xff]
        %v1312 = vld [vmem:[%s283 + $0x1e80] sm:$0xff]
        %v1313 = vld [vmem:[%s283 + $0x1e88] sm:$0xff]
        %v1314 = vld [vmem:[%s283 + $0x1e90] sm:$0xff]
        %v1315 = vld [vmem:[%s283 + $0x1e98] sm:$0xff]
        %v1316 = vld [vmem:[%s283 + $0x1ea0] sm:$0xff]
        %v1317 = vld [vmem:[%s283 + $0x1ea8] sm:$0xff]
        %v1318 = vld [vmem:[%s283 + $0x1eb0] sm:$0xff]
        %v1319 = vld [vmem:[%s283 + $0x1eb8] sm:$0xff]
        %v1320 = vld [vmem:[%s283 + $0x1ec0] sm:$0xff]
        %v1321 = vld [vmem:[%s283 + $0x1ec8] sm:$0xff]
        %v1322 = vld [vmem:[%s283 + $0x1ed0] sm:$0xff]
        %v1323 = vld [vmem:[%s283 + $0x1ed8] sm:$0xff]
        %v1324 = vld [vmem:[%s283 + $0x1ee0] sm:$0xff]
        %v1325 = vld [vmem:[%s283 + $0x1ee8] sm:$0xff]
        %v1326 = vld [vmem:[%s283 + $0x1ef0] sm:$0xff]
        %v1327 = vld [vmem:[%s283 + $0x1ef8] sm:$0xff]
        %v1328 = vld [vmem:[%s283 + $0x1f00] sm:$0xff]
        %v1329 = vld [vmem:[%s283 + $0x1f08] sm:$0xff]
        %v1330 = vld [vmem:[%s283 + $0x1f10] sm:$0xff]
        %v1331 = vld [vmem:[%s283 + $0x1f18] sm:$0xff]
        %v1332 = vld [vmem:[%s283 + $0x1f20] sm:$0xff]
        %v1333 = vld [vmem:[%s283 + $0x1f28] sm:$0xff]
        %v1334 = vld [vmem:[%s283 + $0x1f30] sm:$0xff]
        %v1335 = vld [vmem:[%s283 + $0x1f38] sm:$0xff]
        %v1336 = vld [vmem:[%s283 + $0x1f40] sm:$0xff]
        %v1337 = vld [vmem:[%s283 + $0x1f48] sm:$0xff]
        %v1338 = vld [vmem:[%s283 + $0x1f50] sm:$0xff]
        %v1339 = vld [vmem:[%s283 + $0x1f58] sm:$0xff]
        %v1340 = vld [vmem:[%s283 + $0x1f60] sm:$0xff]
        %v1341 = vld [vmem:[%s283 + $0x1f68] sm:$0xff]
        %v1342 = vld [vmem:[%s283 + $0x1f70] sm:$0xff]
        %v1343 = vld [vmem:[%s283 + $0x1f78] sm:$0xff]
        %v1344 = vld [vmem:[%s283 + $0x1f80] sm:$0xff]
        %v1345 = vld [vmem:[%s283 + $0x1f88] sm:$0xff]
        %v1346 = vld [vmem:[%s283 + $0x1f90] sm:$0xff]
        %v1347 = vld [vmem:[%s283 + $0x1f98] sm:$0xff]
        %v1348 = vld [vmem:[%s283 + $0x1fa0] sm:$0xff]
        %v1349 = vld [vmem:[%s283 + $0x1fa8] sm:$0xff]
        %v1350 = vld [vmem:[%s283 + $0x1fb0] sm:$0xff]
        %v1351 = vld [vmem:[%s283 + $0x1fb8] sm:$0xff]
        %v1352 = vld [vmem:[%s283 + $0x1fc0] sm:$0xff]
        %v1353 = vld [vmem:[%s283 + $0x1fc8] sm:$0xff]
        %v1354 = vld [vmem:[%s283 + $0x1fd0] sm:$0xff]
        %v1355 = vld [vmem:[%s283 + $0x1fd8] sm:$0xff]
        %v1356 = vld [vmem:[%s283 + $0x1fe0] sm:$0xff]
        %v1357 = vld [vmem:[%s283 + $0x1fe8] sm:$0xff]
        %v1358 = vld [vmem:[%s283 + $0x1ff0] sm:$0xff]
        %v1359 = vld [vmem:[%s283 + $0x1ff8] sm:$0xff]
        %v1360 = vld [vmem:[%s283 + $0x2000] sm:$0xff]
        %v1361 = vld [vmem:[%s283 + $0x2008] sm:$0xff]
        %v1362 = vld [vmem:[%s283 + $0x2010] sm:$0xff]
        %v1363 = vld [vmem:[%s283 + $0x2018] sm:$0xff]
        %v1364 = vld [vmem:[%s283 + $0x2020] sm:$0xff]
        %v1365 = vld [vmem:[%s283 + $0x2028] sm:$0xff]
        %v1366 = vld [vmem:[%s283 + $0x2030] sm:$0xff]
        %v1367 = vld [vmem:[%s283 + $0x2038] sm:$0xff]
        %v1368 = vld [vmem:[%s283 + $0x2040] sm:$0xff]
        %v1369 = vld [vmem:[%s283 + $0x2048] sm:$0xff]
        %v1370 = vld [vmem:[%s283 + $0x2050] sm:$0xff]
        %v1371 = vld [vmem:[%s283 + $0x2058] sm:$0xff]
        %v1372 = vld [vmem:[%s283 + $0x2060] sm:$0xff]
        %v1373 = vld [vmem:[%s283 + $0x2068] sm:$0xff]
        %v1374 = vld [vmem:[%s283 + $0x2070] sm:$0xff]
        %v1375 = vld [vmem:[%s283 + $0x2078] sm:$0xff]
        %v1376 = vld [vmem:[%s283 + $0x2080] sm:$0xff]
        %v1377 = vld [vmem:[%s283 + $0x2088] sm:$0xff]
        %v1378 = vld [vmem:[%s283 + $0x2090] sm:$0xff]
        %v1379 = vld [vmem:[%s283 + $0x2098] sm:$0xff]
        %v1380 = vld [vmem:[%s283 + $0x20a0] sm:$0xff]
        %v1381 = vld [vmem:[%s283 + $0x20a8] sm:$0xff]
        %v1382 = vld [vmem:[%s283 + $0x20b0] sm:$0xff]
        %v1383 = vld [vmem:[%s283 + $0x20b8] sm:$0xff]
        %v1384 = vld [vmem:[%s283 + $0x20c0] sm:$0xff]
        %v1385 = vld [vmem:[%s283 + $0x20c8] sm:$0xff]
        %v1386 = vld [vmem:[%s283 + $0x20d0] sm:$0xff]
        %v1387 = vld [vmem:[%s283 + $0x20d8] sm:$0xff]
        %v1388 = vld [vmem:[%s283 + $0x20e0] sm:$0xff]
        %v1389 = vld [vmem:[%s283 + $0x20e8] sm:$0xff]
        %v1390 = vld [vmem:[%s283 + $0x20f0] sm:$0xff]
        %v1391 = vld [vmem:[%s283 + $0x20f8] sm:$0xff]
        %v1392 = vld [vmem:[%s283 + $0x2100] sm:$0xff]
        %v1393 = vld [vmem:[%s283 + $0x2108] sm:$0xff]
        %v1394 = vld [vmem:[%s283 + $0x2110] sm:$0xff]
        %v1395 = vld [vmem:[%s283 + $0x2118] sm:$0xff]
        %v1396 = vld [vmem:[%s283 + $0x2120] sm:$0xff]
        %v1397 = vld [vmem:[%s283 + $0x2128] sm:$0xff]
        %v1398 = vld [vmem:[%s283 + $0x2130] sm:$0xff]
        %v1399 = vld [vmem:[%s283 + $0x2138] sm:$0xff]
        %v1400 = vld [vmem:[%s283 + $0x2140] sm:$0xff]
        %v1401 = vld [vmem:[%s283 + $0x2148] sm:$0xff]
        %v1402 = vld [vmem:[%s283 + $0x2150] sm:$0xff]
        %v1403 = vld [vmem:[%s283 + $0x2158] sm:$0xff]
        %v1404 = vld [vmem:[%s283 + $0x2160] sm:$0xff]
        %v1405 = vld [vmem:[%s283 + $0x2168] sm:$0xff]
        %v1406 = vld [vmem:[%s283 + $0x2170] sm:$0xff]
        %v1407 = vld [vmem:[%s283 + $0x2178] sm:$0xff]
        %v1408 = vld [vmem:[%s283 + $0x2180] sm:$0xff]
        %v1409 = vld [vmem:[%s283 + $0x2188] sm:$0xff]
        %v1410 = vld [vmem:[%s283 + $0x2190] sm:$0xff]
        %v1411 = vld [vmem:[%s283 + $0x2198] sm:$0xff]
        %v1412 = vld [vmem:[%s283 + $0x21a0] sm:$0xff]
        %v1413 = vld [vmem:[%s283 + $0x21a8] sm:$0xff]
        %v1414 = vld [vmem:[%s283 + $0x21b0] sm:$0xff]
        %v1415 = vld [vmem:[%s283 + $0x21b8] sm:$0xff]
        %v1416 = vld [vmem:[%s283 + $0x21c0] sm:$0xff]
        %v1417 = vld [vmem:[%s283 + $0x21c8] sm:$0xff]
        %v1418 = vld [vmem:[%s283 + $0x21d0] sm:$0xff]
        %v1419 = vld [vmem:[%s283 + $0x21d8] sm:$0xff]
        %v1420 = vld [vmem:[%s283 + $0x21e0] sm:$0xff]
        %v1421 = vld [vmem:[%s283 + $0x21e8] sm:$0xff]
        %v1422 = vld [vmem:[%s283 + $0x21f0] sm:$0xff]
        %v1423 = vld [vmem:[%s283 + $0x21f8] sm:$0xff]
        %v1424 = vld [vmem:[%s283 + $0x2200] sm:$0xff]
        %v1425 = vld [vmem:[%s283 + $0x2208] sm:$0xff]
        %v1426 = vld [vmem:[%s283 + $0x2210] sm:$0xff]
        %v1427 = vld [vmem:[%s283 + $0x2218] sm:$0xff]
        %v1428 = vld [vmem:[%s283 + $0x2220] sm:$0xff]
        %v1429 = vld [vmem:[%s283 + $0x2228] sm:$0xff]
        %v1430 = vld [vmem:[%s283 + $0x2230] sm:$0xff]
        %v1431 = vld [vmem:[%s283 + $0x2238] sm:$0xff]
        %v1432 = vld [vmem:[%s283 + $0x2240] sm:$0xff]
        %v1433 = vld [vmem:[%s283 + $0x2248] sm:$0xff]
        %v1434 = vld [vmem:[%s283 + $0x2250] sm:$0xff]
        %v1435 = vld [vmem:[%s283 + $0x2258] sm:$0xff]
        %v1436 = vld [vmem:[%s283 + $0x2260] sm:$0xff]
        %v1437 = vld [vmem:[%s283 + $0x2268] sm:$0xff]
        %v1438 = vld [vmem:[%s283 + $0x2270] sm:$0xff]
        %v1439 = vld [vmem:[%s283 + $0x2278] sm:$0xff]
        %v1440 = vld [vmem:[%s283 + $0x2280] sm:$0xff]
        %v1441 = vld [vmem:[%s283 + $0x2288] sm:$0xff]
        %v1442 = vld [vmem:[%s283 + $0x2290] sm:$0xff]
        %v1443 = vld [vmem:[%s283 + $0x2298] sm:$0xff]
        %v1444 = vld [vmem:[%s283 + $0x22a0] sm:$0xff]
        %v1445 = vld [vmem:[%s283 + $0x22a8] sm:$0xff]
        %v1446 = vld [vmem:[%s283 + $0x22b0] sm:$0xff]
        %v1447 = vld [vmem:[%s283 + $0x22b8] sm:$0xff]
        %v1448 = vld [vmem:[%s283 + $0x22c0] sm:$0xff]
        %v1449 = vld [vmem:[%s283 + $0x22c8] sm:$0xff]
        %v1450 = vld [vmem:[%s283 + $0x22d0] sm:$0xff]
        %v1451 = vld [vmem:[%s283 + $0x22d8] sm:$0xff]
        %v1452 = vld [vmem:[%s283 + $0x22e0] sm:$0xff]
        %v1453 = vld [vmem:[%s283 + $0x22e8] sm:$0xff]
        %v1454 = vld [vmem:[%s283 + $0x22f0] sm:$0xff]
        %v1455 = vld [vmem:[%s283 + $0x22f8] sm:$0xff]
        %v1456 = vld [vmem:[%s283 + $0x2300] sm:$0xff]
        %v1457 = vld [vmem:[%s283 + $0x2308] sm:$0xff]
        %v1458 = vld [vmem:[%s283 + $0x2310] sm:$0xff]
        %v1459 = vld [vmem:[%s283 + $0x2318] sm:$0xff]
        %v1460 = vld [vmem:[%s283 + $0x2320] sm:$0xff]
        %v1461 = vld [vmem:[%s283 + $0x2328] sm:$0xff]
        %v1462 = vld [vmem:[%s283 + $0x2330] sm:$0xff]
        %v1463 = vld [vmem:[%s283 + $0x2338] sm:$0xff]
        %v1464 = vld [vmem:[%s283 + $0x2340] sm:$0xff]
        %v1465 = vld [vmem:[%s283 + $0x2348] sm:$0xff]
        %v1466 = vld [vmem:[%s283 + $0x2350] sm:$0xff]
        %v1467 = vld [vmem:[%s283 + $0x2358] sm:$0xff]
        %v1468 = vld [vmem:[%s283 + $0x2360] sm:$0xff]
        %v1469 = vld [vmem:[%s283 + $0x2368] sm:$0xff]
        %v1470 = vld [vmem:[%s283 + $0x2370] sm:$0xff]
        %v1471 = vld [vmem:[%s283 + $0x2378] sm:$0xff]
        %v1472 = vld [vmem:[%s283 + $0x2380] sm:$0xff]
        %v1473 = vld [vmem:[%s283 + $0x2388] sm:$0xff]
        %v1474 = vld [vmem:[%s283 + $0x2390] sm:$0xff]
        %v1475 = vld [vmem:[%s283 + $0x2398] sm:$0xff]
        %v1476 = vld [vmem:[%s283 + $0x23a0] sm:$0xff]
        %v1477 = vld [vmem:[%s283 + $0x23a8] sm:$0xff]
        %v1478 = vld [vmem:[%s283 + $0x23b0] sm:$0xff]
        %v1479 = vld [vmem:[%s283 + $0x23b8] sm:$0xff]
        %v1480 = vld [vmem:[%s283 + $0x23c0] sm:$0xff]
        %v1481 = vld [vmem:[%s283 + $0x23c8] sm:$0xff]
        %v1482 = vld [vmem:[%s283 + $0x23d0] sm:$0xff]
        %v1483 = vld [vmem:[%s283 + $0x23d8] sm:$0xff]
        %v1484 = vld [vmem:[%s283 + $0x23e0] sm:$0xff]
        %v1485 = vld [vmem:[%s283 + $0x23e8] sm:$0xff]
        %v1486 = vld [vmem:[%s283 + $0x23f0] sm:$0xff]
        %v1487 = vld [vmem:[%s283 + $0x23f8] sm:$0xff]
        %v1488 = vld [vmem:[%s283 + $0x2400] sm:$0xff]
        %v1489 = vld [vmem:[%s283 + $0x2408] sm:$0xff]
        %v1490 = vld [vmem:[%s283 + $0x2410] sm:$0xff]
        %v1491 = vld [vmem:[%s283 + $0x2418] sm:$0xff]
        %v1492 = vld [vmem:[%s283 + $0x2420] sm:$0xff]
        %v1493 = vld [vmem:[%s283 + $0x2428] sm:$0xff]
        %v1494 = vld [vmem:[%s283 + $0x2430] sm:$0xff]
        %v1495 = vld [vmem:[%s283 + $0x2438] sm:$0xff]
        %v1496 = vld [vmem:[%s283 + $0x2440] sm:$0xff]
        %v1497 = vld [vmem:[%s283 + $0x2448] sm:$0xff]
        %v1498 = vld [vmem:[%s283 + $0x2450] sm:$0xff]
        %v1499 = vld [vmem:[%s283 + $0x2458] sm:$0xff]
        %v1500 = vld [vmem:[%s283 + $0x2460] sm:$0xff]
        %v1501 = vld [vmem:[%s283 + $0x2468] sm:$0xff]
        %v1502 = vld [vmem:[%s283 + $0x2470] sm:$0xff]
        %v1503 = vld [vmem:[%s283 + $0x2478] sm:$0xff]
        %v1504 = vld [vmem:[%s283 + $0x2480] sm:$0xff]
        %v1505 = vld [vmem:[%s283 + $0x2488] sm:$0xff]
        %v1506 = vld [vmem:[%s283 + $0x2490] sm:$0xff]
        %v1507 = vld [vmem:[%s283 + $0x2498] sm:$0xff]
        %v1508 = vld [vmem:[%s283 + $0x24a0] sm:$0xff]
        %v1509 = vld [vmem:[%s283 + $0x24a8] sm:$0xff]
        %v1510 = vld [vmem:[%s283 + $0x24b0] sm:$0xff]
        %v1511 = vld [vmem:[%s283 + $0x24b8] sm:$0xff]
        %v1512 = vld [vmem:[%s283 + $0x24c0] sm:$0xff]
        %v1513 = vld [vmem:[%s283 + $0x24c8] sm:$0xff]
        %v1514 = vld [vmem:[%s283 + $0x24d0] sm:$0xff]
        %v1515 = vld [vmem:[%s283 + $0x24d8] sm:$0xff]
        %v1516 = vld [vmem:[%s283 + $0x24e0] sm:$0xff]
        %v1517 = vld [vmem:[%s283 + $0x24e8] sm:$0xff]
        %v1518 = vld [vmem:[%s283 + $0x24f0] sm:$0xff]
        %v1519 = vld [vmem:[%s283 + $0x24f8] sm:$0xff]
        %v1520 = vld [vmem:[%s283 + $0x2500] sm:$0xff]
        %v1521 = vld [vmem:[%s283 + $0x2508] sm:$0xff]
        %v1522 = vld [vmem:[%s283 + $0x2510] sm:$0xff]
        %v1523 = vld [vmem:[%s283 + $0x2518] sm:$0xff]
        %v1524 = vld [vmem:[%s283 + $0x2520] sm:$0xff]
        %v1525 = vld [vmem:[%s283 + $0x2528] sm:$0xff]
        %v1526 = vld [vmem:[%s283 + $0x2530] sm:$0xff]
        %v1527 = vld [vmem:[%s283 + $0x2538] sm:$0xff]
        %v1528 = vld [vmem:[%s283 + $0x2540] sm:$0xff]
        %v1529 = vld [vmem:[%s283 + $0x2548] sm:$0xff]
        %v1530 = vld [vmem:[%s283 + $0x2550] sm:$0xff]
        %v1531 = vld [vmem:[%s283 + $0x2558] sm:$0xff]
        %v1532 = vld [vmem:[%s283 + $0x2560] sm:$0xff]
        %v1533 = vld [vmem:[%s283 + $0x2568] sm:$0xff]
        %v1534 = vld [vmem:[%s283 + $0x2570] sm:$0xff]
        %v1535 = vld [vmem:[%s283 + $0x2578] sm:$0xff]
        %v1536 = vld [vmem:[%s283 + $0x2580] sm:$0xff]
        %v1537 = vld [vmem:[%s283 + $0x2588] sm:$0xff]
        %v1538 = vld [vmem:[%s283 + $0x2590] sm:$0xff]
        %v1539 = vld [vmem:[%s283 + $0x2598] sm:$0xff]
        %v1540 = vld [vmem:[%s283 + $0x25a0] sm:$0xff]
        %v1541 = vld [vmem:[%s283 + $0x25a8] sm:$0xff]
        %v1542 = vld [vmem:[%s283 + $0x25b0] sm:$0xff]
        %v1543 = vld [vmem:[%s283 + $0x25b8] sm:$0xff]
        %v1544 = vld [vmem:[%s283 + $0x25c0] sm:$0xff]
        %v1545 = vld [vmem:[%s283 + $0x25c8] sm:$0xff]
        %v1546 = vld [vmem:[%s283 + $0x25d0] sm:$0xff]
        %v1547 = vld [vmem:[%s283 + $0x25d8] sm:$0xff]
        %v1548 = vld [vmem:[%s283 + $0x25e0] sm:$0xff]
        %v1549 = vld [vmem:[%s283 + $0x25e8] sm:$0xff]
        %v1550 = vld [vmem:[%s283 + $0x25f0] sm:$0xff]
        %v1551 = vld [vmem:[%s283 + $0x25f8] sm:$0xff]
        %v1552 = vld [vmem:[%s283 + $0x2600] sm:$0xff]
        %v1553 = vld [vmem:[%s283 + $0x2608] sm:$0xff]
        %v1554 = vld [vmem:[%s283 + $0x2610] sm:$0xff]
        %v1555 = vld [vmem:[%s283 + $0x2618] sm:$0xff]
        %v1556 = vld [vmem:[%s283 + $0x2620] sm:$0xff]
        %v1557 = vld [vmem:[%s283 + $0x2628] sm:$0xff]
        %v1558 = vld [vmem:[%s283 + $0x2630] sm:$0xff]
        %v1559 = vld [vmem:[%s283 + $0x2638] sm:$0xff]
        %v1560 = vld [vmem:[%s283 + $0x2640] sm:$0xff]
        %v1561 = vld [vmem:[%s283 + $0x2648] sm:$0xff]
        %v1562 = vld [vmem:[%s283 + $0x2650] sm:$0xff]
        %v1563 = vld [vmem:[%s283 + $0x2658] sm:$0xff]
        %v1564 = vld [vmem:[%s283 + $0x2660] sm:$0xff]
        %v1565 = vld [vmem:[%s283 + $0x2668] sm:$0xff]
        %v1566 = vld [vmem:[%s283 + $0x2670] sm:$0xff]
        %v1567 = vld [vmem:[%s283 + $0x2678] sm:$0xff]
        %v1568 = vld [vmem:[%s283 + $0x2680] sm:$0xff]
        %v1569 = vld [vmem:[%s283 + $0x2688] sm:$0xff]
        %v1570 = vld [vmem:[%s283 + $0x2690] sm:$0xff]
        %v1571 = vld [vmem:[%s283 + $0x2698] sm:$0xff]
        %v1572 = vld [vmem:[%s283 + $0x26a0] sm:$0xff]
        %v1573 = vld [vmem:[%s283 + $0x26a8] sm:$0xff]
        %v1574 = vld [vmem:[%s283 + $0x26b0] sm:$0xff]
        %v1575 = vld [vmem:[%s283 + $0x26b8] sm:$0xff]
        %v1576 = vld [vmem:[%s283 + $0x26c0] sm:$0xff]
        %v1577 = vld [vmem:[%s283 + $0x26c8] sm:$0xff]
        %v1578 = vld [vmem:[%s283 + $0x26d0] sm:$0xff]
        %v1579 = vld [vmem:[%s283 + $0x26d8] sm:$0xff]
        %v1580 = vld [vmem:[%s283 + $0x26e0] sm:$0xff]
        %v1581 = vld [vmem:[%s283 + $0x26e8] sm:$0xff]
        %v1582 = vld [vmem:[%s283 + $0x26f0] sm:$0xff]
        %v1583 = vld [vmem:[%s283 + $0x26f8] sm:$0xff]
        %v1584 = vld [vmem:[%s283 + $0x2700] sm:$0xff]
        %v1585 = vld [vmem:[%s283 + $0x2708] sm:$0xff]
        %v1586 = vld [vmem:[%s283 + $0x2710] sm:$0xff]
        %v1587 = vld [vmem:[%s283 + $0x2718] sm:$0xff]
        %v1588 = vld [vmem:[%s283 + $0x2720] sm:$0xff]
        %v1589 = vld [vmem:[%s283 + $0x2728] sm:$0xff]
        %v1590 = vld [vmem:[%s283 + $0x2730] sm:$0xff]
        %v1591 = vld [vmem:[%s283 + $0x2738] sm:$0xff]
        %v1592 = vld [vmem:[%s283 + $0x2740] sm:$0xff]
        %v1593 = vld [vmem:[%s283 + $0x2748] sm:$0xff]
        %v1594 = vld [vmem:[%s283 + $0x2750] sm:$0xff]
        %v1595 = vld [vmem:[%s283 + $0x2758] sm:$0xff]
        %v1596 = vld [vmem:[%s283 + $0x2760] sm:$0xff]
        %v1597 = vld [vmem:[%s283 + $0x2768] sm:$0xff]
        %v1598 = vld [vmem:[%s283 + $0x2770] sm:$0xff]
        %v1599 = vld [vmem:[%s283 + $0x2778] sm:$0xff]
        %v1600 = vld [vmem:[%s283 + $0x2780] sm:$0xff]
        %v1601 = vld [vmem:[%s283 + $0x2788] sm:$0xff]
        %v1602 = vld [vmem:[%s283 + $0x2790] sm:$0xff]
        %v1603 = vld [vmem:[%s283 + $0x2798] sm:$0xff]
        %v1604 = vld [vmem:[%s283 + $0x27a0] sm:$0xff]
        %v1605 = vld [vmem:[%s283 + $0x27a8] sm:$0xff]
        %v1606 = vld [vmem:[%s283 + $0x27b0] sm:$0xff]
        %v1607 = vld [vmem:[%s283 + $0x27b8] sm:$0xff]
        %v1608 = vld [vmem:[%s283 + $0x27c0] sm:$0xff]
        %v1609 = vld [vmem:[%s283 + $0x27c8] sm:$0xff]
        %v1610 = vld [vmem:[%s283 + $0x27d0] sm:$0xff]
        %v1611 = vld [vmem:[%s283 + $0x27d8] sm:$0xff]
        %v1612 = vld [vmem:[%s283 + $0x27e0] sm:$0xff]
        %v1613 = vld [vmem:[%s283 + $0x27e8] sm:$0xff]
        %v1614 = vld [vmem:[%s283 + $0x27f0] sm:$0xff]
        %v1615 = vld [vmem:[%s283 + $0x27f8] sm:$0xff]
        %v1616 = vld [vmem:[%s283 + $0x2800] sm:$0xff]
        %v1617 = vld [vmem:[%s283 + $0x2808] sm:$0xff]
        %v1618 = vld [vmem:[%s283 + $0x2810] sm:$0xff]
        %v1619 = vld [vmem:[%s283 + $0x2818] sm:$0xff]
        %v1620 = vld [vmem:[%s283 + $0x2820] sm:$0xff]
        %v1621 = vld [vmem:[%s283 + $0x2828] sm:$0xff]
        %v1622 = vld [vmem:[%s283 + $0x2830] sm:$0xff]
        %v1623 = vld [vmem:[%s283 + $0x2838] sm:$0xff]
        %v1624 = vld [vmem:[%s283 + $0x2840] sm:$0xff]
        %v1625 = vld [vmem:[%s283 + $0x2848] sm:$0xff]
        %v1626 = vld [vmem:[%s283 + $0x2850] sm:$0xff]
        %v1627 = vld [vmem:[%s283 + $0x2858] sm:$0xff]
        %v1628 = vld [vmem:[%s283 + $0x2860] sm:$0xff]
        %v1629 = vld [vmem:[%s283 + $0x2868] sm:$0xff]
        %v1630 = vld [vmem:[%s283 + $0x2870] sm:$0xff]
        %v1631 = vld [vmem:[%s283 + $0x2878] sm:$0xff]
        %v1632 = vld [vmem:[%s283 + $0x2880] sm:$0xff]
        %v1633 = vld [vmem:[%s283 + $0x2888] sm:$0xff]
        %v1634 = vld [vmem:[%s283 + $0x2890] sm:$0xff]
        %v1635 = vld [vmem:[%s283 + $0x2898] sm:$0xff]
        %v1636 = vld [vmem:[%s283 + $0x28a0] sm:$0xff]
        %v1637 = vld [vmem:[%s283 + $0x28a8] sm:$0xff]
        %v1638 = vld [vmem:[%s283 + $0x28b0] sm:$0xff]
        %v1639 = vld [vmem:[%s283 + $0x28b8] sm:$0xff]
        %v1640 = vld [vmem:[%s283 + $0x28c0] sm:$0xff]
        %v1641 = vld [vmem:[%s283 + $0x28c8] sm:$0xff]
        %v1642 = vld [vmem:[%s283 + $0x28d0] sm:$0xff]
        %v1643 = vld [vmem:[%s283 + $0x28d8] sm:$0xff]
        %v1644 = vld [vmem:[%s283 + $0x28e0] sm:$0xff]
        %v1645 = vld [vmem:[%s283 + $0x28e8] sm:$0xff]
        %v1646 = vld [vmem:[%s283 + $0x28f0] sm:$0xff]
        %v1647 = vld [vmem:[%s283 + $0x28f8] sm:$0xff]
        %v1648 = vld [vmem:[%s283 + $0x2900] sm:$0xff]
        %v1649 = vld [vmem:[%s283 + $0x2908] sm:$0xff]
        %v1650 = vld [vmem:[%s283 + $0x2910] sm:$0xff]
        %v1651 = vld [vmem:[%s283 + $0x2918] sm:$0xff]
        %v1652 = vld [vmem:[%s283 + $0x2920] sm:$0xff]
        %v1653 = vld [vmem:[%s283 + $0x2928] sm:$0xff]
        %v1654 = vld [vmem:[%s283 + $0x2930] sm:$0xff]
        %v1655 = vld [vmem:[%s283 + $0x2938] sm:$0xff]
        %v1656 = vld [vmem:[%s283 + $0x2940] sm:$0xff]
        %v1657 = vld [vmem:[%s283 + $0x2948] sm:$0xff]
        %v1658 = vld [vmem:[%s283 + $0x2950] sm:$0xff]
        %v1659 = vld [vmem:[%s283 + $0x2958] sm:$0xff]
        %v1660 = vld [vmem:[%s283 + $0x2960] sm:$0xff]
        %v1661 = vld [vmem:[%s283 + $0x2968] sm:$0xff]
        %v1662 = vld [vmem:[%s283 + $0x2970] sm:$0xff]
        %v1663 = vld [vmem:[%s283 + $0x2978] sm:$0xff]
        %v1664 = vld [vmem:[%s283 + $0x2980] sm:$0xff]
        %v1665 = vld [vmem:[%s283 + $0x2988] sm:$0xff]
        %v1666 = vld [vmem:[%s283 + $0x2990] sm:$0xff]
        %v1667 = vld [vmem:[%s283 + $0x2998] sm:$0xff]
        %v1668 = vld [vmem:[%s283 + $0x29a0] sm:$0xff]
        %v1669 = vld [vmem:[%s283 + $0x29a8] sm:$0xff]
        %v1670 = vld [vmem:[%s283 + $0x29b0] sm:$0xff]
        %v1671 = vld [vmem:[%s283 + $0x29b8] sm:$0xff]
        %v1672 = vld [vmem:[%s283 + $0x29c0] sm:$0xff]
        %v1673 = vld [vmem:[%s283 + $0x29c8] sm:$0xff]
        %v1674 = vld [vmem:[%s283 + $0x29d0] sm:$0xff]
        %v1675 = vld [vmem:[%s283 + $0x29d8] sm:$0xff]
        %v1676 = vld [vmem:[%s283 + $0x29e0] sm:$0xff]
        %v1677 = vld [vmem:[%s283 + $0x29e8] sm:$0xff]
        %v1678 = vld [vmem:[%s283 + $0x29f0] sm:$0xff]
        %v1679 = vld [vmem:[%s283 + $0x29f8] sm:$0xff]
        %v1680 = vld [vmem:[%s283 + $0x2a00] sm:$0xff]
        %v1681 = vld [vmem:[%s283 + $0x2a08] sm:$0xff]
        %v1682 = vld [vmem:[%s283 + $0x2a10] sm:$0xff]
        %v1683 = vld [vmem:[%s283 + $0x2a18] sm:$0xff]
        %v1684 = vld [vmem:[%s283 + $0x2a20] sm:$0xff]
        %v1685 = vld [vmem:[%s283 + $0x2a28] sm:$0xff]
        %v1686 = vld [vmem:[%s283 + $0x2a30] sm:$0xff]
        %v1687 = vld [vmem:[%s283 + $0x2a38] sm:$0xff]
        %v1688 = vld [vmem:[%s283 + $0x2a40] sm:$0xff]
        %v1689 = vld [vmem:[%s283 + $0x2a48] sm:$0xff]
        %v1690 = vld [vmem:[%s283 + $0x2a50] sm:$0xff]
        %v1691 = vld [vmem:[%s283 + $0x2a58] sm:$0xff]
        %v1692 = vld [vmem:[%s283 + $0x2a60] sm:$0xff]
        %v1693 = vld [vmem:[%s283 + $0x2a68] sm:$0xff]
        %v1694 = vld [vmem:[%s283 + $0x2a70] sm:$0xff]
        %v1695 = vld [vmem:[%s283 + $0x2a78] sm:$0xff]
        %v1696 = vld [vmem:[%s283 + $0x2a80] sm:$0xff]
        %v1697 = vld [vmem:[%s283 + $0x2a88] sm:$0xff]
        %v1698 = vld [vmem:[%s283 + $0x2a90] sm:$0xff]
        %v1699 = vld [vmem:[%s283 + $0x2a98] sm:$0xff]
        %v1700 = vld [vmem:[%s283 + $0x2aa0] sm:$0xff]
        %v1701 = vld [vmem:[%s283 + $0x2aa8] sm:$0xff]
        %v1702 = vld [vmem:[%s283 + $0x2ab0] sm:$0xff]
        %v1703 = vld [vmem:[%s283 + $0x2ab8] sm:$0xff]
        %v1704 = vld [vmem:[%s283 + $0x2ac0] sm:$0xff]
        %v1705 = vld [vmem:[%s283 + $0x2ac8] sm:$0xff]
        %v1706 = vld [vmem:[%s283 + $0x2ad0] sm:$0xff]
        %v1707 = vld [vmem:[%s283 + $0x2ad8] sm:$0xff]
        %v1708 = vld [vmem:[%s283 + $0x2ae0] sm:$0xff]
        %v1709 = vld [vmem:[%s283 + $0x2ae8] sm:$0xff]
        %v1710 = vld [vmem:[%s283 + $0x2af0] sm:$0xff]
        %v1711 = vld [vmem:[%s283 + $0x2af8] sm:$0xff]
        %v1712 = vld [vmem:[%s283 + $0x2b00] sm:$0xff]
        %v1713 = vld [vmem:[%s283 + $0x2b08] sm:$0xff]
        %v1714 = vld [vmem:[%s283 + $0x2b10] sm:$0xff]
        %v1715 = vld [vmem:[%s283 + $0x2b18] sm:$0xff]
        %v1716 = vld [vmem:[%s283 + $0x2b20] sm:$0xff]
        %v1717 = vld [vmem:[%s283 + $0x2b28] sm:$0xff]
        %v1718 = vld [vmem:[%s283 + $0x2b30] sm:$0xff]
        %v1719 = vld [vmem:[%s283 + $0x2b38] sm:$0xff]
        %v1720 = vld [vmem:[%s283 + $0x2b40] sm:$0xff]
        %v1721 = vld [vmem:[%s283 + $0x2b48] sm:$0xff]
        %v1722 = vld [vmem:[%s283 + $0x2b50] sm:$0xff]
        %v1723 = vld [vmem:[%s283 + $0x2b58] sm:$0xff]
        %v1724 = vld [vmem:[%s283 + $0x2b60] sm:$0xff]
        %v1725 = vld [vmem:[%s283 + $0x2b68] sm:$0xff]
        %v1726 = vld [vmem:[%s283 + $0x2b70] sm:$0xff]
        %v1727 = vld [vmem:[%s283 + $0x2b78] sm:$0xff]
        %v1728 = vld [vmem:[%s283 + $0x2b80] sm:$0xff]
        %v1729 = vld [vmem:[%s283 + $0x2b88] sm:$0xff]
        %v1730 = vld [vmem:[%s283 + $0x2b90] sm:$0xff]
        %v1731 = vld [vmem:[%s283 + $0x2b98] sm:$0xff]
        %v1732 = vld [vmem:[%s283 + $0x2ba0] sm:$0xff]
        %v1733 = vld [vmem:[%s283 + $0x2ba8] sm:$0xff]
        %v1734 = vld [vmem:[%s283 + $0x2bb0] sm:$0xff]
        %v1735 = vld [vmem:[%s283 + $0x2bb8] sm:$0xff]
        %v1736 = vld [vmem:[%s283 + $0x2bc0] sm:$0xff]
        %v1737 = vld [vmem:[%s283 + $0x2bc8] sm:$0xff]
        %v1738 = vld [vmem:[%s283 + $0x2bd0] sm:$0xff]
        %v1739 = vld [vmem:[%s283 + $0x2bd8] sm:$0xff]
        %v1740 = vld [vmem:[%s283 + $0x2be0] sm:$0xff]
        %v1741 = vld [vmem:[%s283 + $0x2be8] sm:$0xff]
        %v1742 = vld [vmem:[%s283 + $0x2bf0] sm:$0xff]
        %v1743 = vld [vmem:[%s283 + $0x2bf8] sm:$0xff]
        %v1744 = vld [vmem:[%s283 + $0x2c00] sm:$0xff]
        %v1745 = vld [vmem:[%s283 + $0x2c08] sm:$0xff]
        %v1746 = vld [vmem:[%s283 + $0x2c10] sm:$0xff]
        %v1747 = vld [vmem:[%s283 + $0x2c18] sm:$0xff]
        %v1748 = vld [vmem:[%s283 + $0x2c20] sm:$0xff]
        %v1749 = vld [vmem:[%s283 + $0x2c28] sm:$0xff]
        %v1750 = vld [vmem:[%s283 + $0x2c30] sm:$0xff]
        %v1751 = vld [vmem:[%s283 + $0x2c38] sm:$0xff]
        %v1752 = vld [vmem:[%s283 + $0x2c40] sm:$0xff]
        %v1753 = vld [vmem:[%s283 + $0x2c48] sm:$0xff]
        %v1754 = vld [vmem:[%s283 + $0x2c50] sm:$0xff]
        %v1755 = vld [vmem:[%s283 + $0x2c58] sm:$0xff]
        %v1756 = vld [vmem:[%s283 + $0x2c60] sm:$0xff]
        %v1757 = vld [vmem:[%s283 + $0x2c68] sm:$0xff]
        %v1758 = vld [vmem:[%s283 + $0x2c70] sm:$0xff]
        %v1759 = vld [vmem:[%s283 + $0x2c78] sm:$0xff]
        %v1760 = vld [vmem:[%s283 + $0x2c80] sm:$0xff]
        %v1761 = vld [vmem:[%s283 + $0x2c88] sm:$0xff]
        %v1762 = vld [vmem:[%s283 + $0x2c90] sm:$0xff]
        %v1763 = vld [vmem:[%s283 + $0x2c98] sm:$0xff]
        %v1764 = vld [vmem:[%s283 + $0x2ca0] sm:$0xff]
        %v1765 = vld [vmem:[%s283 + $0x2ca8] sm:$0xff]
        %v1766 = vld [vmem:[%s283 + $0x2cb0] sm:$0xff]
        %v1767 = vld [vmem:[%s283 + $0x2cb8] sm:$0xff]
        %v1768 = vld [vmem:[%s283 + $0x2cc0] sm:$0xff]
        %v1769 = vld [vmem:[%s283 + $0x2cc8] sm:$0xff]
        %v1770 = vld [vmem:[%s283 + $0x2cd0] sm:$0xff]
        %v1771 = vld [vmem:[%s283 + $0x2cd8] sm:$0xff]
        %v1772 = vld [vmem:[%s283 + $0x2ce0] sm:$0xff]
        %v1773 = vld [vmem:[%s283 + $0x2ce8] sm:$0xff]
        %v1774 = vld [vmem:[%s283 + $0x2cf0] sm:$0xff]
        %v1775 = vld [vmem:[%s283 + $0x2cf8] sm:$0xff]
        %v1776 = vld [vmem:[%s283 + $0x2d00] sm:$0xff]
        %v1777 = vld [vmem:[%s283 + $0x2d08] sm:$0xff]
        %v1778 = vld [vmem:[%s283 + $0x2d10] sm:$0xff]
        %v1779 = vld [vmem:[%s283 + $0x2d18] sm:$0xff]
        %v1780 = vld [vmem:[%s283 + $0x2d20] sm:$0xff]
        %v1781 = vld [vmem:[%s283 + $0x2d28] sm:$0xff]
        %v1782 = vld [vmem:[%s283 + $0x2d30] sm:$0xff]
        %v1783 = vld [vmem:[%s283 + $0x2d38] sm:$0xff]
        %v1784 = vld [vmem:[%s283 + $0x2d40] sm:$0xff]
        %v1785 = vld [vmem:[%s283 + $0x2d48] sm:$0xff]
        %v1786 = vld [vmem:[%s283 + $0x2d50] sm:$0xff]
        %v1787 = vld [vmem:[%s283 + $0x2d58] sm:$0xff]
        %v1788 = vld [vmem:[%s283 + $0x2d60] sm:$0xff]
        %v1789 = vld [vmem:[%s283 + $0x2d68] sm:$0xff]
        %v1790 = vld [vmem:[%s283 + $0x2d70] sm:$0xff]
        %v1791 = vld [vmem:[%s283 + $0x2d78] sm:$0xff]
        %v1792 = vld [vmem:[%s283 + $0x2d80] sm:$0xff]
        %v1793 = vld [vmem:[%s283 + $0x2d88] sm:$0xff]
        %v1794 = vld [vmem:[%s283 + $0x2d90] sm:$0xff]
        %v1795 = vld [vmem:[%s283 + $0x2d98] sm:$0xff]
        %v1796 = vld [vmem:[%s283 + $0x2da0] sm:$0xff]
        %v1797 = vld [vmem:[%s283 + $0x2da8] sm:$0xff]
        %v1798 = vld [vmem:[%s283 + $0x2db0] sm:$0xff]
        %v1799 = vld [vmem:[%s283 + $0x2db8] sm:$0xff]
        %v1800 = vld [vmem:[%s283 + $0x2dc0] sm:$0xff]
        %v1801 = vld [vmem:[%s283 + $0x2dc8] sm:$0xff]
        %v1802 = vld [vmem:[%s283 + $0x2dd0] sm:$0xff]
        %v1803 = vld [vmem:[%s283 + $0x2dd8] sm:$0xff]
        %v1804 = vld [vmem:[%s283 + $0x2de0] sm:$0xff]
        %v1805 = vld [vmem:[%s283 + $0x2de8] sm:$0xff]
        %v1806 = vld [vmem:[%s283 + $0x2df0] sm:$0xff]
        %v1807 = vld [vmem:[%s283 + $0x2df8] sm:$0xff]
        %v1808 = vld [vmem:[%s283 + $0x2e00] sm:$0xff]
        %v1809 = vld [vmem:[%s283 + $0x2e08] sm:$0xff]
        %v1810 = vld [vmem:[%s283 + $0x2e10] sm:$0xff]
        %v1811 = vld [vmem:[%s283 + $0x2e18] sm:$0xff]
        %v1812 = vld [vmem:[%s283 + $0x2e20] sm:$0xff]
        %v1813 = vld [vmem:[%s283 + $0x2e28] sm:$0xff]
        %v1814 = vld [vmem:[%s283 + $0x2e30] sm:$0xff]
        %v1815 = vld [vmem:[%s283 + $0x2e38] sm:$0xff]
        %v1816 = vld [vmem:[%s283 + $0x2e40] sm:$0xff]
        %v1817 = vld [vmem:[%s283 + $0x2e48] sm:$0xff]
        %v1818 = vld [vmem:[%s283 + $0x2e50] sm:$0xff]
        %v1819 = vld [vmem:[%s283 + $0x2e58] sm:$0xff]
        %v1820 = vld [vmem:[%s283 + $0x2e60] sm:$0xff]
        %v1821 = vld [vmem:[%s283 + $0x2e68] sm:$0xff]
        %v1822 = vld [vmem:[%s283 + $0x2e70] sm:$0xff]
        %v1823 = vld [vmem:[%s283 + $0x2e78] sm:$0xff]
        %v1824 = vld [vmem:[%s283 + $0x2e80] sm:$0xff]
        %v1825 = vld [vmem:[%s283 + $0x2e88] sm:$0xff]
        %v1826 = vld [vmem:[%s283 + $0x2e90] sm:$0xff]
        %v1827 = vld [vmem:[%s283 + $0x2e98] sm:$0xff]
        %v1828 = vld [vmem:[%s283 + $0x2ea0] sm:$0xff]
        %v1829 = vld [vmem:[%s283 + $0x2ea8] sm:$0xff]
        %v1830 = vld [vmem:[%s283 + $0x2eb0] sm:$0xff]
        %v1831 = vld [vmem:[%s283 + $0x2eb8] sm:$0xff]
        %v1832 = vld [vmem:[%s283 + $0x2ec0] sm:$0xff]
        %v1833 = vld [vmem:[%s283 + $0x2ec8] sm:$0xff]
        %v1834 = vld [vmem:[%s283 + $0x2ed0] sm:$0xff]
        %v1835 = vld [vmem:[%s283 + $0x2ed8] sm:$0xff]
        %v1836 = vld [vmem:[%s283 + $0x2ee0] sm:$0xff]
        %v1837 = vld [vmem:[%s283 + $0x2ee8] sm:$0xff]
        %v1838 = vld [vmem:[%s283 + $0x2ef0] sm:$0xff]
        %v1839 = vld [vmem:[%s283 + $0x2ef8] sm:$0xff]
        %v1840 = vld [vmem:[%s283 + $0x2f00] sm:$0xff]
        %v1841 = vld [vmem:[%s283 + $0x2f08] sm:$0xff]
        %v1842 = vld [vmem:[%s283 + $0x2f10] sm:$0xff]
        %v1843 = vld [vmem:[%s283 + $0x2f18] sm:$0xff]
        %v1844 = vld [vmem:[%s283 + $0x2f20] sm:$0xff]
        %v1845 = vld [vmem:[%s283 + $0x2f28] sm:$0xff]
        %v1846 = vld [vmem:[%s283 + $0x2f30] sm:$0xff]
        %v1847 = vld [vmem:[%s283 + $0x2f38] sm:$0xff]
        %v1848 = vld [vmem:[%s283 + $0x2f40] sm:$0xff]
        %v1849 = vld [vmem:[%s283 + $0x2f48] sm:$0xff]
        %v1850 = vld [vmem:[%s283 + $0x2f50] sm:$0xff]
        %v1851 = vld [vmem:[%s283 + $0x2f58] sm:$0xff]
        %v1852 = vld [vmem:[%s283 + $0x2f60] sm:$0xff]
        %v1853 = vld [vmem:[%s283 + $0x2f68] sm:$0xff]
        %v1854 = vld [vmem:[%s283 + $0x2f70] sm:$0xff]
        %v1855 = vld [vmem:[%s283 + $0x2f78] sm:$0xff]
        %v1856 = vld [vmem:[%s283 + $0x2f80] sm:$0xff]
        %v1857 = vld [vmem:[%s283 + $0x2f88] sm:$0xff]
        %v1858 = vld [vmem:[%s283 + $0x2f90] sm:$0xff]
        %v1859 = vld [vmem:[%s283 + $0x2f98] sm:$0xff]
        %v1860 = vld [vmem:[%s283 + $0x2fa0] sm:$0xff]
        %v1861 = vld [vmem:[%s283 + $0x2fa8] sm:$0xff]
        %v1862 = vld [vmem:[%s283 + $0x2fb0] sm:$0xff]
        %v1863 = vld [vmem:[%s283 + $0x2fb8] sm:$0xff]
        %v1864 = vld [vmem:[%s283 + $0x2fc0] sm:$0xff]
        %v1865 = vld [vmem:[%s283 + $0x2fc8] sm:$0xff]
        %v1866 = vld [vmem:[%s283 + $0x2fd0] sm:$0xff]
        %v1867 = vld [vmem:[%s283 + $0x2fd8] sm:$0xff]
        %v1868 = vld [vmem:[%s283 + $0x2fe0] sm:$0xff]
        %v1869 = vld [vmem:[%s283 + $0x2fe8] sm:$0xff]
        %v1870 = vld [vmem:[%s283 + $0x2ff0] sm:$0xff]
        %v1871 = vld [vmem:[%s283 + $0x2ff8] sm:$0xff]
        %v1872 = vld [vmem:[%s283 + $0x3000] sm:$0xff]
        %v1873 = vld [vmem:[%s283 + $0x3008] sm:$0xff]
        %v1874 = vld [vmem:[%s283 + $0x3010] sm:$0xff]
        %v1875 = vld [vmem:[%s283 + $0x3018] sm:$0xff]
        %v1876 = vld [vmem:[%s283 + $0x3020] sm:$0xff]
        %v1877 = vld [vmem:[%s283 + $0x3028] sm:$0xff]
        %v1878 = vld [vmem:[%s283 + $0x3030] sm:$0xff]
        %v1879 = vld [vmem:[%s283 + $0x3038] sm:$0xff]
        %v1880 = vld [vmem:[%s283 + $0x3040] sm:$0xff]
        %v1881 = vld [vmem:[%s283 + $0x3048] sm:$0xff]
        %v1882 = vld [vmem:[%s283 + $0x3050] sm:$0xff]
        %v1883 = vld [vmem:[%s283 + $0x3058] sm:$0xff]
        %v1884 = vld [vmem:[%s283 + $0x3060] sm:$0xff]
        %v1885 = vld [vmem:[%s283 + $0x3068] sm:$0xff]
        %v1886 = vld [vmem:[%s283 + $0x3070] sm:$0xff]
        %v1887 = vld [vmem:[%s283 + $0x3078] sm:$0xff]
        %v1888 = vld [vmem:[%s283 + $0x3080] sm:$0xff]
        %v1889 = vld [vmem:[%s283 + $0x3088] sm:$0xff]
        %v1890 = vld [vmem:[%s283 + $0x3090] sm:$0xff]
        %v1891 = vld [vmem:[%s283 + $0x3098] sm:$0xff]
        %v1892 = vld [vmem:[%s283 + $0x30a0] sm:$0xff]
        %v1893 = vld [vmem:[%s283 + $0x30a8] sm:$0xff]
        %v1894 = vld [vmem:[%s283 + $0x30b0] sm:$0xff]
        %v1895 = vld [vmem:[%s283 + $0x30b8] sm:$0xff]
        %v1896 = vld [vmem:[%s283 + $0x30c0] sm:$0xff]
        %v1897 = vld [vmem:[%s283 + $0x30c8] sm:$0xff]
        %v1898 = vld [vmem:[%s283 + $0x30d0] sm:$0xff]
        %v1899 = vld [vmem:[%s283 + $0x30d8] sm:$0xff]
        %v1900 = vld [vmem:[%s283 + $0x30e0] sm:$0xff]
        %v1901 = vld [vmem:[%s283 + $0x30e8] sm:$0xff]
        %v1902 = vld [vmem:[%s283 + $0x30f0] sm:$0xff]
        %v1903 = vld [vmem:[%s283 + $0x30f8] sm:$0xff]
        %v1904 = vld [vmem:[%s283 + $0x3100] sm:$0xff]
        %v1905 = vld [vmem:[%s283 + $0x3108] sm:$0xff]
        %v1906 = vld [vmem:[%s283 + $0x3110] sm:$0xff]
        %v1907 = vld [vmem:[%s283 + $0x3118] sm:$0xff]
        %v1908 = vld [vmem:[%s283 + $0x3120] sm:$0xff]
        %v1909 = vld [vmem:[%s283 + $0x3128] sm:$0xff]
        %v1910 = vld [vmem:[%s283 + $0x3130] sm:$0xff]
        %v1911 = vld [vmem:[%s283 + $0x3138] sm:$0xff]
        %v1912 = vld [vmem:[%s283 + $0x3140] sm:$0xff]
        %v1913 = vld [vmem:[%s283 + $0x3148] sm:$0xff]
        %v1914 = vld [vmem:[%s283 + $0x3150] sm:$0xff]
        %v1915 = vld [vmem:[%s283 + $0x3158] sm:$0xff]
        %v1916 = vld [vmem:[%s283 + $0x3160] sm:$0xff]
        %v1917 = vld [vmem:[%s283 + $0x3168] sm:$0xff]
        %v1918 = vld [vmem:[%s283 + $0x3170] sm:$0xff]
        %v1919 = vld [vmem:[%s283 + $0x3178] sm:$0xff]
        %v1920 = vld [vmem:[%s283 + $0x3180] sm:$0xff]
        %v1921 = vld [vmem:[%s283 + $0x3188] sm:$0xff]
        %v1922 = vld [vmem:[%s283 + $0x3190] sm:$0xff]
        %v1923 = vld [vmem:[%s283 + $0x3198] sm:$0xff]
        %v1924 = vld [vmem:[%s283 + $0x31a0] sm:$0xff]
        %v1925 = vld [vmem:[%s283 + $0x31a8] sm:$0xff]
        %v1926 = vld [vmem:[%s283 + $0x31b0] sm:$0xff]
        %v1927 = vld [vmem:[%s283 + $0x31b8] sm:$0xff]
        %v1928 = vld [vmem:[%s283 + $0x31c0] sm:$0xff]
        %v1929 = vld [vmem:[%s283 + $0x31c8] sm:$0xff]
        %v1930 = vld [vmem:[%s283 + $0x31d0] sm:$0xff]
        %v1931 = vld [vmem:[%s283 + $0x31d8] sm:$0xff]
        %v1932 = vld [vmem:[%s283 + $0x31e0] sm:$0xff]
        %v1933 = vld [vmem:[%s283 + $0x31e8] sm:$0xff]
        %v1934 = vld [vmem:[%s283 + $0x31f0] sm:$0xff]
        %v1935 = vld [vmem:[%s283 + $0x31f8] sm:$0xff]
        %v1936 = vld [vmem:[%s283 + $0x3200] sm:$0xff]
        %v1937 = vld [vmem:[%s283 + $0x3208] sm:$0xff]
        %v1938 = vld [vmem:[%s283 + $0x3210] sm:$0xff]
        %v1939 = vld [vmem:[%s283 + $0x3218] sm:$0xff]
        %v1940 = vld [vmem:[%s283 + $0x3220] sm:$0xff]
        %v1941 = vld [vmem:[%s283 + $0x3228] sm:$0xff]
        %v1942 = vld [vmem:[%s283 + $0x3230] sm:$0xff]
        %v1943 = vld [vmem:[%s283 + $0x3238] sm:$0xff]
        %v1944 = vld [vmem:[%s283 + $0x3240] sm:$0xff]
        %v1945 = vld [vmem:[%s283 + $0x3248] sm:$0xff]
        %v1946 = vld [vmem:[%s283 + $0x3250] sm:$0xff]
        %v1947 = vld [vmem:[%s283 + $0x3258] sm:$0xff]
        %v1948 = vld [vmem:[%s283 + $0x3260] sm:$0xff]
        %v1949 = vld [vmem:[%s283 + $0x3268] sm:$0xff]
        %v1950 = vld [vmem:[%s283 + $0x3270] sm:$0xff]
        %v1951 = vld [vmem:[%s283 + $0x3278] sm:$0xff]
        %v1952 = vld [vmem:[%s283 + $0x3280] sm:$0xff]
        %v1953 = vld [vmem:[%s283 + $0x3288] sm:$0xff]
        %v1954 = vld [vmem:[%s283 + $0x3290] sm:$0xff]
        %v1955 = vld [vmem:[%s283 + $0x3298] sm:$0xff]
        %v1956 = vld [vmem:[%s283 + $0x32a0] sm:$0xff]
        %v1957 = vld [vmem:[%s283 + $0x32a8] sm:$0xff]
        %v1958 = vld [vmem:[%s283 + $0x32b0] sm:$0xff]
        %v1959 = vld [vmem:[%s283 + $0x32b8] sm:$0xff]
        %v1960 = vld [vmem:[%s283 + $0x32c0] sm:$0xff]
        %v1961 = vld [vmem:[%s283 + $0x32c8] sm:$0xff]
        %v1962 = vld [vmem:[%s283 + $0x32d0] sm:$0xff]
        %v1963 = vld [vmem:[%s283 + $0x32d8] sm:$0xff]
        %v1964 = vld [vmem:[%s283 + $0x32e0] sm:$0xff]
        %v1965 = vld [vmem:[%s283 + $0x32e8] sm:$0xff]
        %v1966 = vld [vmem:[%s283 + $0x32f0] sm:$0xff]
        %v1967 = vld [vmem:[%s283 + $0x32f8] sm:$0xff]
        %v1968 = vld [vmem:[%s283 + $0x3300] sm:$0xff]
        %v1969 = vld [vmem:[%s283 + $0x3308] sm:$0xff]
        %v1970 = vld [vmem:[%s283 + $0x3310] sm:$0xff]
        %v1971 = vld [vmem:[%s283 + $0x3318] sm:$0xff]
        %v1972 = vld [vmem:[%s283 + $0x3320] sm:$0xff]
        %v1973 = vld [vmem:[%s283 + $0x3328] sm:$0xff]
        %v1974 = vld [vmem:[%s283 + $0x3330] sm:$0xff]
        %v1975 = vld [vmem:[%s283 + $0x3338] sm:$0xff]
        %v1976 = vld [vmem:[%s283 + $0x3340] sm:$0xff]
        %v1977 = vld [vmem:[%s283 + $0x3348] sm:$0xff]
        %v1978 = vld [vmem:[%s283 + $0x3350] sm:$0xff]
        %v1979 = vld [vmem:[%s283 + $0x3358] sm:$0xff]
        %v1980 = vld [vmem:[%s283 + $0x3360] sm:$0xff]
        %v1981 = vld [vmem:[%s283 + $0x3368] sm:$0xff]
        %v1982 = vld [vmem:[%s283 + $0x3370] sm:$0xff]
        %v1983 = vld [vmem:[%s283 + $0x3378] sm:$0xff]
        %v1984 = vld [vmem:[%s283 + $0x3380] sm:$0xff]
        %v1985 = vld [vmem:[%s283 + $0x3388] sm:$0xff]
        %v1986 = vld [vmem:[%s283 + $0x3390] sm:$0xff]
        %v1987 = vld [vmem:[%s283 + $0x3398] sm:$0xff]
        %v1988 = vld [vmem:[%s283 + $0x33a0] sm:$0xff]
        %v1989 = vld [vmem:[%s283 + $0x33a8] sm:$0xff]
        %v1990 = vld [vmem:[%s283 + $0x33b0] sm:$0xff]
        %v1991 = vld [vmem:[%s283 + $0x33b8] sm:$0xff]
        %v1992 = vld [vmem:[%s283 + $0x33c0] sm:$0xff]
        %v1993 = vld [vmem:[%s283 + $0x33c8] sm:$0xff]
        %v1994 = vld [vmem:[%s283 + $0x33d0] sm:$0xff]
        %v1995 = vld [vmem:[%s283 + $0x33d8] sm:$0xff]
        %v1996 = vld [vmem:[%s283 + $0x33e0] sm:$0xff]
        %v1997 = vld [vmem:[%s283 + $0x33e8] sm:$0xff]
        %v1998 = vld [vmem:[%s283 + $0x33f0] sm:$0xff]
        %v1999 = vld [vmem:[%s283 + $0x33f8] sm:$0xff]
        %v2000 = vld [vmem:[%s283 + $0x3400] sm:$0xff]
        %v2001 = vld [vmem:[%s283 + $0x3408] sm:$0xff]
        %v2002 = vld [vmem:[%s283 + $0x3410] sm:$0xff]
        %v2003 = vld [vmem:[%s283 + $0x3418] sm:$0xff]
        %v2004 = vld [vmem:[%s283 + $0x3420] sm:$0xff]
        %v2005 = vld [vmem:[%s283 + $0x3428] sm:$0xff]
        %v2006 = vld [vmem:[%s283 + $0x3430] sm:$0xff]
        %v2007 = vld [vmem:[%s283 + $0x3438] sm:$0xff]
        %v2008 = vld [vmem:[%s283 + $0x3440] sm:$0xff]
        %v2009 = vld [vmem:[%s283 + $0x3448] sm:$0xff]
        %v2010 = vld [vmem:[%s283 + $0x3450] sm:$0xff]
        %v2011 = vld [vmem:[%s283 + $0x3458] sm:$0xff]
        %v2012 = vld [vmem:[%s283 + $0x3460] sm:$0xff]
        %v2013 = vld [vmem:[%s283 + $0x3468] sm:$0xff]
        %v2014 = vld [vmem:[%s283 + $0x3470] sm:$0xff]
        %v2015 = vld [vmem:[%s283 + $0x3478] sm:$0xff]
        %v2016 = vld [vmem:[%s283 + $0x3480] sm:$0xff]
        %v2017 = vld [vmem:[%s283 + $0x3488] sm:$0xff]
        %v2018 = vld [vmem:[%s283 + $0x3490] sm:$0xff]
        %v2019 = vld [vmem:[%s283 + $0x3498] sm:$0xff]
        %v2020 = vld [vmem:[%s283 + $0x34a0] sm:$0xff]
        %v2021 = vld [vmem:[%s283 + $0x34a8] sm:$0xff]
        %v2022 = vld [vmem:[%s283 + $0x34b0] sm:$0xff]
        %v2023 = vld [vmem:[%s283 + $0x34b8] sm:$0xff]
        %v2024 = vld [vmem:[%s283 + $0x34c0] sm:$0xff]
        %v2025 = vld [vmem:[%s283 + $0x34c8] sm:$0xff]
        %v2026 = vld [vmem:[%s283 + $0x34d0] sm:$0xff]
        %v2027 = vld [vmem:[%s283 + $0x34d8] sm:$0xff]
        %v2028 = vld [vmem:[%s283 + $0x34e0] sm:$0xff]
        %v2029 = vld [vmem:[%s283 + $0x34e8] sm:$0xff]
        %v2030 = vld [vmem:[%s283 + $0x34f0] sm:$0xff]
        %v2031 = vld [vmem:[%s283 + $0x34f8] sm:$0xff]
        %v2032 = vld [vmem:[%s283 + $0x3500] sm:$0xff]
        %v2033 = vld [vmem:[%s283 + $0x3508] sm:$0xff]
        %v2034 = vld [vmem:[%s283 + $0x3510] sm:$0xff]
        %v2035 = vld [vmem:[%s283 + $0x3518] sm:$0xff]
        %v2036 = vld [vmem:[%s283 + $0x3520] sm:$0xff]
        %v2037 = vld [vmem:[%s283 + $0x3528] sm:$0xff]
        %v2038 = vld [vmem:[%s283 + $0x3530] sm:$0xff]
        %v2039 = vld [vmem:[%s283 + $0x3538] sm:$0xff]
        %v2040 = vld [vmem:[%s283 + $0x3540] sm:$0xff]
        %v2041 = vld [vmem:[%s283 + $0x3548] sm:$0xff]
        %v2042 = vld [vmem:[%s283 + $0x3550] sm:$0xff]
        %v2043 = vld [vmem:[%s283 + $0x3558] sm:$0xff]
        %v2044 = vld [vmem:[%s283 + $0x3560] sm:$0xff]
        %v2045 = vld [vmem:[%s283 + $0x3568] sm:$0xff]
        %v2046 = vld [vmem:[%s283 + $0x3570] sm:$0xff]
        %v2047 = vld [vmem:[%s283 + $0x3578] sm:$0xff]
        %v2048 = vld [vmem:[%s283 + $0x3580] sm:$0xff]
        %v2049 = vld [vmem:[%s283 + $0x3588] sm:$0xff]
        %v2050 = vld [vmem:[%s283 + $0x3590] sm:$0xff]
        %v2051 = vld [vmem:[%s283 + $0x3598] sm:$0xff]
        %v2052 = vld [vmem:[%s283 + $0x35a0] sm:$0xff]
        %v2053 = vld [vmem:[%s283 + $0x35a8] sm:$0xff]
        %v2054 = vld [vmem:[%s283 + $0x35b0] sm:$0xff]
        %v2055 = vld [vmem:[%s283 + $0x35b8] sm:$0xff]
        %v2056 = vld [vmem:[%s283 + $0x35c0] sm:$0xff]
        %v2057 = vld [vmem:[%s283 + $0x35c8] sm:$0xff]
        %v2058 = vld [vmem:[%s283 + $0x35d0] sm:$0xff]
        %v2059 = vld [vmem:[%s283 + $0x35d8] sm:$0xff]
        %v2060 = vld [vmem:[%s283 + $0x35e0] sm:$0xff]
        %v2061 = vld [vmem:[%s283 + $0x35e8] sm:$0xff]
        %v2062 = vld [vmem:[%s283 + $0x35f0] sm:$0xff]
        %v2063 = vld [vmem:[%s283 + $0x35f8] sm:$0xff]
        %v2064 = vld [vmem:[%s283 + $0x3600] sm:$0xff]
        %v2065 = vld [vmem:[%s283 + $0x3608] sm:$0xff]
        %v2066 = vld [vmem:[%s283 + $0x3610] sm:$0xff]
        %v2067 = vld [vmem:[%s283 + $0x3618] sm:$0xff]
        %v2068 = vld [vmem:[%s283 + $0x3620] sm:$0xff]
        %v2069 = vld [vmem:[%s283 + $0x3628] sm:$0xff]
        %v2070 = vld [vmem:[%s283 + $0x3630] sm:$0xff]
        %v2071 = vld [vmem:[%s283 + $0x3638] sm:$0xff]
        %v2072 = vld [vmem:[%s283 + $0x3640] sm:$0xff]
        %v2073 = vld [vmem:[%s283 + $0x3648] sm:$0xff]
        %v2074 = vld [vmem:[%s283 + $0x3650] sm:$0xff]
        %v2075 = vld [vmem:[%s283 + $0x3658] sm:$0xff]
        %v2076 = vld [vmem:[%s283 + $0x3660] sm:$0xff]
        %v2077 = vld [vmem:[%s283 + $0x3668] sm:$0xff]
        %v2078 = vld [vmem:[%s283 + $0x3670] sm:$0xff]
        %v2079 = vld [vmem:[%s283 + $0x3678] sm:$0xff]
        %v2080 = vld [vmem:[%s283 + $0x3680] sm:$0xff]
        %v2081 = vld [vmem:[%s283 + $0x3688] sm:$0xff]
        %v2082 = vld [vmem:[%s283 + $0x3690] sm:$0xff]
        %v2083 = vld [vmem:[%s283 + $0x3698] sm:$0xff]
        %v2084 = vld [vmem:[%s283 + $0x36a0] sm:$0xff]
        %v2085 = vld [vmem:[%s283 + $0x36a8] sm:$0xff]
        %v2086 = vld [vmem:[%s283 + $0x36b0] sm:$0xff]
        %v2087 = vld [vmem:[%s283 + $0x36b8] sm:$0xff]
        %v2088 = vld [vmem:[%s283 + $0x36c0] sm:$0xff]
        %v2089 = vld [vmem:[%s283 + $0x36c8] sm:$0xff]
        %v2090 = vld [vmem:[%s283 + $0x36d0] sm:$0xff]
        %v2091 = vld [vmem:[%s283 + $0x36d8] sm:$0xff]
        %v2092 = vld [vmem:[%s283 + $0x36e0] sm:$0xff]
        %v2093 = vld [vmem:[%s283 + $0x36e8] sm:$0xff]
        %v2094 = vld [vmem:[%s283 + $0x36f0] sm:$0xff]
        %v2095 = vld [vmem:[%s283 + $0x36f8] sm:$0xff]
        %v2096 = vld [vmem:[%s283 + $0x3700] sm:$0xff]
        %v2097 = vld [vmem:[%s283 + $0x3708] sm:$0xff]
        %v2098 = vld [vmem:[%s283 + $0x3710] sm:$0xff]
        %v2099 = vld [vmem:[%s283 + $0x3718] sm:$0xff]
        %v2100 = vld [vmem:[%s283 + $0x3720] sm:$0xff]
        %v2101 = vld [vmem:[%s283 + $0x3728] sm:$0xff]
        %v2102 = vld [vmem:[%s283 + $0x3730] sm:$0xff]
        %v2103 = vld [vmem:[%s283 + $0x3738] sm:$0xff]
        %v2104 = vld [vmem:[%s283 + $0x3740] sm:$0xff]
        %v2105 = vld [vmem:[%s283 + $0x3748] sm:$0xff]
        %v2106 = vld [vmem:[%s283 + $0x3750] sm:$0xff]
        %v2107 = vld [vmem:[%s283 + $0x3758] sm:$0xff]
        %v2108 = vld [vmem:[%s283 + $0x3760] sm:$0xff]
        %v2109 = vld [vmem:[%s283 + $0x3768] sm:$0xff]
        %v2110 = vld [vmem:[%s283 + $0x3770] sm:$0xff]
        %v2111 = vld [vmem:[%s283 + $0x3778] sm:$0xff]
        %v2112 = vld [vmem:[%s283 + $0x3780] sm:$0xff]
        %v2113 = vld [vmem:[%s283 + $0x3788] sm:$0xff]
        %v2114 = vld [vmem:[%s283 + $0x3790] sm:$0xff]
        %v2115 = vld [vmem:[%s283 + $0x3798] sm:$0xff]
        %v2116 = vld [vmem:[%s283 + $0x37a0] sm:$0xff]
        %v2117 = vld [vmem:[%s283 + $0x37a8] sm:$0xff]
        %v2118 = vld [vmem:[%s283 + $0x37b0] sm:$0xff]
        %v2119 = vld [vmem:[%s283 + $0x37b8] sm:$0xff]
        %v2120 = vld [vmem:[%s283 + $0x37c0] sm:$0xff]
        %v2121 = vld [vmem:[%s283 + $0x37c8] sm:$0xff]
        %v2122 = vld [vmem:[%s283 + $0x37d0] sm:$0xff]
        %v2123 = vld [vmem:[%s283 + $0x37d8] sm:$0xff]
        %v2124 = vld [vmem:[%s283 + $0x37e0] sm:$0xff]
        %v2125 = vld [vmem:[%s283 + $0x37e8] sm:$0xff]
        %v2126 = vld [vmem:[%s283 + $0x37f0] sm:$0xff]
        %v2127 = vld [vmem:[%s283 + $0x37f8] sm:$0xff]
        %v2128 = vld [vmem:[%s283 + $0x3800] sm:$0xff]
        %v2129 = vld [vmem:[%s283 + $0x3808] sm:$0xff]
        %v2130 = vld [vmem:[%s283 + $0x3810] sm:$0xff]
        %v2131 = vld [vmem:[%s283 + $0x3818] sm:$0xff]
        %v2132 = vld [vmem:[%s283 + $0x3820] sm:$0xff]
        %v2133 = vld [vmem:[%s283 + $0x3828] sm:$0xff]
        %v2134 = vld [vmem:[%s283 + $0x3830] sm:$0xff]
        %v2135 = vld [vmem:[%s283 + $0x3838] sm:$0xff]
        %v2136 = vld [vmem:[%s283 + $0x3840] sm:$0xff]
        %v2137 = vld [vmem:[%s283 + $0x3848] sm:$0xff]
        %v2138 = vld [vmem:[%s283 + $0x3850] sm:$0xff]
        %v2139 = vld [vmem:[%s283 + $0x3858] sm:$0xff]
        %v2140 = vld [vmem:[%s283 + $0x3860] sm:$0xff]
        %v2141 = vld [vmem:[%s283 + $0x3868] sm:$0xff]
        %v2142 = vld [vmem:[%s283 + $0x3870] sm:$0xff]
        %v2143 = vld [vmem:[%s283 + $0x3878] sm:$0xff]
        %v2144 = vld [vmem:[%s283 + $0x3880] sm:$0xff]
        %v2145 = vld [vmem:[%s283 + $0x3888] sm:$0xff]
        %v2146 = vld [vmem:[%s283 + $0x3890] sm:$0xff]
        %v2147 = vld [vmem:[%s283 + $0x3898] sm:$0xff]
        %v2148 = vld [vmem:[%s283 + $0x38a0] sm:$0xff]
        %v2149 = vld [vmem:[%s283 + $0x38a8] sm:$0xff]
        %v2150 = vld [vmem:[%s283 + $0x38b0] sm:$0xff]
        %v2151 = vld [vmem:[%s283 + $0x38b8] sm:$0xff]
        %v2152 = vld [vmem:[%s283 + $0x38c0] sm:$0xff]
        %v2153 = vld [vmem:[%s283 + $0x38c8] sm:$0xff]
        %v2154 = vld [vmem:[%s283 + $0x38d0] sm:$0xff]
        %v2155 = vld [vmem:[%s283 + $0x38d8] sm:$0xff]
        %v2156 = vld [vmem:[%s283 + $0x38e0] sm:$0xff]
        %v2157 = vld [vmem:[%s283 + $0x38e8] sm:$0xff]
        %v2158 = vld [vmem:[%s283 + $0x38f0] sm:$0xff]
        %v2159 = vld [vmem:[%s283 + $0x38f8] sm:$0xff]
        %v2160 = vld [vmem:[%s283 + $0x3900] sm:$0xff]
        %v2161 = vld [vmem:[%s283 + $0x3908] sm:$0xff]
        %v2162 = vld [vmem:[%s283 + $0x3910] sm:$0xff]
        %v2163 = vld [vmem:[%s283 + $0x3918] sm:$0xff]
        %v2164 = vld [vmem:[%s283 + $0x3920] sm:$0xff]
        %v2165 = vld [vmem:[%s283 + $0x3928] sm:$0xff]
        %v2166 = vld [vmem:[%s283 + $0x3930] sm:$0xff]
        %v2167 = vld [vmem:[%s283 + $0x3938] sm:$0xff]
        %v2168 = vld [vmem:[%s283 + $0x3940] sm:$0xff]
        %v2169 = vld [vmem:[%s283 + $0x3948] sm:$0xff]
        %v2170 = vld [vmem:[%s283 + $0x3950] sm:$0xff]
        %v2171 = vld [vmem:[%s283 + $0x3958] sm:$0xff]
        %v2172 = vld [vmem:[%s283 + $0x3960] sm:$0xff]
        %v2173 = vld [vmem:[%s283 + $0x3968] sm:$0xff]
        %v2174 = vld [vmem:[%s283 + $0x3970] sm:$0xff]
        %v2175 = vld [vmem:[%s283 + $0x3978] sm:$0xff]
        %v2176 = vld [vmem:[%s283 + $0x3980] sm:$0xff]
        %v2177 = vld [vmem:[%s283 + $0x3988] sm:$0xff]
        %v2178 = vld [vmem:[%s283 + $0x3990] sm:$0xff]
        %v2179 = vld [vmem:[%s283 + $0x3998] sm:$0xff]
        %v2180 = vld [vmem:[%s283 + $0x39a0] sm:$0xff]
        %v2181 = vld [vmem:[%s283 + $0x39a8] sm:$0xff]
        %v2182 = vld [vmem:[%s283 + $0x39b0] sm:$0xff]
        %v2183 = vld [vmem:[%s283 + $0x39b8] sm:$0xff]
        %v2184 = vld [vmem:[%s283 + $0x39c0] sm:$0xff]
        %v2185 = vld [vmem:[%s283 + $0x39c8] sm:$0xff]
        %v2186 = vld [vmem:[%s283 + $0x39d0] sm:$0xff]
        %v2187 = vld [vmem:[%s283 + $0x39d8] sm:$0xff]
        %v2188 = vld [vmem:[%s283 + $0x39e0] sm:$0xff]
        %v2189 = vld [vmem:[%s283 + $0x39e8] sm:$0xff]
        %v2190 = vld [vmem:[%s283 + $0x39f0] sm:$0xff]
        %v2191 = vld [vmem:[%s283 + $0x39f8] sm:$0xff]
        %v2192 = vld [vmem:[%s283 + $0x3a00] sm:$0xff]
        %v2193 = vld [vmem:[%s283 + $0x3a08] sm:$0xff]
        %v2194 = vld [vmem:[%s283 + $0x3a10] sm:$0xff]
        %v2195 = vld [vmem:[%s283 + $0x3a18] sm:$0xff]
        %v2196 = vld [vmem:[%s283 + $0x3a20] sm:$0xff]
        %v2197 = vld [vmem:[%s283 + $0x3a28] sm:$0xff]
        %v2198 = vld [vmem:[%s283 + $0x3a30] sm:$0xff]
        %v2199 = vld [vmem:[%s283 + $0x3a38] sm:$0xff]
        %v2200 = vld [vmem:[%s283 + $0x3a40] sm:$0xff]
        %v2201 = vld [vmem:[%s283 + $0x3a48] sm:$0xff]
        %v2202 = vld [vmem:[%s283 + $0x3a50] sm:$0xff]
        %v2203 = vld [vmem:[%s283 + $0x3a58] sm:$0xff]
        %v2204 = vld [vmem:[%s283 + $0x3a60] sm:$0xff]
        %v2205 = vld [vmem:[%s283 + $0x3a68] sm:$0xff]
        %v2206 = vld [vmem:[%s283 + $0x3a70] sm:$0xff]
        %v2207 = vld [vmem:[%s283 + $0x3a78] sm:$0xff]
        %v2208 = vld [vmem:[%s283 + $0x3a80] sm:$0xff]
        %v2209 = vld [vmem:[%s283 + $0x3a88] sm:$0xff]
        %v2210 = vld [vmem:[%s283 + $0x3a90] sm:$0xff]
        %v2211 = vld [vmem:[%s283 + $0x3a98] sm:$0xff]
        %v2212 = vld [vmem:[%s283 + $0x3aa0] sm:$0xff]
        %v2213 = vld [vmem:[%s283 + $0x3aa8] sm:$0xff]
        %v2214 = vld [vmem:[%s283 + $0x3ab0] sm:$0xff]
        %v2215 = vld [vmem:[%s283 + $0x3ab8] sm:$0xff]
        %v2216 = vld [vmem:[%s283 + $0x3ac0] sm:$0xff]
        %v2217 = vld [vmem:[%s283 + $0x3ac8] sm:$0xff]
        %v2218 = vld [vmem:[%s283 + $0x3ad0] sm:$0xff]
        %v2219 = vld [vmem:[%s283 + $0x3ad8] sm:$0xff]
        %v2220 = vld [vmem:[%s283 + $0x3ae0] sm:$0xff]
        %v2221 = vld [vmem:[%s283 + $0x3ae8] sm:$0xff]
        %v2222 = vld [vmem:[%s283 + $0x3af0] sm:$0xff]
        %v2223 = vld [vmem:[%s283 + $0x3af8] sm:$0xff]
        %v2224 = vld [vmem:[%s283 + $0x3b00] sm:$0xff]
        %v2225 = vld [vmem:[%s283 + $0x3b08] sm:$0xff]
        %v2226 = vld [vmem:[%s283 + $0x3b10] sm:$0xff]
        %v2227 = vld [vmem:[%s283 + $0x3b18] sm:$0xff]
        %v2228 = vld [vmem:[%s283 + $0x3b20] sm:$0xff]
        %v2229 = vld [vmem:[%s283 + $0x3b28] sm:$0xff]
        %v2230 = vld [vmem:[%s283 + $0x3b30] sm:$0xff]
        %v2231 = vld [vmem:[%s283 + $0x3b38] sm:$0xff]
        %v2232 = vld [vmem:[%s283 + $0x3b40] sm:$0xff]
        %v2233 = vld [vmem:[%s283 + $0x3b48] sm:$0xff]
        %v2234 = vld [vmem:[%s283 + $0x3b50] sm:$0xff]
        %v2235 = vld [vmem:[%s283 + $0x3b58] sm:$0xff]
        %v2236 = vld [vmem:[%s283 + $0x3b60] sm:$0xff]
        %v2237 = vld [vmem:[%s283 + $0x3b68] sm:$0xff]
        %v2238 = vld [vmem:[%s283 + $0x3b70] sm:$0xff]
        %v2239 = vld [vmem:[%s283 + $0x3b78] sm:$0xff]
        %v2240 = vld [vmem:[%s283 + $0x3b80] sm:$0xff]
        %v2241 = vld [vmem:[%s283 + $0x3b88] sm:$0xff]
        %v2242 = vld [vmem:[%s283 + $0x3b90] sm:$0xff]
        %v2243 = vld [vmem:[%s283 + $0x3b98] sm:$0xff]
        %v2244 = vld [vmem:[%s283 + $0x3ba0] sm:$0xff]
        %v2245 = vld [vmem:[%s283 + $0x3ba8] sm:$0xff]
        %v2246 = vld [vmem:[%s283 + $0x3bb0] sm:$0xff]
        %v2247 = vld [vmem:[%s283 + $0x3bb8] sm:$0xff]
        %v2248 = vld [vmem:[%s283 + $0x3bc0] sm:$0xff]
        %v2249 = vld [vmem:[%s283 + $0x3bc8] sm:$0xff]
        %v2250 = vld [vmem:[%s283 + $0x3bd0] sm:$0xff]
        %v2251 = vld [vmem:[%s283 + $0x3bd8] sm:$0xff]
        %v2252 = vld [vmem:[%s283 + $0x3be0] sm:$0xff]
        %v2253 = vld [vmem:[%s283 + $0x3be8] sm:$0xff]
        %v2254 = vld [vmem:[%s283 + $0x3bf0] sm:$0xff]
        %v2255 = vld [vmem:[%s283 + $0x3bf8] sm:$0xff]
        %v2264 = vcombine.high %v328, %v328
        %v2266 = vunpack.c.l.s4 1983009808
        %v2267 = vunpack.c.0.s8 %v2266
        %v2268 = vlaneseq
        %v2269 = vshrl.u32 %v2268, 7
        %v2270 = vsub.s32 %v2267, %v2269
        %v2271 = vrot.slane %v328, %v2270
        %v2273 = vunpack.c.l.s4 1983009808
        %v2274 = vunpack.c.0.s8 %v2273
        %v2275 = vlaneseq
        %v2276 = vshrl.u32 %v2275, 7
        %v2277 = vsub.s32 %v2274, %v2276
        %v2278 = vrot.slane %v2264, %v2277
        %v2279 = vcombine.high %v2271, %v2271
        %v2280 = vcombine.high %v2278, %v2278
        %v2281 = vcombine.high %v329, %v329
        %v2283 = vunpack.c.l.s4 1983009808
        %v2284 = vunpack.c.0.s8 %v2283
        %v2285 = vlaneseq
        %v2286 = vshrl.u32 %v2285, 7
        %v2287 = vsub.s32 %v2284, %v2286
        %v2288 = vrot.slane %v329, %v2287
        %v2290 = vunpack.c.l.s4 1983009808
        %v2291 = vunpack.c.0.s8 %v2290
        %v2292 = vlaneseq
        %v2293 = vshrl.u32 %v2292, 7
        %v2294 = vsub.s32 %v2291, %v2293
        %v2295 = vrot.slane %v2281, %v2294
        %v2296 = vcombine.high %v2288, %v2288
        %v2297 = vcombine.high %v2295, %v2295
        %v2298 = vcombine.high %v330, %v330
        %v2300 = vunpack.c.l.s4 1983009808
        %v2301 = vunpack.c.0.s8 %v2300
        %v2302 = vlaneseq
        %v2303 = vshrl.u32 %v2302, 7
        %v2304 = vsub.s32 %v2301, %v2303
        %v2305 = vrot.slane %v330, %v2304
        %v2307 = vunpack.c.l.s4 1983009808
        %v2308 = vunpack.c.0.s8 %v2307
        %v2309 = vlaneseq
        %v2310 = vshrl.u32 %v2309, 7
        %v2311 = vsub.s32 %v2308, %v2310
        %v2312 = vrot.slane %v2298, %v2311
        %v2313 = vcombine.high %v2305, %v2305
        %v2314 = vcombine.high %v2312, %v2312
        %v2315 = vcombine.high %v331, %v331
        %v2317 = vunpack.c.l.s4 1983009808
        %v2318 = vunpack.c.0.s8 %v2317
        %v2319 = vlaneseq
        %v2320 = vshrl.u32 %v2319, 7
        %v2321 = vsub.s32 %v2318, %v2320
        %v2322 = vrot.slane %v331, %v2321
        %v2324 = vunpack.c.l.s4 1983009808
        %v2325 = vunpack.c.0.s8 %v2324
        %v2326 = vlaneseq
        %v2327 = vshrl.u32 %v2326, 7
        %v2328 = vsub.s32 %v2325, %v2327
        %v2329 = vrot.slane %v2315, %v2328
        %v2330 = vcombine.high %v2322, %v2322
        %v2331 = vcombine.high %v2329, %v2329
        %v2332 = vcombine.high %v332, %v332
        %v2334 = vunpack.c.l.s4 1983009808
        %v2335 = vunpack.c.0.s8 %v2334
        %v2336 = vlaneseq
        %v2337 = vshrl.u32 %v2336, 7
        %v2338 = vsub.s32 %v2335, %v2337
        %v2339 = vrot.slane %v332, %v2338
        %v2341 = vunpack.c.l.s4 1983009808
        %v2342 = vunpack.c.0.s8 %v2341
        %v2343 = vlaneseq
        %v2344 = vshrl.u32 %v2343, 7
        %v2345 = vsub.s32 %v2342, %v2344
        %v2346 = vrot.slane %v2332, %v2345
        %v2347 = vcombine.high %v2339, %v2339
        %v2348 = vcombine.high %v2346, %v2346
        %v2349 = vcombine.high %v333, %v333
        %v2351 = vunpack.c.l.s4 1983009808
        %v2352 = vunpack.c.0.s8 %v2351
        %v2353 = vlaneseq
        %v2354 = vshrl.u32 %v2353, 7
        %v2355 = vsub.s32 %v2352, %v2354
        %v2356 = vrot.slane %v333, %v2355
        %v2358 = vunpack.c.l.s4 1983009808
        %v2359 = vunpack.c.0.s8 %v2358
        %v2360 = vlaneseq
        %v2361 = vshrl.u32 %v2360, 7
        %v2362 = vsub.s32 %v2359, %v2361
        %v2363 = vrot.slane %v2349, %v2362
        %v2364 = vcombine.high %v2356, %v2356
        %v2365 = vcombine.high %v2363, %v2363
        %v2366 = vcombine.high %v334, %v334
        %v2368 = vunpack.c.l.s4 1983009808
        %v2369 = vunpack.c.0.s8 %v2368
        %v2370 = vlaneseq
        %v2371 = vshrl.u32 %v2370, 7
        %v2372 = vsub.s32 %v2369, %v2371
        %v2373 = vrot.slane %v334, %v2372
        %v2375 = vunpack.c.l.s4 1983009808
        %v2376 = vunpack.c.0.s8 %v2375
        %v2377 = vlaneseq
        %v2378 = vshrl.u32 %v2377, 7
        %v2379 = vsub.s32 %v2376, %v2378
        %v2380 = vrot.slane %v2366, %v2379
        %v2381 = vcombine.high %v2373, %v2373
        %v2382 = vcombine.high %v2380, %v2380
        %v2384 = vunpack.c.l.s4 1983009808
        %v2385 = vunpack.c.0.s8 %v2384
        %v2386 = vlaneseq
        %v2387 = vshrl.u32 %v2386, 7
        %v2388 = vsub.s32 %v2385, %v2387
        %v2389 = vrot.slane %v335, %v2388
        %v2390 = vcombine.high %v2389, %v2389
        %2421 = vmatprep.subr.mxu0 %v337
        %2422 = vmatpush1.msra.mxu0 %v336
        %2423 = vmatprep.subr.mxu0 %v341
        %2424 = vmatpush1.msra.mxu0 %v340
        %2425 = vmatprep.subr.mxu0 %v345
        %2426 = vmatpush1.msra.mxu0 %v344
        %2427 = vmatprep.subr.mxu0 %v349
        %2428 = vmatpush1.msra.mxu0 %v348
        %2429 = vmatprep.subr.mxu0 %v353
        %2430 = vmatpush1.msra.mxu0 %v352
        %2431 = vmatprep.subr.mxu0 %v357
        %2432 = vmatpush1.msra.mxu0 %v356
        %2433 = vmatprep.subr.mxu0 %v361
        %2434 = vmatpush1.msra.mxu0 %v360
        %2435 = vmatprep.subr.mxu0 %v365
        %2436 = vmatpush1.msra.mxu0 %v364
        %2437 = vmatprep.subr.mxu0 %v369
        %2438 = vmatpush1.msra.mxu0 %v368
        %2439 = vmatprep.subr.mxu0 %v373
        %2440 = vmatpush1.msra.mxu0 %v372
        %2441 = vmatprep.subr.mxu0 %v377
        %2442 = vmatpush1.msra.mxu0 %v376
        %2443 = vmatprep.subr.mxu0 %v381
        %2444 = vmatpush1.msra.mxu0 %v380
        %2445 = vmatprep.subr.mxu0 %v385
        %2446 = vmatpush1.msra.mxu0 %v384
        %2447 = vmatprep.subr.mxu0 %v389
        %2448 = vmatpush1.msra.mxu0 %v388
        %2449 = vmatprep.subr.mxu0 %v393
        %2450 = vmatpush1.msra.mxu0 %v392
        %2451 = vmatprep.subr.mxu0 %v397
        %2452 = vmatpush1.msra.mxu0 %v396
        %2453 = vmatprep.subr.mxu0 %v401
        %2454 = vmatpush1.msra.mxu0 %v400
        %2455 = vmatprep.subr.mxu0 %v405
        %2456 = vmatpush1.msra.mxu0 %v404
        %2457 = vmatprep.subr.mxu0 %v409
        %2458 = vmatpush1.msra.mxu0 %v408
        %2459 = vmatprep.subr.mxu0 %v413
        %2460 = vmatpush1.msra.mxu0 %v412
        %2461 = vmatprep.subr.mxu0 %v417
        %2462 = vmatpush1.msra.mxu0 %v416
        %2463 = vmatprep.subr.mxu0 %v421
        %2464 = vmatpush1.msra.mxu0 %v420
        %2465 = vmatprep.subr.mxu0 %v425
        %2466 = vmatpush1.msra.mxu0 %v424
        %2467 = vmatprep.subr.mxu0 %v429
        %2468 = vmatpush1.msra.mxu0 %v428
        %2469 = vmatprep.subr.mxu0 %v433
        %2470 = vmatpush1.msra.mxu0 %v432
        %2471 = vmatprep.subr.mxu0 %v437
        %2472 = vmatpush1.msra.mxu0 %v436
        %2473 = vmatprep.subr.mxu0 %v441
        %2474 = vmatpush1.msra.mxu0 %v440
        %2475 = vmatprep.subr.mxu0 %v445
        %2476 = vmatpush1.msra.mxu0 %v444
        %2477 = vmatprep.subr.mxu0 %v449
        %2478 = vmatpush1.msra.mxu0 %v448
        %2479 = vmatprep.subr.mxu0 %v453
        %2480 = vmatpush1.msra.mxu0 %v452
        %2481 = vmatprep.subr.mxu0 %v457
        %2482 = vmatpush1.msra.mxu0 %v456
        %2483 = vmatprep.subr.mxu0 %v461
        %2484 = vmatpush1.msra.mxu0 %v460
        %2485 = vmatprep.mubr.f32.mxu0 %v2279
        %2486 = vmatmul.mubr.f32.gmra.mrb[0].mxu0 %v2271
        %v2487 = vpop.f32.mrb[0].mxu0
        %v2488 = vadd.f32 0.0, %v2487
        %v2489 = vpop.f32.mrb[0].mxu0
        %v2490 = vadd.f32 0.0, %v2489
        %2491 = vdwg.mxu0
        %2492 = vmatprep.subr.mxu0 %v465
        %2493 = vmatpush1.msra.mxu0 %v464
        %2494 = vmatprep.subr.mxu0 %v469
        %2495 = vmatpush1.msra.mxu0 %v468
        %2496 = vmatprep.subr.mxu0 %v473
        %2497 = vmatpush1.msra.mxu0 %v472
        %2498 = vmatprep.subr.mxu0 %v477
        %2499 = vmatpush1.msra.mxu0 %v476
        %2500 = vmatprep.subr.mxu0 %v481
        %2501 = vmatpush1.msra.mxu0 %v480
        %2502 = vmatprep.subr.mxu0 %v485
        %2503 = vmatpush1.msra.mxu0 %v484
        %2504 = vmatprep.subr.mxu0 %v489
        %2505 = vmatpush1.msra.mxu0 %v488
        %2506 = vmatprep.subr.mxu0 %v493
        %2507 = vmatpush1.msra.mxu0 %v492
        %2508 = vmatprep.subr.mxu0 %v497
        %2509 = vmatpush1.msra.mxu0 %v496
        %2510 = vmatprep.subr.mxu0 %v501
        %2511 = vmatpush1.msra.mxu0 %v500
        %2512 = vmatprep.subr.mxu0 %v505
        %2513 = vmatpush1.msra.mxu0 %v504
        %2514 = vmatprep.subr.mxu0 %v509
        %2515 = vmatpush1.msra.mxu0 %v508
        %2516 = vmatprep.subr.mxu0 %v513
        %2517 = vmatpush1.msra.mxu0 %v512
        %2518 = vmatprep.subr.mxu0 %v517
        %2519 = vmatpush1.msra.mxu0 %v516
        %2520 = vmatprep.subr.mxu0 %v521
        %2521 = vmatpush1.msra.mxu0 %v520
        %2522 = vmatprep.subr.mxu0 %v525
        %2523 = vmatpush1.msra.mxu0 %v524
        %2524 = vmatprep.subr.mxu0 %v529
        %2525 = vmatpush1.msra.mxu0 %v528
        %2526 = vmatprep.subr.mxu0 %v533
        %2527 = vmatpush1.msra.mxu0 %v532
        %2528 = vmatprep.subr.mxu0 %v537
        %2529 = vmatpush1.msra.mxu0 %v536
        %2530 = vmatprep.subr.mxu0 %v541
        %2531 = vmatpush1.msra.mxu0 %v540
        %2532 = vmatprep.subr.mxu0 %v545
        %2533 = vmatpush1.msra.mxu0 %v544
        %2534 = vmatprep.subr.mxu0 %v549
        %2535 = vmatpush1.msra.mxu0 %v548
        %2536 = vmatprep.subr.mxu0 %v553
        %2537 = vmatpush1.msra.mxu0 %v552
        %2538 = vmatprep.subr.mxu0 %v557
        %2539 = vmatpush1.msra.mxu0 %v556
        %2540 = vmatprep.subr.mxu0 %v561
        %2541 = vmatpush1.msra.mxu0 %v560
        %2542 = vmatprep.subr.mxu0 %v565
        %2543 = vmatpush1.msra.mxu0 %v564
        %2544 = vmatprep.subr.mxu0 %v569
        %2545 = vmatpush1.msra.mxu0 %v568
        %2546 = vmatprep.subr.mxu0 %v573
        %2547 = vmatpush1.msra.mxu0 %v572
        %2548 = vmatprep.subr.mxu0 %v577
        %2549 = vmatpush1.msra.mxu0 %v576
        %2550 = vmatprep.subr.mxu0 %v581
        %2551 = vmatpush1.msra.mxu0 %v580
        %2552 = vmatprep.subr.mxu0 %v585
        %2553 = vmatpush1.msra.mxu0 %v584
        %2554 = vmatprep.subr.mxu0 %v589
        %2555 = vmatpush1.msra.mxu0 %v588
        %2556 = vmatprep.mubr.f32.mxu0 %v2280
        %2557 = vmatmul.mubr.f32.gmra.mrb[0].mxu0 %v2278
        %v2558 = vpop.f32.mrb[0].mxu0
        %v2559 = vadd.f32 %v2488, %v2558
        %v2560 = vpop.f32.mrb[0].mxu0
        %v2561 = vadd.f32 %v2490, %v2560
        %2562 = vdwg.mxu0
        %2563 = vmatprep.subr.mxu0 %v593
        %2564 = vmatpush1.msra.mxu0 %v592
        %2565 = vmatprep.subr.mxu0 %v597
        %2566 = vmatpush1.msra.mxu0 %v596
        %2567 = vmatprep.subr.mxu0 %v601
        %2568 = vmatpush1.msra.mxu0 %v600
        %2569 = vmatprep.subr.mxu0 %v605
        %2570 = vmatpush1.msra.mxu0 %v604
        %2571 = vmatprep.subr.mxu0 %v609
        %2572 = vmatpush1.msra.mxu0 %v608
        %2573 = vmatprep.subr.mxu0 %v613
        %2574 = vmatpush1.msra.mxu0 %v612
        %2575 = vmatprep.subr.mxu0 %v617
        %2576 = vmatpush1.msra.mxu0 %v616
        %2577 = vmatprep.subr.mxu0 %v621
        %2578 = vmatpush1.msra.mxu0 %v620
        %2579 = vmatprep.subr.mxu0 %v625
        %2580 = vmatpush1.msra.mxu0 %v624
        %2581 = vmatprep.subr.mxu0 %v629
        %2582 = vmatpush1.msra.mxu0 %v628
        %2583 = vmatprep.subr.mxu0 %v633
        %2584 = vmatpush1.msra.mxu0 %v632
        %2585 = vmatprep.subr.mxu0 %v637
        %2586 = vmatpush1.msra.mxu0 %v636
        %2587 = vmatprep.subr.mxu0 %v641
        %2588 = vmatpush1.msra.mxu0 %v640
        %2589 = vmatprep.subr.mxu0 %v645
        %2590 = vmatpush1.msra.mxu0 %v644
        %2591 = vmatprep.subr.mxu0 %v649
        %2592 = vmatpush1.msra.mxu0 %v648
        %2593 = vmatprep.subr.mxu0 %v653
        %2594 = vmatpush1.msra.mxu0 %v652
        %2595 = vmatprep.subr.mxu0 %v657
        %2596 = vmatpush1.msra.mxu0 %v656
        %2597 = vmatprep.subr.mxu0 %v661
        %2598 = vmatpush1.msra.mxu0 %v660
        %2599 = vmatprep.subr.mxu0 %v665
        %2600 = vmatpush1.msra.mxu0 %v664
        %2601 = vmatprep.subr.mxu0 %v669
        %2602 = vmatpush1.msra.mxu0 %v668
        %2603 = vmatprep.subr.mxu0 %v673
        %2604 = vmatpush1.msra.mxu0 %v672
        %2605 = vmatprep.subr.mxu0 %v677
        %2606 = vmatpush1.msra.mxu0 %v676
        %2607 = vmatprep.subr.mxu0 %v681
        %2608 = vmatpush1.msra.mxu0 %v680
        %2609 = vmatprep.subr.mxu0 %v685
        %2610 = vmatpush1.msra.mxu0 %v684
        %2611 = vmatprep.subr.mxu0 %v689
        %2612 = vmatpush1.msra.mxu0 %v688
        %2613 = vmatprep.subr.mxu0 %v693
        %2614 = vmatpush1.msra.mxu0 %v692
        %2615 = vmatprep.subr.mxu0 %v697
        %2616 = vmatpush1.msra.mxu0 %v696
        %2617 = vmatprep.subr.mxu0 %v701
        %2618 = vmatpush1.msra.mxu0 %v700
        %2619 = vmatprep.subr.mxu0 %v705
        %2620 = vmatpush1.msra.mxu0 %v704
        %2621 = vmatprep.subr.mxu0 %v709
        %2622 = vmatpush1.msra.mxu0 %v708
        %2623 = vmatprep.subr.mxu0 %v713
        %2624 = vmatpush1.msra.mxu0 %v712
        %2625 = vmatprep.subr.mxu0 %v717
        %2626 = vmatpush1.msra.mxu0 %v716
        %2627 = vmatprep.mubr.f32.mxu0 %v2296
        %2628 = vmatmul.mubr.f32.gmra.mrb[0].mxu0 %v2288
        %v2629 = vpop.f32.mrb[0].mxu0
        %v2630 = vadd.f32 %v2559, %v2629
        %v2631 = vpop.f32.mrb[0].mxu0
        %v2632 = vadd.f32 %v2561, %v2631
        %2633 = vdwg.mxu0
        %2634 = vmatprep.subr.mxu0 %v721
        %2635 = vmatpush1.msra.mxu0 %v720
        %2636 = vmatprep.subr.mxu0 %v725
        %2637 = vmatpush1.msra.mxu0 %v724
        %2638 = vmatprep.subr.mxu0 %v729
        %2639 = vmatpush1.msra.mxu0 %v728
        %2640 = vmatprep.subr.mxu0 %v733
        %2641 = vmatpush1.msra.mxu0 %v732
        %2642 = vmatprep.subr.mxu0 %v737
        %2643 = vmatpush1.msra.mxu0 %v736
        %2644 = vmatprep.subr.mxu0 %v741
        %2645 = vmatpush1.msra.mxu0 %v740
        %2646 = vmatprep.subr.mxu0 %v745
        %2647 = vmatpush1.msra.mxu0 %v744
        %2648 = vmatprep.subr.mxu0 %v749
        %2649 = vmatpush1.msra.mxu0 %v748
        %2650 = vmatprep.subr.mxu0 %v753
        %2651 = vmatpush1.msra.mxu0 %v752
        %2652 = vmatprep.subr.mxu0 %v757
        %2653 = vmatpush1.msra.mxu0 %v756
        %2654 = vmatprep.subr.mxu0 %v761
        %2655 = vmatpush1.msra.mxu0 %v760
        %2656 = vmatprep.subr.mxu0 %v765
        %2657 = vmatpush1.msra.mxu0 %v764
        %2658 = vmatprep.subr.mxu0 %v769
        %2659 = vmatpush1.msra.mxu0 %v768
        %2660 = vmatprep.subr.mxu0 %v773
        %2661 = vmatpush1.msra.mxu0 %v772
        %2662 = vmatprep.subr.mxu0 %v777
        %2663 = vmatpush1.msra.mxu0 %v776
        %2664 = vmatprep.subr.mxu0 %v781
        %2665 = vmatpush1.msra.mxu0 %v780
        %2666 = vmatprep.subr.mxu0 %v785
        %2667 = vmatpush1.msra.mxu0 %v784
        %2668 = vmatprep.subr.mxu0 %v789
        %2669 = vmatpush1.msra.mxu0 %v788
        %2670 = vmatprep.subr.mxu0 %v793
        %2671 = vmatpush1.msra.mxu0 %v792
        %2672 = vmatprep.subr.mxu0 %v797
        %2673 = vmatpush1.msra.mxu0 %v796
        %2674 = vmatprep.subr.mxu0 %v801
        %2675 = vmatpush1.msra.mxu0 %v800
        %2676 = vmatprep.subr.mxu0 %v805
        %2677 = vmatpush1.msra.mxu0 %v804
        %2678 = vmatprep.subr.mxu0 %v809
        %2679 = vmatpush1.msra.mxu0 %v808
        %2680 = vmatprep.subr.mxu0 %v813
        %2681 = vmatpush1.msra.mxu0 %v812
        %2682 = vmatprep.subr.mxu0 %v817
        %2683 = vmatpush1.msra.mxu0 %v816
        %2684 = vmatprep.subr.mxu0 %v821
        %2685 = vmatpush1.msra.mxu0 %v820
        %2686 = vmatprep.subr.mxu0 %v825
        %2687 = vmatpush1.msra.mxu0 %v824
        %2688 = vmatprep.subr.mxu0 %v829
        %2689 = vmatpush1.msra.mxu0 %v828
        %2690 = vmatprep.subr.mxu0 %v833
        %2691 = vmatpush1.msra.mxu0 %v832
        %2692 = vmatprep.subr.mxu0 %v837
        %2693 = vmatpush1.msra.mxu0 %v836
        %2694 = vmatprep.subr.mxu0 %v841
        %2695 = vmatpush1.msra.mxu0 %v840
        %2696 = vmatprep.subr.mxu0 %v845
        %2697 = vmatpush1.msra.mxu0 %v844
        %2698 = vmatprep.mubr.f32.mxu0 %v2297
        %2699 = vmatmul.mubr.f32.gmra.mrb[0].mxu0 %v2295
        %v2700 = vpop.f32.mrb[0].mxu0
        %v2701 = vadd.f32 %v2630, %v2700
        %v2702 = vpop.f32.mrb[0].mxu0
        %v2703 = vadd.f32 %v2632, %v2702
        %2704 = vdwg.mxu0
        %2705 = vmatprep.subr.mxu0 %v849
        %2706 = vmatpush1.msra.mxu0 %v848
        %2707 = vmatprep.subr.mxu0 %v853
        %2708 = vmatpush1.msra.mxu0 %v852
        %2709 = vmatprep.subr.mxu0 %v857
        %2710 = vmatpush1.msra.mxu0 %v856
        %2711 = vmatprep.subr.mxu0 %v861
        %2712 = vmatpush1.msra.mxu0 %v860
        %2713 = vmatprep.subr.mxu0 %v865
        %2714 = vmatpush1.msra.mxu0 %v864
        %2715 = vmatprep.subr.mxu0 %v869
        %2716 = vmatpush1.msra.mxu0 %v868
        %2717 = vmatprep.subr.mxu0 %v873
        %2718 = vmatpush1.msra.mxu0 %v872
        %2719 = vmatprep.subr.mxu0 %v877
        %2720 = vmatpush1.msra.mxu0 %v876
        %2721 = vmatprep.subr.mxu0 %v881
        %2722 = vmatpush1.msra.mxu0 %v880
        %2723 = vmatprep.subr.mxu0 %v885
        %2724 = vmatpush1.msra.mxu0 %v884
        %2725 = vmatprep.subr.mxu0 %v889
        %2726 = vmatpush1.msra.mxu0 %v888
        %2727 = vmatprep.subr.mxu0 %v893
        %2728 = vmatpush1.msra.mxu0 %v892
        %2729 = vmatprep.subr.mxu0 %v897
        %2730 = vmatpush1.msra.mxu0 %v896
        %2731 = vmatprep.subr.mxu0 %v901
        %2732 = vmatpush1.msra.mxu0 %v900
        %2733 = vmatprep.subr.mxu0 %v905
        %2734 = vmatpush1.msra.mxu0 %v904
        %2735 = vmatprep.subr.mxu0 %v909
        %2736 = vmatpush1.msra.mxu0 %v908
        %2737 = vmatprep.subr.mxu0 %v913
        %2738 = vmatpush1.msra.mxu0 %v912
        %2739 = vmatprep.subr.mxu0 %v917
        %2740 = vmatpush1.msra.mxu0 %v916
        %2741 = vmatprep.subr.mxu0 %v921
        %2742 = vmatpush1.msra.mxu0 %v920
        %2743 = vmatprep.subr.mxu0 %v925
        %2744 = vmatpush1.msra.mxu0 %v924
        %2745 = vmatprep.subr.mxu0 %v929
        %2746 = vmatpush1.msra.mxu0 %v928
        %2747 = vmatprep.subr.mxu0 %v933
        %2748 = vmatpush1.msra.mxu0 %v932
        %2749 = vmatprep.subr.mxu0 %v937
        %2750 = vmatpush1.msra.mxu0 %v936
        %2751 = vmatprep.subr.mxu0 %v941
        %2752 = vmatpush1.msra.mxu0 %v940
        %2753 = vmatprep.subr.mxu0 %v945
        %2754 = vmatpush1.msra.mxu0 %v944
        %2755 = vmatprep.subr.mxu0 %v949
        %2756 = vmatpush1.msra.mxu0 %v948
        %2757 = vmatprep.subr.mxu0 %v953
        %2758 = vmatpush1.msra.mxu0 %v952
        %2759 = vmatprep.subr.mxu0 %v957
        %2760 = vmatpush1.msra.mxu0 %v956
        %2761 = vmatprep.subr.mxu0 %v961
        %2762 = vmatpush1.msra.mxu0 %v960
        %2763 = vmatprep.subr.mxu0 %v965
        %2764 = vmatpush1.msra.mxu0 %v964
        %2765 = vmatprep.subr.mxu0 %v969
        %2766 = vmatpush1.msra.mxu0 %v968
        %2767 = vmatprep.subr.mxu0 %v973
        %2768 = vmatpush1.msra.mxu0 %v972
        %2769 = vmatprep.mubr.f32.mxu0 %v2313
        %2770 = vmatmul.mubr.f32.gmra.mrb[0].mxu0 %v2305
        %v2771 = vpop.f32.mrb[0].mxu0
        %v2772 = vadd.f32 %v2701, %v2771
        %v2773 = vpop.f32.mrb[0].mxu0
        %v2774 = vadd.f32 %v2703, %v2773
        %2775 = vdwg.mxu0
        %2776 = vmatprep.subr.mxu0 %v977
        %2777 = vmatpush1.msra.mxu0 %v976
        %2778 = vmatprep.subr.mxu0 %v981
        %2779 = vmatpush1.msra.mxu0 %v980
        %2780 = vmatprep.subr.mxu0 %v985
        %2781 = vmatpush1.msra.mxu0 %v984
        %2782 = vmatprep.subr.mxu0 %v989
        %2783 = vmatpush1.msra.mxu0 %v988
        %2784 = vmatprep.subr.mxu0 %v993
        %2785 = vmatpush1.msra.mxu0 %v992
        %2786 = vmatprep.subr.mxu0 %v997
        %2787 = vmatpush1.msra.mxu0 %v996
        %2788 = vmatprep.subr.mxu0 %v1001
        %2789 = vmatpush1.msra.mxu0 %v1000
        %2790 = vmatprep.subr.mxu0 %v1005
        %2791 = vmatpush1.msra.mxu0 %v1004
        %2792 = vmatprep.subr.mxu0 %v1009
        %2793 = vmatpush1.msra.mxu0 %v1008
        %2794 = vmatprep.subr.mxu0 %v1013
        %2795 = vmatpush1.msra.mxu0 %v1012
        %2796 = vmatprep.subr.mxu0 %v1017
        %2797 = vmatpush1.msra.mxu0 %v1016
        %2798 = vmatprep.subr.mxu0 %v1021
        %2799 = vmatpush1.msra.mxu0 %v1020
        %2800 = vmatprep.subr.mxu0 %v1025
        %2801 = vmatpush1.msra.mxu0 %v1024
        %2802 = vmatprep.subr.mxu0 %v1029
        %2803 = vmatpush1.msra.mxu0 %v1028
        %2804 = vmatprep.subr.mxu0 %v1033
        %2805 = vmatpush1.msra.mxu0 %v1032
        %2806 = vmatprep.subr.mxu0 %v1037
        %2807 = vmatpush1.msra.mxu0 %v1036
        %2808 = vmatprep.subr.mxu0 %v1041
        %2809 = vmatpush1.msra.mxu0 %v1040
        %2810 = vmatprep.subr.mxu0 %v1045
        %2811 = vmatpush1.msra.mxu0 %v1044
        %2812 = vmatprep.subr.mxu0 %v1049
        %2813 = vmatpush1.msra.mxu0 %v1048
        %2814 = vmatprep.subr.mxu0 %v1053
        %2815 = vmatpush1.msra.mxu0 %v1052
        %2816 = vmatprep.subr.mxu0 %v1057
        %2817 = vmatpush1.msra.mxu0 %v1056
        %2818 = vmatprep.subr.mxu0 %v1061
        %2819 = vmatpush1.msra.mxu0 %v1060
        %2820 = vmatprep.subr.mxu0 %v1065
        %2821 = vmatpush1.msra.mxu0 %v1064
        %2822 = vmatprep.subr.mxu0 %v1069
        %2823 = vmatpush1.msra.mxu0 %v1068
        %2824 = vmatprep.subr.mxu0 %v1073
        %2825 = vmatpush1.msra.mxu0 %v1072
        %2826 = vmatprep.subr.mxu0 %v1077
        %2827 = vmatpush1.msra.mxu0 %v1076
        %2828 = vmatprep.subr.mxu0 %v1081
        %2829 = vmatpush1.msra.mxu0 %v1080
        %2830 = vmatprep.subr.mxu0 %v1085
        %2831 = vmatpush1.msra.mxu0 %v1084
        %2832 = vmatprep.subr.mxu0 %v1089
        %2833 = vmatpush1.msra.mxu0 %v1088
        %2834 = vmatprep.subr.mxu0 %v1093
        %2835 = vmatpush1.msra.mxu0 %v1092
        %2836 = vmatprep.subr.mxu0 %v1097
        %2837 = vmatpush1.msra.mxu0 %v1096
        %2838 = vmatprep.subr.mxu0 %v1101
        %2839 = vmatpush1.msra.mxu0 %v1100
        %2840 = vmatprep.mubr.f32.mxu0 %v2314
        %2841 = vmatmul.mubr.f32.gmra.mrb[0].mxu0 %v2312
        %v2842 = vpop.f32.mrb[0].mxu0
        %v2843 = vadd.f32 %v2772, %v2842
        %v2844 = vpop.f32.mrb[0].mxu0
        %v2845 = vadd.f32 %v2774, %v2844
        %2846 = vdwg.mxu0
        %2847 = vmatprep.subr.mxu0 %v1105
        %2848 = vmatpush1.msra.mxu0 %v1104
        %2849 = vmatprep.subr.mxu0 %v1109
        %2850 = vmatpush1.msra.mxu0 %v1108
        %2851 = vmatprep.subr.mxu0 %v1113
        %2852 = vmatpush1.msra.mxu0 %v1112
        %2853 = vmatprep.subr.mxu0 %v1117
        %2854 = vmatpush1.msra.mxu0 %v1116
        %2855 = vmatprep.subr.mxu0 %v1121
        %2856 = vmatpush1.msra.mxu0 %v1120
        %2857 = vmatprep.subr.mxu0 %v1125
        %2858 = vmatpush1.msra.mxu0 %v1124
        %2859 = vmatprep.subr.mxu0 %v1129
        %2860 = vmatpush1.msra.mxu0 %v1128
        %2861 = vmatprep.subr.mxu0 %v1133
        %2862 = vmatpush1.msra.mxu0 %v1132
        %2863 = vmatprep.subr.mxu0 %v1137
        %2864 = vmatpush1.msra.mxu0 %v1136
        %2865 = vmatprep.subr.mxu0 %v1141
        %2866 = vmatpush1.msra.mxu0 %v1140
        %2867 = vmatprep.subr.mxu0 %v1145
        %2868 = vmatpush1.msra.mxu0 %v1144
        %2869 = vmatprep.subr.mxu0 %v1149
        %2870 = vmatpush1.msra.mxu0 %v1148
        %2871 = vmatprep.subr.mxu0 %v1153
        %2872 = vmatpush1.msra.mxu0 %v1152
        %2873 = vmatprep.subr.mxu0 %v1157
        %2874 = vmatpush1.msra.mxu0 %v1156
        %2875 = vmatprep.subr.mxu0 %v1161
        %2876 = vmatpush1.msra.mxu0 %v1160
        %2877 = vmatprep.subr.mxu0 %v1165
        %2878 = vmatpush1.msra.mxu0 %v1164
        %2879 = vmatprep.subr.mxu0 %v1169
        %2880 = vmatpush1.msra.mxu0 %v1168
        %2881 = vmatprep.subr.mxu0 %v1173
        %2882 = vmatpush1.msra.mxu0 %v1172
        %2883 = vmatprep.subr.mxu0 %v1177
        %2884 = vmatpush1.msra.mxu0 %v1176
        %2885 = vmatprep.subr.mxu0 %v1181
        %2886 = vmatpush1.msra.mxu0 %v1180
        %2887 = vmatprep.subr.mxu0 %v1185
        %2888 = vmatpush1.msra.mxu0 %v1184
        %2889 = vmatprep.subr.mxu0 %v1189
        %2890 = vmatpush1.msra.mxu0 %v1188
        %2891 = vmatprep.subr.mxu0 %v1193
        %2892 = vmatpush1.msra.mxu0 %v1192
        %2893 = vmatprep.subr.mxu0 %v1197
        %2894 = vmatpush1.msra.mxu0 %v1196
        %2895 = vmatprep.subr.mxu0 %v1201
        %2896 = vmatpush1.msra.mxu0 %v1200
        %2897 = vmatprep.subr.mxu0 %v1205
        %2898 = vmatpush1.msra.mxu0 %v1204
        %2899 = vmatprep.subr.mxu0 %v1209
        %2900 = vmatpush1.msra.mxu0 %v1208
        %2901 = vmatprep.subr.mxu0 %v1213
        %2902 = vmatpush1.msra.mxu0 %v1212
        %2903 = vmatprep.subr.mxu0 %v1217
        %2904 = vmatpush1.msra.mxu0 %v1216
        %2905 = vmatprep.subr.mxu0 %v1221
        %2906 = vmatpush1.msra.mxu0 %v1220
        %2907 = vmatprep.subr.mxu0 %v1225
        %2908 = vmatpush1.msra.mxu0 %v1224
        %2909 = vmatprep.subr.mxu0 %v1229
        %2910 = vmatpush1.msra.mxu0 %v1228
        %2911 = vmatprep.mubr.f32.mxu0 %v2330
        %2912 = vmatmul.mubr.f32.gmra.mrb[0].mxu0 %v2322
        %v2913 = vpop.f32.mrb[0].mxu0
        %v2914 = vadd.f32 %v2843, %v2913
        %v2915 = vpop.f32.mrb[0].mxu0
        %v2916 = vadd.f32 %v2845, %v2915
        %2917 = vdwg.mxu0
        %2918 = vmatprep.subr.mxu0 %v1233
        %2919 = vmatpush1.msra.mxu0 %v1232
        %2920 = vmatprep.subr.mxu0 %v1237
        %2921 = vmatpush1.msra.mxu0 %v1236
        %2922 = vmatprep.subr.mxu0 %v1241
        %2923 = vmatpush1.msra.mxu0 %v1240
        %2924 = vmatprep.subr.mxu0 %v1245
        %2925 = vmatpush1.msra.mxu0 %v1244
        %2926 = vmatprep.subr.mxu0 %v1249
        %2927 = vmatpush1.msra.mxu0 %v1248
        %2928 = vmatprep.subr.mxu0 %v1253
        %2929 = vmatpush1.msra.mxu0 %v1252
        %2930 = vmatprep.subr.mxu0 %v1257
        %2931 = vmatpush1.msra.mxu0 %v1256
        %2932 = vmatprep.subr.mxu0 %v1261
        %2933 = vmatpush1.msra.mxu0 %v1260
        %2934 = vmatprep.subr.mxu0 %v1265
        %2935 = vmatpush1.msra.mxu0 %v1264
        %2936 = vmatprep.subr.mxu0 %v1269
        %2937 = vmatpush1.msra.mxu0 %v1268
        %2938 = vmatprep.subr.mxu0 %v1273
        %2939 = vmatpush1.msra.mxu0 %v1272
        %2940 = vmatprep.subr.mxu0 %v1277
        %2941 = vmatpush1.msra.mxu0 %v1276
        %2942 = vmatprep.subr.mxu0 %v1281
        %2943 = vmatpush1.msra.mxu0 %v1280
        %2944 = vmatprep.subr.mxu0 %v1285
        %2945 = vmatpush1.msra.mxu0 %v1284
        %2946 = vmatprep.subr.mxu0 %v1289
        %2947 = vmatpush1.msra.mxu0 %v1288
        %2948 = vmatprep.subr.mxu0 %v1293
        %2949 = vmatpush1.msra.mxu0 %v1292
        %2950 = vmatprep.subr.mxu0 %v1297
        %2951 = vmatpush1.msra.mxu0 %v1296
        %2952 = vmatprep.subr.mxu0 %v1301
        %2953 = vmatpush1.msra.mxu0 %v1300
        %2954 = vmatprep.subr.mxu0 %v1305
        %2955 = vmatpush1.msra.mxu0 %v1304
        %2956 = vmatprep.subr.mxu0 %v1309
        %2957 = vmatpush1.msra.mxu0 %v1308
        %2958 = vmatprep.subr.mxu0 %v1313
        %2959 = vmatpush1.msra.mxu0 %v1312
        %2960 = vmatprep.subr.mxu0 %v1317
        %2961 = vmatpush1.msra.mxu0 %v1316
        %2962 = vmatprep.subr.mxu0 %v1321
        %2963 = vmatpush1.msra.mxu0 %v1320
        %2964 = vmatprep.subr.mxu0 %v1325
        %2965 = vmatpush1.msra.mxu0 %v1324
        %2966 = vmatprep.subr.mxu0 %v1329
        %2967 = vmatpush1.msra.mxu0 %v1328
        %2968 = vmatprep.subr.mxu0 %v1333
        %2969 = vmatpush1.msra.mxu0 %v1332
        %2970 = vmatprep.subr.mxu0 %v1337
        %2971 = vmatpush1.msra.mxu0 %v1336
        %2972 = vmatprep.subr.mxu0 %v1341
        %2973 = vmatpush1.msra.mxu0 %v1340
        %2974 = vmatprep.subr.mxu0 %v1345
        %2975 = vmatpush1.msra.mxu0 %v1344
        %2976 = vmatprep.subr.mxu0 %v1349
        %2977 = vmatpush1.msra.mxu0 %v1348
        %2978 = vmatprep.subr.mxu0 %v1353
        %2979 = vmatpush1.msra.mxu0 %v1352
        %2980 = vmatprep.subr.mxu0 %v1357
        %2981 = vmatpush1.msra.mxu0 %v1356
        %2982 = vmatprep.mubr.f32.mxu0 %v2331
        %2983 = vmatmul.mubr.f32.gmra.mrb[0].mxu0 %v2329
        %v2984 = vpop.f32.mrb[0].mxu0
        %v2985 = vadd.f32 %v2914, %v2984
        %v2986 = vpop.f32.mrb[0].mxu0
        %v2987 = vadd.f32 %v2916, %v2986
        %2988 = vdwg.mxu0
        %2989 = vmatprep.subr.mxu0 %v1361
        %2990 = vmatpush1.msra.mxu0 %v1360
        %2991 = vmatprep.subr.mxu0 %v1365
        %2992 = vmatpush1.msra.mxu0 %v1364
        %2993 = vmatprep.subr.mxu0 %v1369
        %2994 = vmatpush1.msra.mxu0 %v1368
        %2995 = vmatprep.subr.mxu0 %v1373
        %2996 = vmatpush1.msra.mxu0 %v1372
        %2997 = vmatprep.subr.mxu0 %v1377
        %2998 = vmatpush1.msra.mxu0 %v1376
        %2999 = vmatprep.subr.mxu0 %v1381
        %3000 = vmatpush1.msra.mxu0 %v1380
        %3001 = vmatprep.subr.mxu0 %v1385
        %3002 = vmatpush1.msra.mxu0 %v1384
        %3003 = vmatprep.subr.mxu0 %v1389
        %3004 = vmatpush1.msra.mxu0 %v1388
        %3005 = vmatprep.subr.mxu0 %v1393
        %3006 = vmatpush1.msra.mxu0 %v1392
        %3007 = vmatprep.subr.mxu0 %v1397
        %3008 = vmatpush1.msra.mxu0 %v1396
        %3009 = vmatprep.subr.mxu0 %v1401
        %3010 = vmatpush1.msra.mxu0 %v1400
        %3011 = vmatprep.subr.mxu0 %v1405
        %3012 = vmatpush1.msra.mxu0 %v1404
        %3013 = vmatprep.subr.mxu0 %v1409
        %3014 = vmatpush1.msra.mxu0 %v1408
        %3015 = vmatprep.subr.mxu0 %v1413
        %3016 = vmatpush1.msra.mxu0 %v1412
        %3017 = vmatprep.subr.mxu0 %v1417
        %3018 = vmatpush1.msra.mxu0 %v1416
        %3019 = vmatprep.subr.mxu0 %v1421
        %3020 = vmatpush1.msra.mxu0 %v1420
        %3021 = vmatprep.subr.mxu0 %v1425
        %3022 = vmatpush1.msra.mxu0 %v1424
        %3023 = vmatprep.subr.mxu0 %v1429
        %3024 = vmatpush1.msra.mxu0 %v1428
        %3025 = vmatprep.subr.mxu0 %v1433
        %3026 = vmatpush1.msra.mxu0 %v1432
        %3027 = vmatprep.subr.mxu0 %v1437
        %3028 = vmatpush1.msra.mxu0 %v1436
        %3029 = vmatprep.subr.mxu0 %v1441
        %3030 = vmatpush1.msra.mxu0 %v1440
        %3031 = vmatprep.subr.mxu0 %v1445
        %3032 = vmatpush1.msra.mxu0 %v1444
        %3033 = vmatprep.subr.mxu0 %v1449
        %3034 = vmatpush1.msra.mxu0 %v1448
        %3035 = vmatprep.subr.mxu0 %v1453
        %3036 = vmatpush1.msra.mxu0 %v1452
        %3037 = vmatprep.subr.mxu0 %v1457
        %3038 = vmatpush1.msra.mxu0 %v1456
        %3039 = vmatprep.subr.mxu0 %v1461
        %3040 = vmatpush1.msra.mxu0 %v1460
        %3041 = vmatprep.subr.mxu0 %v1465
        %3042 = vmatpush1.msra.mxu0 %v1464
        %3043 = vmatprep.subr.mxu0 %v1469
        %3044 = vmatpush1.msra.mxu0 %v1468
        %3045 = vmatprep.subr.mxu0 %v1473
        %3046 = vmatpush1.msra.mxu0 %v1472
        %3047 = vmatprep.subr.mxu0 %v1477
        %3048 = vmatpush1.msra.mxu0 %v1476
        %3049 = vmatprep.subr.mxu0 %v1481
        %3050 = vmatpush1.msra.mxu0 %v1480
        %3051 = vmatprep.subr.mxu0 %v1485
        %3052 = vmatpush1.msra.mxu0 %v1484
        %3053 = vmatprep.mubr.f32.mxu0 %v2347
        %3054 = vmatmul.mubr.f32.gmra.mrb[0].mxu0 %v2339
        %v3055 = vpop.f32.mrb[0].mxu0
        %v3056 = vadd.f32 %v2985, %v3055
        %v3057 = vpop.f32.mrb[0].mxu0
        %v3058 = vadd.f32 %v2987, %v3057
        %3059 = vdwg.mxu0
        %3060 = vmatprep.subr.mxu0 %v1489
        %3061 = vmatpush1.msra.mxu0 %v1488
        %3062 = vmatprep.subr.mxu0 %v1493
        %3063 = vmatpush1.msra.mxu0 %v1492
        %3064 = vmatprep.subr.mxu0 %v1497
        %3065 = vmatpush1.msra.mxu0 %v1496
        %3066 = vmatprep.subr.mxu0 %v1501
        %3067 = vmatpush1.msra.mxu0 %v1500
        %3068 = vmatprep.subr.mxu0 %v1505
        %3069 = vmatpush1.msra.mxu0 %v1504
        %3070 = vmatprep.subr.mxu0 %v1509
        %3071 = vmatpush1.msra.mxu0 %v1508
        %3072 = vmatprep.subr.mxu0 %v1513
        %3073 = vmatpush1.msra.mxu0 %v1512
        %3074 = vmatprep.subr.mxu0 %v1517
        %3075 = vmatpush1.msra.mxu0 %v1516
        %3076 = vmatprep.subr.mxu0 %v1521
        %3077 = vmatpush1.msra.mxu0 %v1520
        %3078 = vmatprep.subr.mxu0 %v1525
        %3079 = vmatpush1.msra.mxu0 %v1524
        %3080 = vmatprep.subr.mxu0 %v1529
        %3081 = vmatpush1.msra.mxu0 %v1528
        %3082 = vmatprep.subr.mxu0 %v1533
        %3083 = vmatpush1.msra.mxu0 %v1532
        %3084 = vmatprep.subr.mxu0 %v1537
        %3085 = vmatpush1.msra.mxu0 %v1536
        %3086 = vmatprep.subr.mxu0 %v1541
        %3087 = vmatpush1.msra.mxu0 %v1540
        %3088 = vmatprep.subr.mxu0 %v1545
        %3089 = vmatpush1.msra.mxu0 %v1544
        %3090 = vmatprep.subr.mxu0 %v1549
        %3091 = vmatpush1.msra.mxu0 %v1548
        %3092 = vmatprep.subr.mxu0 %v1553
        %3093 = vmatpush1.msra.mxu0 %v1552
        %3094 = vmatprep.subr.mxu0 %v1557
        %3095 = vmatpush1.msra.mxu0 %v1556
        %3096 = vmatprep.subr.mxu0 %v1561
        %3097 = vmatpush1.msra.mxu0 %v1560
        %3098 = vmatprep.subr.mxu0 %v1565
        %3099 = vmatpush1.msra.mxu0 %v1564
        %3100 = vmatprep.subr.mxu0 %v1569
        %3101 = vmatpush1.msra.mxu0 %v1568
        %3102 = vmatprep.subr.mxu0 %v1573
        %3103 = vmatpush1.msra.mxu0 %v1572
        %3104 = vmatprep.subr.mxu0 %v1577
        %3105 = vmatpush1.msra.mxu0 %v1576
        %3106 = vmatprep.subr.mxu0 %v1581
        %3107 = vmatpush1.msra.mxu0 %v1580
        %3108 = vmatprep.subr.mxu0 %v1585
        %3109 = vmatpush1.msra.mxu0 %v1584
        %3110 = vmatprep.subr.mxu0 %v1589
        %3111 = vmatpush1.msra.mxu0 %v1588
        %3112 = vmatprep.subr.mxu0 %v1593
        %3113 = vmatpush1.msra.mxu0 %v1592
        %3114 = vmatprep.subr.mxu0 %v1597
        %3115 = vmatpush1.msra.mxu0 %v1596
        %3116 = vmatprep.subr.mxu0 %v1601
        %3117 = vmatpush1.msra.mxu0 %v1600
        %3118 = vmatprep.subr.mxu0 %v1605
        %3119 = vmatpush1.msra.mxu0 %v1604
        %3120 = vmatprep.subr.mxu0 %v1609
        %3121 = vmatpush1.msra.mxu0 %v1608
        %3122 = vmatprep.subr.mxu0 %v1613
        %3123 = vmatpush1.msra.mxu0 %v1612
        %3124 = vmatprep.mubr.f32.mxu0 %v2348
        %3125 = vmatmul.mubr.f32.gmra.mrb[0].mxu0 %v2346
        %v3126 = vpop.f32.mrb[0].mxu0
        %v3127 = vadd.f32 %v3056, %v3126
        %v3128 = vpop.f32.mrb[0].mxu0
        %v3129 = vadd.f32 %v3058, %v3128
        %3130 = vdwg.mxu0
        %3131 = vmatprep.subr.mxu0 %v1617
        %3132 = vmatpush1.msra.mxu0 %v1616
        %3133 = vmatprep.subr.mxu0 %v1621
        %3134 = vmatpush1.msra.mxu0 %v1620
        %3135 = vmatprep.subr.mxu0 %v1625
        %3136 = vmatpush1.msra.mxu0 %v1624
        %3137 = vmatprep.subr.mxu0 %v1629
        %3138 = vmatpush1.msra.mxu0 %v1628
        %3139 = vmatprep.subr.mxu0 %v1633
        %3140 = vmatpush1.msra.mxu0 %v1632
        %3141 = vmatprep.subr.mxu0 %v1637
        %3142 = vmatpush1.msra.mxu0 %v1636
        %3143 = vmatprep.subr.mxu0 %v1641
        %3144 = vmatpush1.msra.mxu0 %v1640
        %3145 = vmatprep.subr.mxu0 %v1645
        %3146 = vmatpush1.msra.mxu0 %v1644
        %3147 = vmatprep.subr.mxu0 %v1649
        %3148 = vmatpush1.msra.mxu0 %v1648
        %3149 = vmatprep.subr.mxu0 %v1653
        %3150 = vmatpush1.msra.mxu0 %v1652
        %3151 = vmatprep.subr.mxu0 %v1657
        %3152 = vmatpush1.msra.mxu0 %v1656
        %3153 = vmatprep.subr.mxu0 %v1661
        %3154 = vmatpush1.msra.mxu0 %v1660
        %3155 = vmatprep.subr.mxu0 %v1665
        %3156 = vmatpush1.msra.mxu0 %v1664
        %3157 = vmatprep.subr.mxu0 %v1669
        %3158 = vmatpush1.msra.mxu0 %v1668
        %3159 = vmatprep.subr.mxu0 %v1673
        %3160 = vmatpush1.msra.mxu0 %v1672
        %3161 = vmatprep.subr.mxu0 %v1677
        %3162 = vmatpush1.msra.mxu0 %v1676
        %3163 = vmatprep.subr.mxu0 %v1681
        %3164 = vmatpush1.msra.mxu0 %v1680
        %3165 = vmatprep.subr.mxu0 %v1685
        %3166 = vmatpush1.msra.mxu0 %v1684
        %3167 = vmatprep.subr.mxu0 %v1689
        %3168 = vmatpush1.msra.mxu0 %v1688
        %3169 = vmatprep.subr.mxu0 %v1693
        %3170 = vmatpush1.msra.mxu0 %v1692
        %3171 = vmatprep.subr.mxu0 %v1697
        %3172 = vmatpush1.msra.mxu0 %v1696
        %3173 = vmatprep.subr.mxu0 %v1701
        %3174 = vmatpush1.msra.mxu0 %v1700
        %3175 = vmatprep.subr.mxu0 %v1705
        %3176 = vmatpush1.msra.mxu0 %v1704
        %3177 = vmatprep.subr.mxu0 %v1709
        %3178 = vmatpush1.msra.mxu0 %v1708
        %3179 = vmatprep.subr.mxu0 %v1713
        %3180 = vmatpush1.msra.mxu0 %v1712
        %3181 = vmatprep.subr.mxu0 %v1717
        %3182 = vmatpush1.msra.mxu0 %v1716
        %3183 = vmatprep.subr.mxu0 %v1721
        %3184 = vmatpush1.msra.mxu0 %v1720
        %3185 = vmatprep.subr.mxu0 %v1725
        %3186 = vmatpush1.msra.mxu0 %v1724
        %3187 = vmatprep.subr.mxu0 %v1729
        %3188 = vmatpush1.msra.mxu0 %v1728
        %3189 = vmatprep.subr.mxu0 %v1733
        %3190 = vmatpush1.msra.mxu0 %v1732
        %3191 = vmatprep.subr.mxu0 %v1737
        %3192 = vmatpush1.msra.mxu0 %v1736
        %3193 = vmatprep.subr.mxu0 %v1741
        %3194 = vmatpush1.msra.mxu0 %v1740
        %3195 = vmatprep.mubr.f32.mxu0 %v2364
        %3196 = vmatmul.mubr.f32.gmra.mrb[0].mxu0 %v2356
        %v3197 = vpop.f32.mrb[0].mxu0
        %v3198 = vadd.f32 %v3127, %v3197
        %v3199 = vpop.f32.mrb[0].mxu0
        %v3200 = vadd.f32 %v3129, %v3199
        %3201 = vdwg.mxu0
        %3202 = vmatprep.subr.mxu0 %v1745
        %3203 = vmatpush1.msra.mxu0 %v1744
        %3204 = vmatprep.subr.mxu0 %v1749
        %3205 = vmatpush1.msra.mxu0 %v1748
        %3206 = vmatprep.subr.mxu0 %v1753
        %3207 = vmatpush1.msra.mxu0 %v1752
        %3208 = vmatprep.subr.mxu0 %v1757
        %3209 = vmatpush1.msra.mxu0 %v1756
        %3210 = vmatprep.subr.mxu0 %v1761
        %3211 = vmatpush1.msra.mxu0 %v1760
        %3212 = vmatprep.subr.mxu0 %v1765
        %3213 = vmatpush1.msra.mxu0 %v1764
        %3214 = vmatprep.subr.mxu0 %v1769
        %3215 = vmatpush1.msra.mxu0 %v1768
        %3216 = vmatprep.subr.mxu0 %v1773
        %3217 = vmatpush1.msra.mxu0 %v1772
        %3218 = vmatprep.subr.mxu0 %v1777
        %3219 = vmatpush1.msra.mxu0 %v1776
        %3220 = vmatprep.subr.mxu0 %v1781
        %3221 = vmatpush1.msra.mxu0 %v1780
        %3222 = vmatprep.subr.mxu0 %v1785
        %3223 = vmatpush1.msra.mxu0 %v1784
        %3224 = vmatprep.subr.mxu0 %v1789
        %3225 = vmatpush1.msra.mxu0 %v1788
        %3226 = vmatprep.subr.mxu0 %v1793
        %3227 = vmatpush1.msra.mxu0 %v1792
        %3228 = vmatprep.subr.mxu0 %v1797
        %3229 = vmatpush1.msra.mxu0 %v1796
        %3230 = vmatprep.subr.mxu0 %v1801
        %3231 = vmatpush1.msra.mxu0 %v1800
        %3232 = vmatprep.subr.mxu0 %v1805
        %3233 = vmatpush1.msra.mxu0 %v1804
        %3234 = vmatprep.subr.mxu0 %v1809
        %3235 = vmatpush1.msra.mxu0 %v1808
        %3236 = vmatprep.subr.mxu0 %v1813
        %3237 = vmatpush1.msra.mxu0 %v1812
        %3238 = vmatprep.subr.mxu0 %v1817
        %3239 = vmatpush1.msra.mxu0 %v1816
        %3240 = vmatprep.subr.mxu0 %v1821
        %3241 = vmatpush1.msra.mxu0 %v1820
        %3242 = vmatprep.subr.mxu0 %v1825
        %3243 = vmatpush1.msra.mxu0 %v1824
        %3244 = vmatprep.subr.mxu0 %v1829
        %3245 = vmatpush1.msra.mxu0 %v1828
        %3246 = vmatprep.subr.mxu0 %v1833
        %3247 = vmatpush1.msra.mxu0 %v1832
        %3248 = vmatprep.subr.mxu0 %v1837
        %3249 = vmatpush1.msra.mxu0 %v1836
        %3250 = vmatprep.subr.mxu0 %v1841
        %3251 = vmatpush1.msra.mxu0 %v1840
        %3252 = vmatprep.subr.mxu0 %v1845
        %3253 = vmatpush1.msra.mxu0 %v1844
        %3254 = vmatprep.subr.mxu0 %v1849
        %3255 = vmatpush1.msra.mxu0 %v1848
        %3256 = vmatprep.subr.mxu0 %v1853
        %3257 = vmatpush1.msra.mxu0 %v1852
        %3258 = vmatprep.subr.mxu0 %v1857
        %3259 = vmatpush1.msra.mxu0 %v1856
        %3260 = vmatprep.subr.mxu0 %v1861
        %3261 = vmatpush1.msra.mxu0 %v1860
        %3262 = vmatprep.subr.mxu0 %v1865
        %3263 = vmatpush1.msra.mxu0 %v1864
        %3264 = vmatprep.subr.mxu0 %v1869
        %3265 = vmatpush1.msra.mxu0 %v1868
        %3266 = vmatprep.mubr.f32.mxu0 %v2365
        %3267 = vmatmul.mubr.f32.gmra.mrb[0].mxu0 %v2363
        %v3268 = vpop.f32.mrb[0].mxu0
        %v3269 = vadd.f32 %v3198, %v3268
        %v3270 = vpop.f32.mrb[0].mxu0
        %v3271 = vadd.f32 %v3200, %v3270
        %3272 = vdwg.mxu0
        %3273 = vmatprep.subr.mxu0 %v1873
        %3274 = vmatpush1.msra.mxu0 %v1872
        %3275 = vmatprep.subr.mxu0 %v1877
        %3276 = vmatpush1.msra.mxu0 %v1876
        %3277 = vmatprep.subr.mxu0 %v1881
        %3278 = vmatpush1.msra.mxu0 %v1880
        %3279 = vmatprep.subr.mxu0 %v1885
        %3280 = vmatpush1.msra.mxu0 %v1884
        %3281 = vmatprep.subr.mxu0 %v1889
        %3282 = vmatpush1.msra.mxu0 %v1888
        %3283 = vmatprep.subr.mxu0 %v1893
        %3284 = vmatpush1.msra.mxu0 %v1892
        %3285 = vmatprep.subr.mxu0 %v1897
        %3286 = vmatpush1.msra.mxu0 %v1896
        %3287 = vmatprep.subr.mxu0 %v1901
        %3288 = vmatpush1.msra.mxu0 %v1900
        %3289 = vmatprep.subr.mxu0 %v1905
        %3290 = vmatpush1.msra.mxu0 %v1904
        %3291 = vmatprep.subr.mxu0 %v1909
        %3292 = vmatpush1.msra.mxu0 %v1908
        %3293 = vmatprep.subr.mxu0 %v1913
        %3294 = vmatpush1.msra.mxu0 %v1912
        %3295 = vmatprep.subr.mxu0 %v1917
        %3296 = vmatpush1.msra.mxu0 %v1916
        %3297 = vmatprep.subr.mxu0 %v1921
        %3298 = vmatpush1.msra.mxu0 %v1920
        %3299 = vmatprep.subr.mxu0 %v1925
        %3300 = vmatpush1.msra.mxu0 %v1924
        %3301 = vmatprep.subr.mxu0 %v1929
        %3302 = vmatpush1.msra.mxu0 %v1928
        %3303 = vmatprep.subr.mxu0 %v1933
        %3304 = vmatpush1.msra.mxu0 %v1932
        %3305 = vmatprep.subr.mxu0 %v1937
        %3306 = vmatpush1.msra.mxu0 %v1936
        %3307 = vmatprep.subr.mxu0 %v1941
        %3308 = vmatpush1.msra.mxu0 %v1940
        %3309 = vmatprep.subr.mxu0 %v1945
        %3310 = vmatpush1.msra.mxu0 %v1944
        %3311 = vmatprep.subr.mxu0 %v1949
        %3312 = vmatpush1.msra.mxu0 %v1948
        %3313 = vmatprep.subr.mxu0 %v1953
        %3314 = vmatpush1.msra.mxu0 %v1952
        %3315 = vmatprep.subr.mxu0 %v1957
        %3316 = vmatpush1.msra.mxu0 %v1956
        %3317 = vmatprep.subr.mxu0 %v1961
        %3318 = vmatpush1.msra.mxu0 %v1960
        %3319 = vmatprep.subr.mxu0 %v1965
        %3320 = vmatpush1.msra.mxu0 %v1964
        %3321 = vmatprep.subr.mxu0 %v1969
        %3322 = vmatpush1.msra.mxu0 %v1968
        %3323 = vmatprep.subr.mxu0 %v1973
        %3324 = vmatpush1.msra.mxu0 %v1972
        %3325 = vmatprep.subr.mxu0 %v1977
        %3326 = vmatpush1.msra.mxu0 %v1976
        %3327 = vmatprep.subr.mxu0 %v1981
        %3328 = vmatpush1.msra.mxu0 %v1980
        %3329 = vmatprep.subr.mxu0 %v1985
        %3330 = vmatpush1.msra.mxu0 %v1984
        %3331 = vmatprep.subr.mxu0 %v1989
        %3332 = vmatpush1.msra.mxu0 %v1988
        %3333 = vmatprep.subr.mxu0 %v1993
        %3334 = vmatpush1.msra.mxu0 %v1992
        %3335 = vmatprep.subr.mxu0 %v1997
        %3336 = vmatpush1.msra.mxu0 %v1996
        %3337 = vmatprep.mubr.f32.mxu0 %v2381
        %3338 = vmatmul.mubr.f32.gmra.mrb[0].mxu0 %v2373
        %v3339 = vpop.f32.mrb[0].mxu0
        %v3340 = vadd.f32 %v3269, %v3339
        %v3341 = vpop.f32.mrb[0].mxu0
        %v3342 = vadd.f32 %v3271, %v3341
        %3343 = vdwg.mxu0
        %3344 = vmatprep.subr.mxu0 %v2001
        %3345 = vmatpush1.msra.mxu0 %v2000
        %3346 = vmatprep.subr.mxu0 %v2005
        %3347 = vmatpush1.msra.mxu0 %v2004
        %3348 = vmatprep.subr.mxu0 %v2009
        %3349 = vmatpush1.msra.mxu0 %v2008
        %3350 = vmatprep.subr.mxu0 %v2013
        %3351 = vmatpush1.msra.mxu0 %v2012
        %3352 = vmatprep.subr.mxu0 %v2017
        %3353 = vmatpush1.msra.mxu0 %v2016
        %3354 = vmatprep.subr.mxu0 %v2021
        %3355 = vmatpush1.msra.mxu0 %v2020
        %3356 = vmatprep.subr.mxu0 %v2025
        %3357 = vmatpush1.msra.mxu0 %v2024
        %3358 = vmatprep.subr.mxu0 %v2029
        %3359 = vmatpush1.msra.mxu0 %v2028
        %3360 = vmatprep.subr.mxu0 %v2033
        %3361 = vmatpush1.msra.mxu0 %v2032
        %3362 = vmatprep.subr.mxu0 %v2037
        %3363 = vmatpush1.msra.mxu0 %v2036
        %3364 = vmatprep.subr.mxu0 %v2041
        %3365 = vmatpush1.msra.mxu0 %v2040
        %3366 = vmatprep.subr.mxu0 %v2045
        %3367 = vmatpush1.msra.mxu0 %v2044
        %3368 = vmatprep.subr.mxu0 %v2049
        %3369 = vmatpush1.msra.mxu0 %v2048
        %3370 = vmatprep.subr.mxu0 %v2053
        %3371 = vmatpush1.msra.mxu0 %v2052
        %3372 = vmatprep.subr.mxu0 %v2057
        %3373 = vmatpush1.msra.mxu0 %v2056
        %3374 = vmatprep.subr.mxu0 %v2061
        %3375 = vmatpush1.msra.mxu0 %v2060
        %3376 = vmatprep.subr.mxu0 %v2065
        %3377 = vmatpush1.msra.mxu0 %v2064
        %3378 = vmatprep.subr.mxu0 %v2069
        %3379 = vmatpush1.msra.mxu0 %v2068
        %3380 = vmatprep.subr.mxu0 %v2073
        %3381 = vmatpush1.msra.mxu0 %v2072
        %3382 = vmatprep.subr.mxu0 %v2077
        %3383 = vmatpush1.msra.mxu0 %v2076
        %3384 = vmatprep.subr.mxu0 %v2081
        %3385 = vmatpush1.msra.mxu0 %v2080
        %3386 = vmatprep.subr.mxu0 %v2085
        %3387 = vmatpush1.msra.mxu0 %v2084
        %3388 = vmatprep.subr.mxu0 %v2089
        %3389 = vmatpush1.msra.mxu0 %v2088
        %3390 = vmatprep.subr.mxu0 %v2093
        %3391 = vmatpush1.msra.mxu0 %v2092
        %3392 = vmatprep.subr.mxu0 %v2097
        %3393 = vmatpush1.msra.mxu0 %v2096
        %3394 = vmatprep.subr.mxu0 %v2101
        %3395 = vmatpush1.msra.mxu0 %v2100
        %3396 = vmatprep.subr.mxu0 %v2105
        %3397 = vmatpush1.msra.mxu0 %v2104
        %3398 = vmatprep.subr.mxu0 %v2109
        %3399 = vmatpush1.msra.mxu0 %v2108
        %3400 = vmatprep.subr.mxu0 %v2113
        %3401 = vmatpush1.msra.mxu0 %v2112
        %3402 = vmatprep.subr.mxu0 %v2117
        %3403 = vmatpush1.msra.mxu0 %v2116
        %3404 = vmatprep.subr.mxu0 %v2121
        %3405 = vmatpush1.msra.mxu0 %v2120
        %3406 = vmatprep.subr.mxu0 %v2125
        %3407 = vmatpush1.msra.mxu0 %v2124
        %3408 = vmatprep.mubr.f32.mxu0 %v2382
        %3409 = vmatmul.mubr.f32.gmra.mrb[0].mxu0 %v2380
        %v3410 = vpop.f32.mrb[0].mxu0
        %v3411 = vadd.f32 %v3340, %v3410
        %v3412 = vpop.f32.mrb[0].mxu0
        %v3413 = vadd.f32 %v3342, %v3412
        %3414 = vdwg.mxu0
        %3415 = vmatprep.subr.mxu0 %v2129
        %3416 = vmatpush1.msra.mxu0 %v2128
        %3417 = vmatprep.subr.mxu0 %v2133
        %3418 = vmatpush1.msra.mxu0 %v2132
        %3419 = vmatprep.subr.mxu0 %v2137
        %3420 = vmatpush1.msra.mxu0 %v2136
        %3421 = vmatprep.subr.mxu0 %v2141
        %3422 = vmatpush1.msra.mxu0 %v2140
        %3423 = vmatprep.subr.mxu0 %v2145
        %3424 = vmatpush1.msra.mxu0 %v2144
        %3425 = vmatprep.subr.mxu0 %v2149
        %3426 = vmatpush1.msra.mxu0 %v2148
        %3427 = vmatprep.subr.mxu0 %v2153
        %3428 = vmatpush1.msra.mxu0 %v2152
        %3429 = vmatprep.subr.mxu0 %v2157
        %3430 = vmatpush1.msra.mxu0 %v2156
        %3431 = vmatprep.subr.mxu0 %v2161
        %3432 = vmatpush1.msra.mxu0 %v2160
        %3433 = vmatprep.subr.mxu0 %v2165
        %3434 = vmatpush1.msra.mxu0 %v2164
        %3435 = vmatprep.subr.mxu0 %v2169
        %3436 = vmatpush1.msra.mxu0 %v2168
        %3437 = vmatprep.subr.mxu0 %v2173
        %3438 = vmatpush1.msra.mxu0 %v2172
        %3439 = vmatprep.subr.mxu0 %v2177
        %3440 = vmatpush1.msra.mxu0 %v2176
        %3441 = vmatprep.subr.mxu0 %v2181
        %3442 = vmatpush1.msra.mxu0 %v2180
        %3443 = vmatprep.subr.mxu0 %v2185
        %3444 = vmatpush1.msra.mxu0 %v2184
        %3445 = vmatprep.subr.mxu0 %v2189
        %3446 = vmatpush1.msra.mxu0 %v2188
        %3447 = vmatprep.subr.mxu0 %v2193
        %3448 = vmatpush1.msra.mxu0 %v2192
        %3449 = vmatprep.subr.mxu0 %v2197
        %3450 = vmatpush1.msra.mxu0 %v2196
        %3451 = vmatprep.subr.mxu0 %v2201
        %3452 = vmatpush1.msra.mxu0 %v2200
        %3453 = vmatprep.subr.mxu0 %v2205
        %3454 = vmatpush1.msra.mxu0 %v2204
        %3455 = vmatprep.subr.mxu0 %v2209
        %3456 = vmatpush1.msra.mxu0 %v2208
        %3457 = vmatprep.subr.mxu0 %v2213
        %3458 = vmatpush1.msra.mxu0 %v2212
        %3459 = vmatprep.subr.mxu0 %v2217
        %3460 = vmatpush1.msra.mxu0 %v2216
        %3461 = vmatprep.subr.mxu0 %v2221
        %3462 = vmatpush1.msra.mxu0 %v2220
        %3463 = vmatprep.subr.mxu0 %v2225
        %3464 = vmatpush1.msra.mxu0 %v2224
        %3465 = vmatprep.subr.mxu0 %v2229
        %3466 = vmatpush1.msra.mxu0 %v2228
        %3467 = vmatprep.subr.mxu0 %v2233
        %3468 = vmatpush1.msra.mxu0 %v2232
        %3469 = vmatprep.subr.mxu0 %v2237
        %3470 = vmatpush1.msra.mxu0 %v2236
        %3471 = vmatprep.subr.mxu0 %v2241
        %3472 = vmatpush1.msra.mxu0 %v2240
        %3473 = vmatprep.subr.mxu0 %v2245
        %3474 = vmatpush1.msra.mxu0 %v2244
        %3475 = vmatprep.subr.mxu0 %v2249
        %3476 = vmatpush1.msra.mxu0 %v2248
        %3477 = vmatprep.subr.mxu0 %v2253
        %3478 = vmatpush1.msra.mxu0 %v2252
        %3479 = vmatprep.mubr.f32.mxu0 %v2390
        %3480 = vmatmul.mubr.f32.gmra.mrb[0].mxu0 %v2389
        %v3481 = vpop.f32.mrb[0].mxu0
        %v3482 = vadd.f32 %v3411, %v3481
        %v3483 = vpop.f32.mrb[0].mxu0
        %v3484 = vadd.f32 %v3413, %v3483
        %3485 = vdwg.mxu0
        %3486 = vmatprep.subr.mxu0 %v339
        %3487 = vmatpush1.msra.mxu0 %v338
        %3488 = vmatprep.subr.mxu0 %v343
        %3489 = vmatpush1.msra.mxu0 %v342
        %3490 = vmatprep.subr.mxu0 %v347
        %3491 = vmatpush1.msra.mxu0 %v346
        %3492 = vmatprep.subr.mxu0 %v351
        %3493 = vmatpush1.msra.mxu0 %v350
        %3494 = vmatprep.subr.mxu0 %v355
        %3495 = vmatpush1.msra.mxu0 %v354
        %3496 = vmatprep.subr.mxu0 %v359
        %3497 = vmatpush1.msra.mxu0 %v358
        %3498 = vmatprep.subr.mxu0 %v363
        %3499 = vmatpush1.msra.mxu0 %v362
        %3500 = vmatprep.subr.mxu0 %v367
        %3501 = vmatpush1.msra.mxu0 %v366
        %3502 = vmatprep.subr.mxu0 %v371
        %3503 = vmatpush1.msra.mxu0 %v370
        %3504 = vmatprep.subr.mxu0 %v375
        %3505 = vmatpush1.msra.mxu0 %v374
        %3506 = vmatprep.subr.mxu0 %v379
        %3507 = vmatpush1.msra.mxu0 %v378
        %3508 = vmatprep.subr.mxu0 %v383
        %3509 = vmatpush1.msra.mxu0 %v382
        %3510 = vmatprep.subr.mxu0 %v387
        %3511 = vmatpush1.msra.mxu0 %v386
        %3512 = vmatprep.subr.mxu0 %v391
        %3513 = vmatpush1.msra.mxu0 %v390
        %3514 = vmatprep.subr.mxu0 %v395
        %3515 = vmatpush1.msra.mxu0 %v394
        %3516 = vmatprep.subr.mxu0 %v399
        %3517 = vmatpush1.msra.mxu0 %v398
        %3518 = vmatprep.subr.mxu0 %v403
        %3519 = vmatpush1.msra.mxu0 %v402
        %3520 = vmatprep.subr.mxu0 %v407
        %3521 = vmatpush1.msra.mxu0 %v406
        %3522 = vmatprep.subr.mxu0 %v411
        %3523 = vmatpush1.msra.mxu0 %v410
        %3524 = vmatprep.subr.mxu0 %v415
        %3525 = vmatpush1.msra.mxu0 %v414
        %3526 = vmatprep.subr.mxu0 %v419
        %3527 = vmatpush1.msra.mxu0 %v418
        %3528 = vmatprep.subr.mxu0 %v423
        %3529 = vmatpush1.msra.mxu0 %v422
        %3530 = vmatprep.subr.mxu0 %v427
        %3531 = vmatpush1.msra.mxu0 %v426
        %3532 = vmatprep.subr.mxu0 %v431
        %3533 = vmatpush1.msra.mxu0 %v430
        %3534 = vmatprep.subr.mxu0 %v435
        %3535 = vmatpush1.msra.mxu0 %v434
        %3536 = vmatprep.subr.mxu0 %v439
        %3537 = vmatpush1.msra.mxu0 %v438
        %3538 = vmatprep.subr.mxu0 %v443
        %3539 = vmatpush1.msra.mxu0 %v442
        %3540 = vmatprep.subr.mxu0 %v447
        %3541 = vmatpush1.msra.mxu0 %v446
        %3542 = vmatprep.subr.mxu0 %v451
        %3543 = vmatpush1.msra.mxu0 %v450
        %3544 = vmatprep.subr.mxu0 %v455
        %3545 = vmatpush1.msra.mxu0 %v454
        %3546 = vmatprep.subr.mxu0 %v459
        %3547 = vmatpush1.msra.mxu0 %v458
        %3548 = vmatprep.subr.mxu0 %v463
        %3549 = vmatpush1.msra.mxu0 %v462
        %3550 = vmatprep.mubr.f32.mxu0 %v2279
        %3551 = vmatmul.mubr.f32.gmra.mrb[0].mxu0 %v2271
        %v3552 = vpop.f32.mrb[0].mxu0
        %v3553 = vadd.f32 0.0, %v3552
        %v3554 = vpop.f32.mrb[0].mxu0
        %v3555 = vadd.f32 0.0, %v3554
        %3556 = vdwg.mxu0
        %3557 = vmatprep.subr.mxu0 %v467
        %3558 = vmatpush1.msra.mxu0 %v466
        %3559 = vmatprep.subr.mxu0 %v471
        %3560 = vmatpush1.msra.mxu0 %v470
        %3561 = vmatprep.subr.mxu0 %v475
        %3562 = vmatpush1.msra.mxu0 %v474
        %3563 = vmatprep.subr.mxu0 %v479
        %3564 = vmatpush1.msra.mxu0 %v478
        %3565 = vmatprep.subr.mxu0 %v483
        %3566 = vmatpush1.msra.mxu0 %v482
        %3567 = vmatprep.subr.mxu0 %v487
        %3568 = vmatpush1.msra.mxu0 %v486
        %3569 = vmatprep.subr.mxu0 %v491
        %3570 = vmatpush1.msra.mxu0 %v490
        %3571 = vmatprep.subr.mxu0 %v495
        %3572 = vmatpush1.msra.mxu0 %v494
        %3573 = vmatprep.subr.mxu0 %v499
        %3574 = vmatpush1.msra.mxu0 %v498
        %3575 = vmatprep.subr.mxu0 %v503
        %3576 = vmatpush1.msra.mxu0 %v502
        %3577 = vmatprep.subr.mxu0 %v507
        %3578 = vmatpush1.msra.mxu0 %v506
        %3579 = vmatprep.subr.mxu0 %v511
        %3580 = vmatpush1.msra.mxu0 %v510
        %3581 = vmatprep.subr.mxu0 %v515
        %3582 = vmatpush1.msra.mxu0 %v514
        %3583 = vmatprep.subr.mxu0 %v519
        %3584 = vmatpush1.msra.mxu0 %v518
        %3585 = vmatprep.subr.mxu0 %v523
        %3586 = vmatpush1.msra.mxu0 %v522
        %3587 = vmatprep.subr.mxu0 %v527
        %3588 = vmatpush1.msra.mxu0 %v526
        %3589 = vmatprep.subr.mxu0 %v531
        %3590 = vmatpush1.msra.mxu0 %v530
        %3591 = vmatprep.subr.mxu0 %v535
        %3592 = vmatpush1.msra.mxu0 %v534
        %3593 = vmatprep.subr.mxu0 %v539
        %3594 = vmatpush1.msra.mxu0 %v538
        %3595 = vmatprep.subr.mxu0 %v543
        %3596 = vmatpush1.msra.mxu0 %v542
        %3597 = vmatprep.subr.mxu0 %v547
        %3598 = vmatpush1.msra.mxu0 %v546
        %3599 = vmatprep.subr.mxu0 %v551
        %3600 = vmatpush1.msra.mxu0 %v550
        %3601 = vmatprep.subr.mxu0 %v555
        %3602 = vmatpush1.msra.mxu0 %v554
        %3603 = vmatprep.subr.mxu0 %v559
        %3604 = vmatpush1.msra.mxu0 %v558
        %3605 = vmatprep.subr.mxu0 %v563
        %3606 = vmatpush1.msra.mxu0 %v562
        %3607 = vmatprep.subr.mxu0 %v567
        %3608 = vmatpush1.msra.mxu0 %v566
        %3609 = vmatprep.subr.mxu0 %v571
        %3610 = vmatpush1.msra.mxu0 %v570
        %3611 = vmatprep.subr.mxu0 %v575
        %3612 = vmatpush1.msra.mxu0 %v574
        %3613 = vmatprep.subr.mxu0 %v579
        %3614 = vmatpush1.msra.mxu0 %v578
        %3615 = vmatprep.subr.mxu0 %v583
        %3616 = vmatpush1.msra.mxu0 %v582
        %3617 = vmatprep.subr.mxu0 %v587
        %3618 = vmatpush1.msra.mxu0 %v586
        %3619 = vmatprep.subr.mxu0 %v591
        %3620 = vmatpush1.msra.mxu0 %v590
        %3621 = vmatprep.mubr.f32.mxu0 %v2280
        %3622 = vmatmul.mubr.f32.gmra.mrb[0].mxu0 %v2278
        %v3623 = vpop.f32.mrb[0].mxu0
        %v3624 = vadd.f32 %v3553, %v3623
        %v3625 = vpop.f32.mrb[0].mxu0
        %v3626 = vadd.f32 %v3555, %v3625
        %3627 = vdwg.mxu0
        %3628 = vmatprep.subr.mxu0 %v595
        %3629 = vmatpush1.msra.mxu0 %v594
        %3630 = vmatprep.subr.mxu0 %v599
        %3631 = vmatpush1.msra.mxu0 %v598
        %3632 = vmatprep.subr.mxu0 %v603
        %3633 = vmatpush1.msra.mxu0 %v602
        %3634 = vmatprep.subr.mxu0 %v607
        %3635 = vmatpush1.msra.mxu0 %v606
        %3636 = vmatprep.subr.mxu0 %v611
        %3637 = vmatpush1.msra.mxu0 %v610
        %3638 = vmatprep.subr.mxu0 %v615
        %3639 = vmatpush1.msra.mxu0 %v614
        %3640 = vmatprep.subr.mxu0 %v619
        %3641 = vmatpush1.msra.mxu0 %v618
        %3642 = vmatprep.subr.mxu0 %v623
        %3643 = vmatpush1.msra.mxu0 %v622
        %3644 = vmatprep.subr.mxu0 %v627
        %3645 = vmatpush1.msra.mxu0 %v626
        %3646 = vmatprep.subr.mxu0 %v631
        %3647 = vmatpush1.msra.mxu0 %v630
        %3648 = vmatprep.subr.mxu0 %v635
        %3649 = vmatpush1.msra.mxu0 %v634
        %3650 = vmatprep.subr.mxu0 %v639
        %3651 = vmatpush1.msra.mxu0 %v638
        %3652 = vmatprep.subr.mxu0 %v643
        %3653 = vmatpush1.msra.mxu0 %v642
        %3654 = vmatprep.subr.mxu0 %v647
        %3655 = vmatpush1.msra.mxu0 %v646
        %3656 = vmatprep.subr.mxu0 %v651
        %3657 = vmatpush1.msra.mxu0 %v650
        %3658 = vmatprep.subr.mxu0 %v655
        %3659 = vmatpush1.msra.mxu0 %v654
        %3660 = vmatprep.subr.mxu0 %v659
        %3661 = vmatpush1.msra.mxu0 %v658
        %3662 = vmatprep.subr.mxu0 %v663
        %3663 = vmatpush1.msra.mxu0 %v662
        %3664 = vmatprep.subr.mxu0 %v667
        %3665 = vmatpush1.msra.mxu0 %v666
        %3666 = vmatprep.subr.mxu0 %v671
        %3667 = vmatpush1.msra.mxu0 %v670
        %3668 = vmatprep.subr.mxu0 %v675
        %3669 = vmatpush1.msra.mxu0 %v674
        %3670 = vmatprep.subr.mxu0 %v679
        %3671 = vmatpush1.msra.mxu0 %v678
        %3672 = vmatprep.subr.mxu0 %v683
        %3673 = vmatpush1.msra.mxu0 %v682
        %3674 = vmatprep.subr.mxu0 %v687
        %3675 = vmatpush1.msra.mxu0 %v686
        %3676 = vmatprep.subr.mxu0 %v691
        %3677 = vmatpush1.msra.mxu0 %v690
        %3678 = vmatprep.subr.mxu0 %v695
        %3679 = vmatpush1.msra.mxu0 %v694
        %3680 = vmatprep.subr.mxu0 %v699
        %3681 = vmatpush1.msra.mxu0 %v698
        %3682 = vmatprep.subr.mxu0 %v703
        %3683 = vmatpush1.msra.mxu0 %v702
        %3684 = vmatprep.subr.mxu0 %v707
        %3685 = vmatpush1.msra.mxu0 %v706
        %3686 = vmatprep.subr.mxu0 %v711
        %3687 = vmatpush1.msra.mxu0 %v710
        %3688 = vmatprep.subr.mxu0 %v715
        %3689 = vmatpush1.msra.mxu0 %v714
        %3690 = vmatprep.subr.mxu0 %v719
        %3691 = vmatpush1.msra.mxu0 %v718
        %3692 = vmatprep.mubr.f32.mxu0 %v2296
        %3693 = vmatmul.mubr.f32.gmra.mrb[0].mxu0 %v2288
        %v3694 = vpop.f32.mrb[0].mxu0
        %v3695 = vadd.f32 %v3624, %v3694
        %v3696 = vpop.f32.mrb[0].mxu0
        %v3697 = vadd.f32 %v3626, %v3696
        %3698 = vdwg.mxu0
        %3699 = vmatprep.subr.mxu0 %v723
        %3700 = vmatpush1.msra.mxu0 %v722
        %3701 = vmatprep.subr.mxu0 %v727
        %3702 = vmatpush1.msra.mxu0 %v726
        %3703 = vmatprep.subr.mxu0 %v731
        %3704 = vmatpush1.msra.mxu0 %v730
        %3705 = vmatprep.subr.mxu0 %v735
        %3706 = vmatpush1.msra.mxu0 %v734
        %3707 = vmatprep.subr.mxu0 %v739
        %3708 = vmatpush1.msra.mxu0 %v738
        %3709 = vmatprep.subr.mxu0 %v743
        %3710 = vmatpush1.msra.mxu0 %v742
        %3711 = vmatprep.subr.mxu0 %v747
        %3712 = vmatpush1.msra.mxu0 %v746
        %3713 = vmatprep.subr.mxu0 %v751
        %3714 = vmatpush1.msra.mxu0 %v750
        %3715 = vmatprep.subr.mxu0 %v755
        %3716 = vmatpush1.msra.mxu0 %v754
        %3717 = vmatprep.subr.mxu0 %v759
        %3718 = vmatpush1.msra.mxu0 %v758
        %3719 = vmatprep.subr.mxu0 %v763
        %3720 = vmatpush1.msra.mxu0 %v762
        %3721 = vmatprep.subr.mxu0 %v767
        %3722 = vmatpush1.msra.mxu0 %v766
        %3723 = vmatprep.subr.mxu0 %v771
        %3724 = vmatpush1.msra.mxu0 %v770
        %3725 = vmatprep.subr.mxu0 %v775
        %3726 = vmatpush1.msra.mxu0 %v774
        %3727 = vmatprep.subr.mxu0 %v779
        %3728 = vmatpush1.msra.mxu0 %v778
        %3729 = vmatprep.subr.mxu0 %v783
        %3730 = vmatpush1.msra.mxu0 %v782
        %3731 = vmatprep.subr.mxu0 %v787
        %3732 = vmatpush1.msra.mxu0 %v786
        %3733 = vmatprep.subr.mxu0 %v791
        %3734 = vmatpush1.msra.mxu0 %v790
        %3735 = vmatprep.subr.mxu0 %v795
        %3736 = vmatpush1.msra.mxu0 %v794
        %3737 = vmatprep.subr.mxu0 %v799
        %3738 = vmatpush1.msra.mxu0 %v798
        %3739 = vmatprep.subr.mxu0 %v803
        %3740 = vmatpush1.msra.mxu0 %v802
        %3741 = vmatprep.subr.mxu0 %v807
        %3742 = vmatpush1.msra.mxu0 %v806
        %3743 = vmatprep.subr.mxu0 %v811
        %3744 = vmatpush1.msra.mxu0 %v810
        %3745 = vmatprep.subr.mxu0 %v815
        %3746 = vmatpush1.msra.mxu0 %v814
        %3747 = vmatprep.subr.mxu0 %v819
        %3748 = vmatpush1.msra.mxu0 %v818
        %3749 = vmatprep.subr.mxu0 %v823
        %3750 = vmatpush1.msra.mxu0 %v822
        %3751 = vmatprep.subr.mxu0 %v827
        %3752 = vmatpush1.msra.mxu0 %v826
        %3753 = vmatprep.subr.mxu0 %v831
        %3754 = vmatpush1.msra.mxu0 %v830
        %3755 = vmatprep.subr.mxu0 %v835
        %3756 = vmatpush1.msra.mxu0 %v834
        %3757 = vmatprep.subr.mxu0 %v839
        %3758 = vmatpush1.msra.mxu0 %v838
        %3759 = vmatprep.subr.mxu0 %v843
        %3760 = vmatpush1.msra.mxu0 %v842
        %3761 = vmatprep.subr.mxu0 %v847
        %3762 = vmatpush1.msra.mxu0 %v846
        %3763 = vmatprep.mubr.f32.mxu0 %v2297
        %3764 = vmatmul.mubr.f32.gmra.mrb[0].mxu0 %v2295
        %v3765 = vpop.f32.mrb[0].mxu0
        %v3766 = vadd.f32 %v3695, %v3765
        %v3767 = vpop.f32.mrb[0].mxu0
        %v3768 = vadd.f32 %v3697, %v3767
        %3769 = vdwg.mxu0
        %3770 = vmatprep.subr.mxu0 %v851
        %3771 = vmatpush1.msra.mxu0 %v850
        %3772 = vmatprep.subr.mxu0 %v855
        %3773 = vmatpush1.msra.mxu0 %v854
        %3774 = vmatprep.subr.mxu0 %v859
        %3775 = vmatpush1.msra.mxu0 %v858
        %3776 = vmatprep.subr.mxu0 %v863
        %3777 = vmatpush1.msra.mxu0 %v862
        %3778 = vmatprep.subr.mxu0 %v867
        %3779 = vmatpush1.msra.mxu0 %v866
        %3780 = vmatprep.subr.mxu0 %v871
        %3781 = vmatpush1.msra.mxu0 %v870
        %3782 = vmatprep.subr.mxu0 %v875
        %3783 = vmatpush1.msra.mxu0 %v874
        %3784 = vmatprep.subr.mxu0 %v879
        %3785 = vmatpush1.msra.mxu0 %v878
        %3786 = vmatprep.subr.mxu0 %v883
        %3787 = vmatpush1.msra.mxu0 %v882
        %3788 = vmatprep.subr.mxu0 %v887
        %3789 = vmatpush1.msra.mxu0 %v886
        %3790 = vmatprep.subr.mxu0 %v891
        %3791 = vmatpush1.msra.mxu0 %v890
        %3792 = vmatprep.subr.mxu0 %v895
        %3793 = vmatpush1.msra.mxu0 %v894
        %3794 = vmatprep.subr.mxu0 %v899
        %3795 = vmatpush1.msra.mxu0 %v898
        %3796 = vmatprep.subr.mxu0 %v903
        %3797 = vmatpush1.msra.mxu0 %v902
        %3798 = vmatprep.subr.mxu0 %v907
        %3799 = vmatpush1.msra.mxu0 %v906
        %3800 = vmatprep.subr.mxu0 %v911
        %3801 = vmatpush1.msra.mxu0 %v910
        %3802 = vmatprep.subr.mxu0 %v915
        %3803 = vmatpush1.msra.mxu0 %v914
        %3804 = vmatprep.subr.mxu0 %v919
        %3805 = vmatpush1.msra.mxu0 %v918
        %3806 = vmatprep.subr.mxu0 %v923
        %3807 = vmatpush1.msra.mxu0 %v922
        %3808 = vmatprep.subr.mxu0 %v927
        %3809 = vmatpush1.msra.mxu0 %v926
        %3810 = vmatprep.subr.mxu0 %v931
        %3811 = vmatpush1.msra.mxu0 %v930
        %3812 = vmatprep.subr.mxu0 %v935
        %3813 = vmatpush1.msra.mxu0 %v934
        %3814 = vmatprep.subr.mxu0 %v939
        %3815 = vmatpush1.msra.mxu0 %v938
        %3816 = vmatprep.subr.mxu0 %v943
        %3817 = vmatpush1.msra.mxu0 %v942
        %3818 = vmatprep.subr.mxu0 %v947
        %3819 = vmatpush1.msra.mxu0 %v946
        %3820 = vmatprep.subr.mxu0 %v951
        %3821 = vmatpush1.msra.mxu0 %v950
        %3822 = vmatprep.subr.mxu0 %v955
        %3823 = vmatpush1.msra.mxu0 %v954
        %3824 = vmatprep.subr.mxu0 %v959
        %3825 = vmatpush1.msra.mxu0 %v958
        %3826 = vmatprep.subr.mxu0 %v963
        %3827 = vmatpush1.msra.mxu0 %v962
        %3828 = vmatprep.subr.mxu0 %v967
        %3829 = vmatpush1.msra.mxu0 %v966
        %3830 = vmatprep.subr.mxu0 %v971
        %3831 = vmatpush1.msra.mxu0 %v970
        %3832 = vmatprep.subr.mxu0 %v975
        %3833 = vmatpush1.msra.mxu0 %v974
        %3834 = vmatprep.mubr.f32.mxu0 %v2313
        %3835 = vmatmul.mubr.f32.gmra.mrb[0].mxu0 %v2305
        %v3836 = vpop.f32.mrb[0].mxu0
        %v3837 = vadd.f32 %v3766, %v3836
        %v3838 = vpop.f32.mrb[0].mxu0
        %v3839 = vadd.f32 %v3768, %v3838
        %3840 = vdwg.mxu0
        %3841 = vmatprep.subr.mxu0 %v979
        %3842 = vmatpush1.msra.mxu0 %v978
        %3843 = vmatprep.subr.mxu0 %v983
        %3844 = vmatpush1.msra.mxu0 %v982
        %3845 = vmatprep.subr.mxu0 %v987
        %3846 = vmatpush1.msra.mxu0 %v986
        %3847 = vmatprep.subr.mxu0 %v991
        %3848 = vmatpush1.msra.mxu0 %v990
        %3849 = vmatprep.subr.mxu0 %v995
        %3850 = vmatpush1.msra.mxu0 %v994
        %3851 = vmatprep.subr.mxu0 %v999
        %3852 = vmatpush1.msra.mxu0 %v998
        %3853 = vmatprep.subr.mxu0 %v1003
        %3854 = vmatpush1.msra.mxu0 %v1002
        %3855 = vmatprep.subr.mxu0 %v1007
        %3856 = vmatpush1.msra.mxu0 %v1006
        %3857 = vmatprep.subr.mxu0 %v1011
        %3858 = vmatpush1.msra.mxu0 %v1010
        %3859 = vmatprep.subr.mxu0 %v1015
        %3860 = vmatpush1.msra.mxu0 %v1014
        %3861 = vmatprep.subr.mxu0 %v1019
        %3862 = vmatpush1.msra.mxu0 %v1018
        %3863 = vmatprep.subr.mxu0 %v1023
        %3864 = vmatpush1.msra.mxu0 %v1022
        %3865 = vmatprep.subr.mxu0 %v1027
        %3866 = vmatpush1.msra.mxu0 %v1026
        %3867 = vmatprep.subr.mxu0 %v1031
        %3868 = vmatpush1.msra.mxu0 %v1030
        %3869 = vmatprep.subr.mxu0 %v1035
        %3870 = vmatpush1.msra.mxu0 %v1034
        %3871 = vmatprep.subr.mxu0 %v1039
        %3872 = vmatpush1.msra.mxu0 %v1038
        %3873 = vmatprep.subr.mxu0 %v1043
        %3874 = vmatpush1.msra.mxu0 %v1042
        %3875 = vmatprep.subr.mxu0 %v1047
        %3876 = vmatpush1.msra.mxu0 %v1046
        %3877 = vmatprep.subr.mxu0 %v1051
        %3878 = vmatpush1.msra.mxu0 %v1050
        %3879 = vmatprep.subr.mxu0 %v1055
        %3880 = vmatpush1.msra.mxu0 %v1054
        %3881 = vmatprep.subr.mxu0 %v1059
        %3882 = vmatpush1.msra.mxu0 %v1058
        %3883 = vmatprep.subr.mxu0 %v1063
        %3884 = vmatpush1.msra.mxu0 %v1062
        %3885 = vmatprep.subr.mxu0 %v1067
        %3886 = vmatpush1.msra.mxu0 %v1066
        %3887 = vmatprep.subr.mxu0 %v1071
        %3888 = vmatpush1.msra.mxu0 %v1070
        %3889 = vmatprep.subr.mxu0 %v1075
        %3890 = vmatpush1.msra.mxu0 %v1074
        %3891 = vmatprep.subr.mxu0 %v1079
        %3892 = vmatpush1.msra.mxu0 %v1078
        %3893 = vmatprep.subr.mxu0 %v1083
        %3894 = vmatpush1.msra.mxu0 %v1082
        %3895 = vmatprep.subr.mxu0 %v1087
        %3896 = vmatpush1.msra.mxu0 %v1086
        %3897 = vmatprep.subr.mxu0 %v1091
        %3898 = vmatpush1.msra.mxu0 %v1090
        %3899 = vmatprep.subr.mxu0 %v1095
        %3900 = vmatpush1.msra.mxu0 %v1094
        %3901 = vmatprep.subr.mxu0 %v1099
        %3902 = vmatpush1.msra.mxu0 %v1098
        %3903 = vmatprep.subr.mxu0 %v1103
        %3904 = vmatpush1.msra.mxu0 %v1102
        %3905 = vmatprep.mubr.f32.mxu0 %v2314
        %3906 = vmatmul.mubr.f32.gmra.mrb[0].mxu0 %v2312
        %v3907 = vpop.f32.mrb[0].mxu0
        %v3908 = vadd.f32 %v3837, %v3907
        %v3909 = vpop.f32.mrb[0].mxu0
        %v3910 = vadd.f32 %v3839, %v3909
        %3911 = vdwg.mxu0
        %3912 = vmatprep.subr.mxu0 %v1107
        %3913 = vmatpush1.msra.mxu0 %v1106
        %3914 = vmatprep.subr.mxu0 %v1111
        %3915 = vmatpush1.msra.mxu0 %v1110
        %3916 = vmatprep.subr.mxu0 %v1115
        %3917 = vmatpush1.msra.mxu0 %v1114
        %3918 = vmatprep.subr.mxu0 %v1119
        %3919 = vmatpush1.msra.mxu0 %v1118
        %3920 = vmatprep.subr.mxu0 %v1123
        %3921 = vmatpush1.msra.mxu0 %v1122
        %3922 = vmatprep.subr.mxu0 %v1127
        %3923 = vmatpush1.msra.mxu0 %v1126
        %3924 = vmatprep.subr.mxu0 %v1131
        %3925 = vmatpush1.msra.mxu0 %v1130
        %3926 = vmatprep.subr.mxu0 %v1135
        %3927 = vmatpush1.msra.mxu0 %v1134
        %3928 = vmatprep.subr.mxu0 %v1139
        %3929 = vmatpush1.msra.mxu0 %v1138
        %3930 = vmatprep.subr.mxu0 %v1143
        %3931 = vmatpush1.msra.mxu0 %v1142
        %3932 = vmatprep.subr.mxu0 %v1147
        %3933 = vmatpush1.msra.mxu0 %v1146
        %3934 = vmatprep.subr.mxu0 %v1151
        %3935 = vmatpush1.msra.mxu0 %v1150
        %3936 = vmatprep.subr.mxu0 %v1155
        %3937 = vmatpush1.msra.mxu0 %v1154
        %3938 = vmatprep.subr.mxu0 %v1159
        %3939 = vmatpush1.msra.mxu0 %v1158
        %3940 = vmatprep.subr.mxu0 %v1163
        %3941 = vmatpush1.msra.mxu0 %v1162
        %3942 = vmatprep.subr.mxu0 %v1167
        %3943 = vmatpush1.msra.mxu0 %v1166
        %3944 = vmatprep.subr.mxu0 %v1171
        %3945 = vmatpush1.msra.mxu0 %v1170
        %3946 = vmatprep.subr.mxu0 %v1175
        %3947 = vmatpush1.msra.mxu0 %v1174
        %3948 = vmatprep.subr.mxu0 %v1179
        %3949 = vmatpush1.msra.mxu0 %v1178
        %3950 = vmatprep.subr.mxu0 %v1183
        %3951 = vmatpush1.msra.mxu0 %v1182
        %3952 = vmatprep.subr.mxu0 %v1187
        %3953 = vmatpush1.msra.mxu0 %v1186
        %3954 = vmatprep.subr.mxu0 %v1191
        %3955 = vmatpush1.msra.mxu0 %v1190
        %3956 = vmatprep.subr.mxu0 %v1195
        %3957 = vmatpush1.msra.mxu0 %v1194
        %3958 = vmatprep.subr.mxu0 %v1199
        %3959 = vmatpush1.msra.mxu0 %v1198
        %3960 = vmatprep.subr.mxu0 %v1203
        %3961 = vmatpush1.msra.mxu0 %v1202
        %3962 = vmatprep.subr.mxu0 %v1207
        %3963 = vmatpush1.msra.mxu0 %v1206
        %3964 = vmatprep.subr.mxu0 %v1211
        %3965 = vmatpush1.msra.mxu0 %v1210
        %3966 = vmatprep.subr.mxu0 %v1215
        %3967 = vmatpush1.msra.mxu0 %v1214
        %3968 = vmatprep.subr.mxu0 %v1219
        %3969 = vmatpush1.msra.mxu0 %v1218
        %3970 = vmatprep.subr.mxu0 %v1223
        %3971 = vmatpush1.msra.mxu0 %v1222
        %3972 = vmatprep.subr.mxu0 %v1227
        %3973 = vmatpush1.msra.mxu0 %v1226
        %3974 = vmatprep.subr.mxu0 %v1231
        %3975 = vmatpush1.msra.mxu0 %v1230
        %3976 = vmatprep.mubr.f32.mxu0 %v2330
        %3977 = vmatmul.mubr.f32.gmra.mrb[0].mxu0 %v2322
        %v3978 = vpop.f32.mrb[0].mxu0
        %v3979 = vadd.f32 %v3908, %v3978
        %v3980 = vpop.f32.mrb[0].mxu0
        %v3981 = vadd.f32 %v3910, %v3980
        %3982 = vdwg.mxu0
        %3983 = vmatprep.subr.mxu0 %v1235
        %3984 = vmatpush1.msra.mxu0 %v1234
        %3985 = vmatprep.subr.mxu0 %v1239
        %3986 = vmatpush1.msra.mxu0 %v1238
        %3987 = vmatprep.subr.mxu0 %v1243
        %3988 = vmatpush1.msra.mxu0 %v1242
        %3989 = vmatprep.subr.mxu0 %v1247
        %3990 = vmatpush1.msra.mxu0 %v1246
        %3991 = vmatprep.subr.mxu0 %v1251
        %3992 = vmatpush1.msra.mxu0 %v1250
        %3993 = vmatprep.subr.mxu0 %v1255
        %3994 = vmatpush1.msra.mxu0 %v1254
        %3995 = vmatprep.subr.mxu0 %v1259
        %3996 = vmatpush1.msra.mxu0 %v1258
        %3997 = vmatprep.subr.mxu0 %v1263
        %3998 = vmatpush1.msra.mxu0 %v1262
        %3999 = vmatprep.subr.mxu0 %v1267
        %4000 = vmatpush1.msra.mxu0 %v1266
        %4001 = vmatprep.subr.mxu0 %v1271
        %4002 = vmatpush1.msra.mxu0 %v1270
        %4003 = vmatprep.subr.mxu0 %v1275
        %4004 = vmatpush1.msra.mxu0 %v1274
        %4005 = vmatprep.subr.mxu0 %v1279
        %4006 = vmatpush1.msra.mxu0 %v1278
        %4007 = vmatprep.subr.mxu0 %v1283
        %4008 = vmatpush1.msra.mxu0 %v1282
        %4009 = vmatprep.subr.mxu0 %v1287
        %4010 = vmatpush1.msra.mxu0 %v1286
        %4011 = vmatprep.subr.mxu0 %v1291
        %4012 = vmatpush1.msra.mxu0 %v1290
        %4013 = vmatprep.subr.mxu0 %v1295
        %4014 = vmatpush1.msra.mxu0 %v1294
        %4015 = vmatprep.subr.mxu0 %v1299
        %4016 = vmatpush1.msra.mxu0 %v1298
        %4017 = vmatprep.subr.mxu0 %v1303
        %4018 = vmatpush1.msra.mxu0 %v1302
        %4019 = vmatprep.subr.mxu0 %v1307
        %4020 = vmatpush1.msra.mxu0 %v1306
        %4021 = vmatprep.subr.mxu0 %v1311
        %4022 = vmatpush1.msra.mxu0 %v1310
        %4023 = vmatprep.subr.mxu0 %v1315
        %4024 = vmatpush1.msra.mxu0 %v1314
        %4025 = vmatprep.subr.mxu0 %v1319
        %4026 = vmatpush1.msra.mxu0 %v1318
        %4027 = vmatprep.subr.mxu0 %v1323
        %4028 = vmatpush1.msra.mxu0 %v1322
        %4029 = vmatprep.subr.mxu0 %v1327
        %4030 = vmatpush1.msra.mxu0 %v1326
        %4031 = vmatprep.subr.mxu0 %v1331
        %4032 = vmatpush1.msra.mxu0 %v1330
        %4033 = vmatprep.subr.mxu0 %v1335
        %4034 = vmatpush1.msra.mxu0 %v1334
        %4035 = vmatprep.subr.mxu0 %v1339
        %4036 = vmatpush1.msra.mxu0 %v1338
        %4037 = vmatprep.subr.mxu0 %v1343
        %4038 = vmatpush1.msra.mxu0 %v1342
        %4039 = vmatprep.subr.mxu0 %v1347
        %4040 = vmatpush1.msra.mxu0 %v1346
        %4041 = vmatprep.subr.mxu0 %v1351
        %4042 = vmatpush1.msra.mxu0 %v1350
        %4043 = vmatprep.subr.mxu0 %v1355
        %4044 = vmatpush1.msra.mxu0 %v1354
        %4045 = vmatprep.subr.mxu0 %v1359
        %4046 = vmatpush1.msra.mxu0 %v1358
        %4047 = vmatprep.mubr.f32.mxu0 %v2331
        %4048 = vmatmul.mubr.f32.gmra.mrb[0].mxu0 %v2329
        %v4049 = vpop.f32.mrb[0].mxu0
        %v4050 = vadd.f32 %v3979, %v4049
        %v4051 = vpop.f32.mrb[0].mxu0
        %v4052 = vadd.f32 %v3981, %v4051
        %4053 = vdwg.mxu0
        %4054 = vmatprep.subr.mxu0 %v1363
        %4055 = vmatpush1.msra.mxu0 %v1362
        %4056 = vmatprep.subr.mxu0 %v1367
        %4057 = vmatpush1.msra.mxu0 %v1366
        %4058 = vmatprep.subr.mxu0 %v1371
        %4059 = vmatpush1.msra.mxu0 %v1370
        %4060 = vmatprep.subr.mxu0 %v1375
        %4061 = vmatpush1.msra.mxu0 %v1374
        %4062 = vmatprep.subr.mxu0 %v1379
        %4063 = vmatpush1.msra.mxu0 %v1378
        %4064 = vmatprep.subr.mxu0 %v1383
        %4065 = vmatpush1.msra.mxu0 %v1382
        %4066 = vmatprep.subr.mxu0 %v1387
        %4067 = vmatpush1.msra.mxu0 %v1386
        %4068 = vmatprep.subr.mxu0 %v1391
        %4069 = vmatpush1.msra.mxu0 %v1390
        %4070 = vmatprep.subr.mxu0 %v1395
        %4071 = vmatpush1.msra.mxu0 %v1394
        %4072 = vmatprep.subr.mxu0 %v1399
        %4073 = vmatpush1.msra.mxu0 %v1398
        %4074 = vmatprep.subr.mxu0 %v1403
        %4075 = vmatpush1.msra.mxu0 %v1402
        %4076 = vmatprep.subr.mxu0 %v1407
        %4077 = vmatpush1.msra.mxu0 %v1406
        %4078 = vmatprep.subr.mxu0 %v1411
        %4079 = vmatpush1.msra.mxu0 %v1410
        %4080 = vmatprep.subr.mxu0 %v1415
        %4081 = vmatpush1.msra.mxu0 %v1414
        %4082 = vmatprep.subr.mxu0 %v1419
        %4083 = vmatpush1.msra.mxu0 %v1418
        %4084 = vmatprep.subr.mxu0 %v1423
        %4085 = vmatpush1.msra.mxu0 %v1422
        %4086 = vmatprep.subr.mxu0 %v1427
        %4087 = vmatpush1.msra.mxu0 %v1426
        %4088 = vmatprep.subr.mxu0 %v1431
        %4089 = vmatpush1.msra.mxu0 %v1430
        %4090 = vmatprep.subr.mxu0 %v1435
        %4091 = vmatpush1.msra.mxu0 %v1434
        %4092 = vmatprep.subr.mxu0 %v1439
        %4093 = vmatpush1.msra.mxu0 %v1438
        %4094 = vmatprep.subr.mxu0 %v1443
        %4095 = vmatpush1.msra.mxu0 %v1442
        %4096 = vmatprep.subr.mxu0 %v1447
        %4097 = vmatpush1.msra.mxu0 %v1446
        %4098 = vmatprep.subr.mxu0 %v1451
        %4099 = vmatpush1.msra.mxu0 %v1450
        %4100 = vmatprep.subr.mxu0 %v1455
        %4101 = vmatpush1.msra.mxu0 %v1454
        %4102 = vmatprep.subr.mxu0 %v1459
        %4103 = vmatpush1.msra.mxu0 %v1458
        %4104 = vmatprep.subr.mxu0 %v1463
        %4105 = vmatpush1.msra.mxu0 %v1462
        %4106 = vmatprep.subr.mxu0 %v1467
        %4107 = vmatpush1.msra.mxu0 %v1466
        %4108 = vmatprep.subr.mxu0 %v1471
        %4109 = vmatpush1.msra.mxu0 %v1470
        %4110 = vmatprep.subr.mxu0 %v1475
        %4111 = vmatpush1.msra.mxu0 %v1474
        %4112 = vmatprep.subr.mxu0 %v1479
        %4113 = vmatpush1.msra.mxu0 %v1478
        %4114 = vmatprep.subr.mxu0 %v1483
        %4115 = vmatpush1.msra.mxu0 %v1482
        %4116 = vmatprep.subr.mxu0 %v1487
        %4117 = vmatpush1.msra.mxu0 %v1486
        %4118 = vmatprep.mubr.f32.mxu0 %v2347
        %4119 = vmatmul.mubr.f32.gmra.mrb[0].mxu0 %v2339
        %v4120 = vpop.f32.mrb[0].mxu0
        %v4121 = vadd.f32 %v4050, %v4120
        %v4122 = vpop.f32.mrb[0].mxu0
        %v4123 = vadd.f32 %v4052, %v4122
        %4124 = vdwg.mxu0
        %4125 = vmatprep.subr.mxu0 %v1491
        %4126 = vmatpush1.msra.mxu0 %v1490
        %4127 = vmatprep.subr.mxu0 %v1495
        %4128 = vmatpush1.msra.mxu0 %v1494
        %4129 = vmatprep.subr.mxu0 %v1499
        %4130 = vmatpush1.msra.mxu0 %v1498
        %4131 = vmatprep.subr.mxu0 %v1503
        %4132 = vmatpush1.msra.mxu0 %v1502
        %4133 = vmatprep.subr.mxu0 %v1507
        %4134 = vmatpush1.msra.mxu0 %v1506
        %4135 = vmatprep.subr.mxu0 %v1511
        %4136 = vmatpush1.msra.mxu0 %v1510
        %4137 = vmatprep.subr.mxu0 %v1515
        %4138 = vmatpush1.msra.mxu0 %v1514
        %4139 = vmatprep.subr.mxu0 %v1519
        %4140 = vmatpush1.msra.mxu0 %v1518
        %4141 = vmatprep.subr.mxu0 %v1523
        %4142 = vmatpush1.msra.mxu0 %v1522
        %4143 = vmatprep.subr.mxu0 %v1527
        %4144 = vmatpush1.msra.mxu0 %v1526
        %4145 = vmatprep.subr.mxu0 %v1531
        %4146 = vmatpush1.msra.mxu0 %v1530
        %4147 = vmatprep.subr.mxu0 %v1535
        %4148 = vmatpush1.msra.mxu0 %v1534
        %4149 = vmatprep.subr.mxu0 %v1539
        %4150 = vmatpush1.msra.mxu0 %v1538
        %4151 = vmatprep.subr.mxu0 %v1543
        %4152 = vmatpush1.msra.mxu0 %v1542
        %4153 = vmatprep.subr.mxu0 %v1547
        %4154 = vmatpush1.msra.mxu0 %v1546
        %4155 = vmatprep.subr.mxu0 %v1551
        %4156 = vmatpush1.msra.mxu0 %v1550
        %4157 = vmatprep.subr.mxu0 %v1555
        %4158 = vmatpush1.msra.mxu0 %v1554
        %4159 = vmatprep.subr.mxu0 %v1559
        %4160 = vmatpush1.msra.mxu0 %v1558
        %4161 = vmatprep.subr.mxu0 %v1563
        %4162 = vmatpush1.msra.mxu0 %v1562
        %4163 = vmatprep.subr.mxu0 %v1567
        %4164 = vmatpush1.msra.mxu0 %v1566
        %4165 = vmatprep.subr.mxu0 %v1571
        %4166 = vmatpush1.msra.mxu0 %v1570
        %4167 = vmatprep.subr.mxu0 %v1575
        %4168 = vmatpush1.msra.mxu0 %v1574
        %4169 = vmatprep.subr.mxu0 %v1579
        %4170 = vmatpush1.msra.mxu0 %v1578
        %4171 = vmatprep.subr.mxu0 %v1583
        %4172 = vmatpush1.msra.mxu0 %v1582
        %4173 = vmatprep.subr.mxu0 %v1587
        %4174 = vmatpush1.msra.mxu0 %v1586
        %4175 = vmatprep.subr.mxu0 %v1591
        %4176 = vmatpush1.msra.mxu0 %v1590
        %4177 = vmatprep.subr.mxu0 %v1595
        %4178 = vmatpush1.msra.mxu0 %v1594
        %4179 = vmatprep.subr.mxu0 %v1599
        %4180 = vmatpush1.msra.mxu0 %v1598
        %4181 = vmatprep.subr.mxu0 %v1603
        %4182 = vmatpush1.msra.mxu0 %v1602
        %4183 = vmatprep.subr.mxu0 %v1607
        %4184 = vmatpush1.msra.mxu0 %v1606
        %4185 = vmatprep.subr.mxu0 %v1611
        %4186 = vmatpush1.msra.mxu0 %v1610
        %4187 = vmatprep.subr.mxu0 %v1615
        %4188 = vmatpush1.msra.mxu0 %v1614
        %4189 = vmatprep.mubr.f32.mxu0 %v2348
        %4190 = vmatmul.mubr.f32.gmra.mrb[0].mxu0 %v2346
        %v4191 = vpop.f32.mrb[0].mxu0
        %v4192 = vadd.f32 %v4121, %v4191
        %v4193 = vpop.f32.mrb[0].mxu0
        %v4194 = vadd.f32 %v4123, %v4193
        %4195 = vdwg.mxu0
        %4196 = vmatprep.subr.mxu0 %v1619
        %4197 = vmatpush1.msra.mxu0 %v1618
        %4198 = vmatprep.subr.mxu0 %v1623
        %4199 = vmatpush1.msra.mxu0 %v1622
        %4200 = vmatprep.subr.mxu0 %v1627
        %4201 = vmatpush1.msra.mxu0 %v1626
        %4202 = vmatprep.subr.mxu0 %v1631
        %4203 = vmatpush1.msra.mxu0 %v1630
        %4204 = vmatprep.subr.mxu0 %v1635
        %4205 = vmatpush1.msra.mxu0 %v1634
        %4206 = vmatprep.subr.mxu0 %v1639
        %4207 = vmatpush1.msra.mxu0 %v1638
        %4208 = vmatprep.subr.mxu0 %v1643
        %4209 = vmatpush1.msra.mxu0 %v1642
        %4210 = vmatprep.subr.mxu0 %v1647
        %4211 = vmatpush1.msra.mxu0 %v1646
        %4212 = vmatprep.subr.mxu0 %v1651
        %4213 = vmatpush1.msra.mxu0 %v1650
        %4214 = vmatprep.subr.mxu0 %v1655
        %4215 = vmatpush1.msra.mxu0 %v1654
        %4216 = vmatprep.subr.mxu0 %v1659
        %4217 = vmatpush1.msra.mxu0 %v1658
        %4218 = vmatprep.subr.mxu0 %v1663
        %4219 = vmatpush1.msra.mxu0 %v1662
        %4220 = vmatprep.subr.mxu0 %v1667
        %4221 = vmatpush1.msra.mxu0 %v1666
        %4222 = vmatprep.subr.mxu0 %v1671
        %4223 = vmatpush1.msra.mxu0 %v1670
        %4224 = vmatprep.subr.mxu0 %v1675
        %4225 = vmatpush1.msra.mxu0 %v1674
        %4226 = vmatprep.subr.mxu0 %v1679
        %4227 = vmatpush1.msra.mxu0 %v1678
        %4228 = vmatprep.subr.mxu0 %v1683
        %4229 = vmatpush1.msra.mxu0 %v1682
        %4230 = vmatprep.subr.mxu0 %v1687
        %4231 = vmatpush1.msra.mxu0 %v1686
        %4232 = vmatprep.subr.mxu0 %v1691
        %4233 = vmatpush1.msra.mxu0 %v1690
        %4234 = vmatprep.subr.mxu0 %v1695
        %4235 = vmatpush1.msra.mxu0 %v1694
        %4236 = vmatprep.subr.mxu0 %v1699
        %4237 = vmatpush1.msra.mxu0 %v1698
        %4238 = vmatprep.subr.mxu0 %v1703
        %4239 = vmatpush1.msra.mxu0 %v1702
        %4240 = vmatprep.subr.mxu0 %v1707
        %4241 = vmatpush1.msra.mxu0 %v1706
        %4242 = vmatprep.subr.mxu0 %v1711
        %4243 = vmatpush1.msra.mxu0 %v1710
        %4244 = vmatprep.subr.mxu0 %v1715
        %4245 = vmatpush1.msra.mxu0 %v1714
        %4246 = vmatprep.subr.mxu0 %v1719
        %4247 = vmatpush1.msra.mxu0 %v1718
        %4248 = vmatprep.subr.mxu0 %v1723
        %4249 = vmatpush1.msra.mxu0 %v1722
        %4250 = vmatprep.subr.mxu0 %v1727
        %4251 = vmatpush1.msra.mxu0 %v1726
        %4252 = vmatprep.subr.mxu0 %v1731
        %4253 = vmatpush1.msra.mxu0 %v1730
        %4254 = vmatprep.subr.mxu0 %v1735
        %4255 = vmatpush1.msra.mxu0 %v1734
        %4256 = vmatprep.subr.mxu0 %v1739
        %4257 = vmatpush1.msra.mxu0 %v1738
        %4258 = vmatprep.subr.mxu0 %v1743
        %4259 = vmatpush1.msra.mxu0 %v1742
        %4260 = vmatprep.mubr.f32.mxu0 %v2364
        %4261 = vmatmul.mubr.f32.gmra.mrb[0].mxu0 %v2356
        %v4262 = vpop.f32.mrb[0].mxu0
        %v4263 = vadd.f32 %v4192, %v4262
        %v4264 = vpop.f32.mrb[0].mxu0
        %v4265 = vadd.f32 %v4194, %v4264
        %4266 = vdwg.mxu0
        %4267 = vmatprep.subr.mxu0 %v1747
        %4268 = vmatpush1.msra.mxu0 %v1746
        %4269 = vmatprep.subr.mxu0 %v1751
        %4270 = vmatpush1.msra.mxu0 %v1750
        %4271 = vmatprep.subr.mxu0 %v1755
        %4272 = vmatpush1.msra.mxu0 %v1754
        %4273 = vmatprep.subr.mxu0 %v1759
        %4274 = vmatpush1.msra.mxu0 %v1758
        %4275 = vmatprep.subr.mxu0 %v1763
        %4276 = vmatpush1.msra.mxu0 %v1762
        %4277 = vmatprep.subr.mxu0 %v1767
        %4278 = vmatpush1.msra.mxu0 %v1766
        %4279 = vmatprep.subr.mxu0 %v1771
        %4280 = vmatpush1.msra.mxu0 %v1770
        %4281 = vmatprep.subr.mxu0 %v1775
        %4282 = vmatpush1.msra.mxu0 %v1774
        %4283 = vmatprep.subr.mxu0 %v1779
        %4284 = vmatpush1.msra.mxu0 %v1778
        %4285 = vmatprep.subr.mxu0 %v1783
        %4286 = vmatpush1.msra.mxu0 %v1782
        %4287 = vmatprep.subr.mxu0 %v1787
        %4288 = vmatpush1.msra.mxu0 %v1786
        %4289 = vmatprep.subr.mxu0 %v1791
        %4290 = vmatpush1.msra.mxu0 %v1790
        %4291 = vmatprep.subr.mxu0 %v1795
        %4292 = vmatpush1.msra.mxu0 %v1794
        %4293 = vmatprep.subr.mxu0 %v1799
        %4294 = vmatpush1.msra.mxu0 %v1798
        %4295 = vmatprep.subr.mxu0 %v1803
        %4296 = vmatpush1.msra.mxu0 %v1802
        %4297 = vmatprep.subr.mxu0 %v1807
        %4298 = vmatpush1.msra.mxu0 %v1806
        %4299 = vmatprep.subr.mxu0 %v1811
        %4300 = vmatpush1.msra.mxu0 %v1810
        %4301 = vmatprep.subr.mxu0 %v1815
        %4302 = vmatpush1.msra.mxu0 %v1814
        %4303 = vmatprep.subr.mxu0 %v1819
        %4304 = vmatpush1.msra.mxu0 %v1818
        %4305 = vmatprep.subr.mxu0 %v1823
        %4306 = vmatpush1.msra.mxu0 %v1822
        %4307 = vmatprep.subr.mxu0 %v1827
        %4308 = vmatpush1.msra.mxu0 %v1826
        %4309 = vmatprep.subr.mxu0 %v1831
        %4310 = vmatpush1.msra.mxu0 %v1830
        %4311 = vmatprep.subr.mxu0 %v1835
        %4312 = vmatpush1.msra.mxu0 %v1834
        %4313 = vmatprep.subr.mxu0 %v1839
        %4314 = vmatpush1.msra.mxu0 %v1838
        %4315 = vmatprep.subr.mxu0 %v1843
        %4316 = vmatpush1.msra.mxu0 %v1842
        %4317 = vmatprep.subr.mxu0 %v1847
        %4318 = vmatpush1.msra.mxu0 %v1846
        %4319 = vmatprep.subr.mxu0 %v1851
        %4320 = vmatpush1.msra.mxu0 %v1850
        %4321 = vmatprep.subr.mxu0 %v1855
        %4322 = vmatpush1.msra.mxu0 %v1854
        %4323 = vmatprep.subr.mxu0 %v1859
        %4324 = vmatpush1.msra.mxu0 %v1858
        %4325 = vmatprep.subr.mxu0 %v1863
        %4326 = vmatpush1.msra.mxu0 %v1862
        %4327 = vmatprep.subr.mxu0 %v1867
        %4328 = vmatpush1.msra.mxu0 %v1866
        %4329 = vmatprep.subr.mxu0 %v1871
        %4330 = vmatpush1.msra.mxu0 %v1870
        %4331 = vmatprep.mubr.f32.mxu0 %v2365
        %4332 = vmatmul.mubr.f32.gmra.mrb[0].mxu0 %v2363
        %v4333 = vpop.f32.mrb[0].mxu0
        %v4334 = vadd.f32 %v4263, %v4333
        %v4335 = vpop.f32.mrb[0].mxu0
        %v4336 = vadd.f32 %v4265, %v4335
        %4337 = vdwg.mxu0
        %4338 = vmatprep.subr.mxu0 %v1875
        %4339 = vmatpush1.msra.mxu0 %v1874
        %4340 = vmatprep.subr.mxu0 %v1879
        %4341 = vmatpush1.msra.mxu0 %v1878
        %4342 = vmatprep.subr.mxu0 %v1883
        %4343 = vmatpush1.msra.mxu0 %v1882
        %4344 = vmatprep.subr.mxu0 %v1887
        %4345 = vmatpush1.msra.mxu0 %v1886
        %4346 = vmatprep.subr.mxu0 %v1891
        %4347 = vmatpush1.msra.mxu0 %v1890
        %4348 = vmatprep.subr.mxu0 %v1895
        %4349 = vmatpush1.msra.mxu0 %v1894
        %4350 = vmatprep.subr.mxu0 %v1899
        %4351 = vmatpush1.msra.mxu0 %v1898
        %4352 = vmatprep.subr.mxu0 %v1903
        %4353 = vmatpush1.msra.mxu0 %v1902
        %4354 = vmatprep.subr.mxu0 %v1907
        %4355 = vmatpush1.msra.mxu0 %v1906
        %4356 = vmatprep.subr.mxu0 %v1911
        %4357 = vmatpush1.msra.mxu0 %v1910
        %4358 = vmatprep.subr.mxu0 %v1915
        %4359 = vmatpush1.msra.mxu0 %v1914
        %4360 = vmatprep.subr.mxu0 %v1919
        %4361 = vmatpush1.msra.mxu0 %v1918
        %4362 = vmatprep.subr.mxu0 %v1923
        %4363 = vmatpush1.msra.mxu0 %v1922
        %4364 = vmatprep.subr.mxu0 %v1927
        %4365 = vmatpush1.msra.mxu0 %v1926
        %4366 = vmatprep.subr.mxu0 %v1931
        %4367 = vmatpush1.msra.mxu0 %v1930
        %4368 = vmatprep.subr.mxu0 %v1935
        %4369 = vmatpush1.msra.mxu0 %v1934
        %4370 = vmatprep.subr.mxu0 %v1939
        %4371 = vmatpush1.msra.mxu0 %v1938
        %4372 = vmatprep.subr.mxu0 %v1943
        %4373 = vmatpush1.msra.mxu0 %v1942
        %4374 = vmatprep.subr.mxu0 %v1947
        %4375 = vmatpush1.msra.mxu0 %v1946
        %4376 = vmatprep.subr.mxu0 %v1951
        %4377 = vmatpush1.msra.mxu0 %v1950
        %4378 = vmatprep.subr.mxu0 %v1955
        %4379 = vmatpush1.msra.mxu0 %v1954
        %4380 = vmatprep.subr.mxu0 %v1959
        %4381 = vmatpush1.msra.mxu0 %v1958
        %4382 = vmatprep.subr.mxu0 %v1963
        %4383 = vmatpush1.msra.mxu0 %v1962
        %4384 = vmatprep.subr.mxu0 %v1967
        %4385 = vmatpush1.msra.mxu0 %v1966
        %4386 = vmatprep.subr.mxu0 %v1971
        %4387 = vmatpush1.msra.mxu0 %v1970
        %4388 = vmatprep.subr.mxu0 %v1975
        %4389 = vmatpush1.msra.mxu0 %v1974
        %4390 = vmatprep.subr.mxu0 %v1979
        %4391 = vmatpush1.msra.mxu0 %v1978
        %4392 = vmatprep.subr.mxu0 %v1983
        %4393 = vmatpush1.msra.mxu0 %v1982
        %4394 = vmatprep.subr.mxu0 %v1987
        %4395 = vmatpush1.msra.mxu0 %v1986
        %4396 = vmatprep.subr.mxu0 %v1991
        %4397 = vmatpush1.msra.mxu0 %v1990
        %4398 = vmatprep.subr.mxu0 %v1995
        %4399 = vmatpush1.msra.mxu0 %v1994
        %4400 = vmatprep.subr.mxu0 %v1999
        %4401 = vmatpush1.msra.mxu0 %v1998
        %4402 = vmatprep.mubr.f32.mxu0 %v2381
        %4403 = vmatmul.mubr.f32.gmra.mrb[0].mxu0 %v2373
        %v4404 = vpop.f32.mrb[0].mxu0
        %v4405 = vadd.f32 %v4334, %v4404
        %v4406 = vpop.f32.mrb[0].mxu0
        %v4407 = vadd.f32 %v4336, %v4406
        %4408 = vdwg.mxu0
        %4409 = vmatprep.subr.mxu0 %v2003
        %4410 = vmatpush1.msra.mxu0 %v2002
        %4411 = vmatprep.subr.mxu0 %v2007
        %4412 = vmatpush1.msra.mxu0 %v2006
        %4413 = vmatprep.subr.mxu0 %v2011
        %4414 = vmatpush1.msra.mxu0 %v2010
        %4415 = vmatprep.subr.mxu0 %v2015
        %4416 = vmatpush1.msra.mxu0 %v2014
        %4417 = vmatprep.subr.mxu0 %v2019
        %4418 = vmatpush1.msra.mxu0 %v2018
        %4419 = vmatprep.subr.mxu0 %v2023
        %4420 = vmatpush1.msra.mxu0 %v2022
        %4421 = vmatprep.subr.mxu0 %v2027
        %4422 = vmatpush1.msra.mxu0 %v2026
        %4423 = vmatprep.subr.mxu0 %v2031
        %4424 = vmatpush1.msra.mxu0 %v2030
        %4425 = vmatprep.subr.mxu0 %v2035
        %4426 = vmatpush1.msra.mxu0 %v2034
        %4427 = vmatprep.subr.mxu0 %v2039
        %4428 = vmatpush1.msra.mxu0 %v2038
        %4429 = vmatprep.subr.mxu0 %v2043
        %4430 = vmatpush1.msra.mxu0 %v2042
        %4431 = vmatprep.subr.mxu0 %v2047
        %4432 = vmatpush1.msra.mxu0 %v2046
        %4433 = vmatprep.subr.mxu0 %v2051
        %4434 = vmatpush1.msra.mxu0 %v2050
        %4435 = vmatprep.subr.mxu0 %v2055
        %4436 = vmatpush1.msra.mxu0 %v2054
        %4437 = vmatprep.subr.mxu0 %v2059
        %4438 = vmatpush1.msra.mxu0 %v2058
        %4439 = vmatprep.subr.mxu0 %v2063
        %4440 = vmatpush1.msra.mxu0 %v2062
        %4441 = vmatprep.subr.mxu0 %v2067
        %4442 = vmatpush1.msra.mxu0 %v2066
        %4443 = vmatprep.subr.mxu0 %v2071
        %4444 = vmatpush1.msra.mxu0 %v2070
        %4445 = vmatprep.subr.mxu0 %v2075
        %4446 = vmatpush1.msra.mxu0 %v2074
        %4447 = vmatprep.subr.mxu0 %v2079
        %4448 = vmatpush1.msra.mxu0 %v2078
        %4449 = vmatprep.subr.mxu0 %v2083
        %4450 = vmatpush1.msra.mxu0 %v2082
        %4451 = vmatprep.subr.mxu0 %v2087
        %4452 = vmatpush1.msra.mxu0 %v2086
        %4453 = vmatprep.subr.mxu0 %v2091
        %4454 = vmatpush1.msra.mxu0 %v2090
        %4455 = vmatprep.subr.mxu0 %v2095
        %4456 = vmatpush1.msra.mxu0 %v2094
        %4457 = vmatprep.subr.mxu0 %v2099
        %4458 = vmatpush1.msra.mxu0 %v2098
        %4459 = vmatprep.subr.mxu0 %v2103
        %4460 = vmatpush1.msra.mxu0 %v2102
        %4461 = vmatprep.subr.mxu0 %v2107
        %4462 = vmatpush1.msra.mxu0 %v2106
        %4463 = vmatprep.subr.mxu0 %v2111
        %4464 = vmatpush1.msra.mxu0 %v2110
        %4465 = vmatprep.subr.mxu0 %v2115
        %4466 = vmatpush1.msra.mxu0 %v2114
        %4467 = vmatprep.subr.mxu0 %v2119
        %4468 = vmatpush1.msra.mxu0 %v2118
        %4469 = vmatprep.subr.mxu0 %v2123
        %4470 = vmatpush1.msra.mxu0 %v2122
        %4471 = vmatprep.subr.mxu0 %v2127
        %4472 = vmatpush1.msra.mxu0 %v2126
        %4473 = vmatprep.mubr.f32.mxu0 %v2382
        %4474 = vmatmul.mubr.f32.gmra.mrb[0].mxu0 %v2380
        %v4475 = vpop.f32.mrb[0].mxu0
        %v4476 = vadd.f32 %v4405, %v4475
        %v4477 = vpop.f32.mrb[0].mxu0
        %v4478 = vadd.f32 %v4407, %v4477
        %4479 = vdwg.mxu0
        %4480 = vmatprep.subr.mxu0 %v2131
        %4481 = vmatpush1.msra.mxu0 %v2130
        %4482 = vmatprep.subr.mxu0 %v2135
        %4483 = vmatpush1.msra.mxu0 %v2134
        %4484 = vmatprep.subr.mxu0 %v2139
        %4485 = vmatpush1.msra.mxu0 %v2138
        %4486 = vmatprep.subr.mxu0 %v2143
        %4487 = vmatpush1.msra.mxu0 %v2142
        %4488 = vmatprep.subr.mxu0 %v2147
        %4489 = vmatpush1.msra.mxu0 %v2146
        %4490 = vmatprep.subr.mxu0 %v2151
        %4491 = vmatpush1.msra.mxu0 %v2150
        %4492 = vmatprep.subr.mxu0 %v2155
        %4493 = vmatpush1.msra.mxu0 %v2154
        %4494 = vmatprep.subr.mxu0 %v2159
        %4495 = vmatpush1.msra.mxu0 %v2158
        %4496 = vmatprep.subr.mxu0 %v2163
        %4497 = vmatpush1.msra.mxu0 %v2162
        %4498 = vmatprep.subr.mxu0 %v2167
        %4499 = vmatpush1.msra.mxu0 %v2166
        %4500 = vmatprep.subr.mxu0 %v2171
        %4501 = vmatpush1.msra.mxu0 %v2170
        %4502 = vmatprep.subr.mxu0 %v2175
        %4503 = vmatpush1.msra.mxu0 %v2174
        %4504 = vmatprep.subr.mxu0 %v2179
        %4505 = vmatpush1.msra.mxu0 %v2178
        %4506 = vmatprep.subr.mxu0 %v2183
        %4507 = vmatpush1.msra.mxu0 %v2182
        %4508 = vmatprep.subr.mxu0 %v2187
        %4509 = vmatpush1.msra.mxu0 %v2186
        %4510 = vmatprep.subr.mxu0 %v2191
        %4511 = vmatpush1.msra.mxu0 %v2190
        %4512 = vmatprep.subr.mxu0 %v2195
        %4513 = vmatpush1.msra.mxu0 %v2194
        %4514 = vmatprep.subr.mxu0 %v2199
        %4515 = vmatpush1.msra.mxu0 %v2198
        %4516 = vmatprep.subr.mxu0 %v2203
        %4517 = vmatpush1.msra.mxu0 %v2202
        %4518 = vmatprep.subr.mxu0 %v2207
        %4519 = vmatpush1.msra.mxu0 %v2206
        %4520 = vmatprep.subr.mxu0 %v2211
        %4521 = vmatpush1.msra.mxu0 %v2210
        %4522 = vmatprep.subr.mxu0 %v2215
        %4523 = vmatpush1.msra.mxu0 %v2214
        %4524 = vmatprep.subr.mxu0 %v2219
        %4525 = vmatpush1.msra.mxu0 %v2218
        %4526 = vmatprep.subr.mxu0 %v2223
        %4527 = vmatpush1.msra.mxu0 %v2222
        %4528 = vmatprep.subr.mxu0 %v2227
        %4529 = vmatpush1.msra.mxu0 %v2226
        %4530 = vmatprep.subr.mxu0 %v2231
        %4531 = vmatpush1.msra.mxu0 %v2230
        %4532 = vmatprep.subr.mxu0 %v2235
        %4533 = vmatpush1.msra.mxu0 %v2234
        %4534 = vmatprep.subr.mxu0 %v2239
        %4535 = vmatpush1.msra.mxu0 %v2238
        %4536 = vmatprep.subr.mxu0 %v2243
        %4537 = vmatpush1.msra.mxu0 %v2242
        %4538 = vmatprep.subr.mxu0 %v2247
        %4539 = vmatpush1.msra.mxu0 %v2246
        %4540 = vmatprep.subr.mxu0 %v2251
        %4541 = vmatpush1.msra.mxu0 %v2250
        %4542 = vmatprep.subr.mxu0 %v2255
        %4543 = vmatpush1.msra.mxu0 %v2254
        %4544 = vmatprep.mubr.f32.mxu0 %v2390
        %4545 = vmatmul.mubr.f32.gmra.mrb[0].mxu0 %v2389
        %v4546 = vpop.f32.mrb[0].mxu0
        %v4547 = vadd.f32 %v4476, %v4546
        %v4548 = vpop.f32.mrb[0].mxu0
        %v4549 = vadd.f32 %v4478, %v4548
        %4550 = vdwg.mxu0
        %v4555 = vcombine.low %v3482, %v3484
        %v4556 = vcombine.low %v4547, %v4549
        %v4558 = vunpack.c.l.s4 1983009808
        %v4559 = vunpack.c.0.s8 %v4558
        %v4560 = vlaneseq
        %v4561 = vshrl.u32 %v4560, 7
        %v4562 = vsub.s32 %v4559, %v4561
        %v4563 = vrot.slane %v4555, %v4562
        %v4565 = vunpack.c.l.s4 1983009808
        %v4566 = vunpack.c.0.s8 %v4565
        %v4567 = vlaneseq
        %v4568 = vshrl.u32 %v4567, 7
        %v4569 = vsub.s32 %v4566, %v4568
        %v4570 = vrot.slane %v4556, %v4569
        %v4571 = vcombine.low %v4563, %v4570
        %v4573 = vadd.f32 %v327, %v4571
        %4574 = vst [vmem:[#allocation2] sm:$0xff] %v4573
        %p4575 = scmp.eq.s32.totalorder %s22, 63
        // Predicated region
        $region61: #{feature_discriminator.1} parent=47 // pred_check
          %p4576 = pneg %p4575
        $region62: #{feature_discriminator.1} parent=47 // pred_check_branch
          %4578 = sbr.rel (%p4576) target = $region64
        $region63: #{feature_discriminator.1} parent=47 // pred_region
          %s4579 = sld [smem:[#allocation3]]
          %s4580 = sld [smem:[#allocation3 + $0x1]]
          %v4581 = vld [vmem:[#allocation2] sm:$0xff]
          %v4582 = vld [vmem:[%s3] sm:$0xf]
          %v4584 = vlaneseq
          %v4585 = vshrl.u32 %v4584, 7
          %v4586 = vsub.s32 0, %v4585
          %v4587 = vrot.slane %v4582, %v4586
          %v4588 = vlaneseq
          %v4589 = vshrl.u32 %v4588, 7
          %v4590 = vsub.s32 1, %v4589
          %v4591 = vrot.slane %v4582, %v4590
          %v4592 = vlaneseq
          %v4593 = vshrl.u32 %v4592, 7
          %v4594 = vsub.s32 2, %v4593
          %v4595 = vrot.slane %v4582, %v4594
          %v4596 = vlaneseq
          %v4597 = vshrl.u32 %v4596, 7
          %v4598 = vsub.s32 3, %v4597
          %v4599 = vrot.slane %v4582, %v4598
          %v4600 = vcombine.low %v4587, %v4591
          %v4601 = vcombine.low %v4595, %v4599
          %v4603 = vunpack.c.l.s4 1983009808
          %v4604 = vunpack.c.0.s8 %v4603
          %v4605 = vlaneseq
          %v4606 = vshrl.u32 %v4605, 7
          %v4607 = vsub.s32 %v4604, %v4606
          %v4608 = vrot.slane %v4600, %v4607
          %v4610 = vunpack.c.l.s4 1983009808
          %v4611 = vunpack.c.0.s8 %v4610
          %v4612 = vlaneseq
          %v4613 = vshrl.u32 %v4612, 7
          %v4614 = vsub.s32 %v4611, %v4613
          %v4615 = vrot.slane %v4601, %v4614
          %v4616 = vcombine.low %v4608, %v4615
          %v4618 = vadd.f32 %v4581, %v4616
          %vm4619 = vcmp.ge.f32.partialorder %v4618, 0.0
          %v4620 = vstv %s4579
          %v4621 = vmul.f32 %v4620, %v4618
          %v4622 = vsel %vm4619, %v4618, %v4621
          %v4623 = vld [vmem:[%s4] sm:$0xff]
          %v4624 = vld [vmem:[%s4 + $0x8] sm:$0xff]
          %v4625 = vld [vmem:[%s4 + $0x10] sm:$0xff]
          %v4626 = vld [vmem:[%s4 + $0x18] sm:$0xff]
          %v4627 = vld [vmem:[%s4 + $0x20] sm:$0xff]
          %v4628 = vld [vmem:[%s4 + $0x28] sm:$0xff]
          %v4629 = vld [vmem:[%s4 + $0x30] sm:$0xff]
          %v4630 = vld [vmem:[%s4 + $0x38] sm:$0xff]
          %v4631 = vld [vmem:[%s4 + $0x40] sm:$0xff]
          %v4632 = vld [vmem:[%s4 + $0x48] sm:$0xff]
          %v4633 = vld [vmem:[%s4 + $0x50] sm:$0xff]
          %v4634 = vld [vmem:[%s4 + $0x58] sm:$0xff]
          %v4635 = vld [vmem:[%s4 + $0x60] sm:$0xff]
          %v4636 = vld [vmem:[%s4 + $0x68] sm:$0xff]
          %v4637 = vld [vmem:[%s4 + $0x70] sm:$0xff]
          %v4638 = vld [vmem:[%s4 + $0x78] sm:$0xff]
          %v4639 = vld [vmem:[%s4 + $0x80] sm:$0xff]
          %v4640 = vld [vmem:[%s4 + $0x88] sm:$0xff]
          %v4641 = vld [vmem:[%s4 + $0x90] sm:$0xff]
          %v4642 = vld [vmem:[%s4 + $0x98] sm:$0xff]
          %v4643 = vld [vmem:[%s4 + $0xa0] sm:$0xff]
          %v4644 = vld [vmem:[%s4 + $0xa8] sm:$0xff]
          %v4645 = vld [vmem:[%s4 + $0xb0] sm:$0xff]
          %v4646 = vld [vmem:[%s4 + $0xb8] sm:$0xff]
          %v4647 = vld [vmem:[%s4 + $0xc0] sm:$0xff]
          %v4648 = vld [vmem:[%s4 + $0xc8] sm:$0xff]
          %v4649 = vld [vmem:[%s4 + $0xd0] sm:$0xff]
          %v4650 = vld [vmem:[%s4 + $0xd8] sm:$0xff]
          %v4651 = vld [vmem:[%s4 + $0xe0] sm:$0xff]
          %v4652 = vld [vmem:[%s4 + $0xe8] sm:$0xff]
          %v4653 = vld [vmem:[%s4 + $0xf0] sm:$0xff]
          %v4654 = vld [vmem:[%s4 + $0xf8] sm:$0xff]
          %v4655 = vld [vmem:[%s4 + $0x100] sm:$0xff]
          %v4656 = vld [vmem:[%s4 + $0x108] sm:$0xff]
          %v4657 = vld [vmem:[%s4 + $0x110] sm:$0xff]
          %v4658 = vld [vmem:[%s4 + $0x118] sm:$0xff]
          %v4659 = vld [vmem:[%s4 + $0x120] sm:$0xff]
          %v4660 = vld [vmem:[%s4 + $0x128] sm:$0xff]
          %v4661 = vld [vmem:[%s4 + $0x130] sm:$0xff]
          %v4662 = vld [vmem:[%s4 + $0x138] sm:$0xff]
          %v4663 = vld [vmem:[%s4 + $0x140] sm:$0xff]
          %v4664 = vld [vmem:[%s4 + $0x148] sm:$0xff]
          %v4665 = vld [vmem:[%s4 + $0x150] sm:$0xff]
          %v4666 = vld [vmem:[%s4 + $0x158] sm:$0xff]
          %v4667 = vld [vmem:[%s4 + $0x160] sm:$0xff]
          %v4668 = vld [vmem:[%s4 + $0x168] sm:$0xff]
          %v4669 = vld [vmem:[%s4 + $0x170] sm:$0xff]
          %v4670 = vld [vmem:[%s4 + $0x178] sm:$0xff]
          %v4671 = vld [vmem:[%s4 + $0x180] sm:$0xff]
          %v4672 = vld [vmem:[%s4 + $0x188] sm:$0xff]
          %v4673 = vld [vmem:[%s4 + $0x190] sm:$0xff]
          %v4674 = vld [vmem:[%s4 + $0x198] sm:$0xff]
          %v4675 = vld [vmem:[%s4 + $0x1a0] sm:$0xff]
          %v4676 = vld [vmem:[%s4 + $0x1a8] sm:$0xff]
          %v4677 = vld [vmem:[%s4 + $0x1b0] sm:$0xff]
          %v4678 = vld [vmem:[%s4 + $0x1b8] sm:$0xff]
          %v4679 = vld [vmem:[%s4 + $0x1c0] sm:$0xff]
          %v4680 = vld [vmem:[%s4 + $0x1c8] sm:$0xff]
          %v4681 = vld [vmem:[%s4 + $0x1d0] sm:$0xff]
          %v4682 = vld [vmem:[%s4 + $0x1d8] sm:$0xff]
          %v4683 = vld [vmem:[%s4 + $0x1e0] sm:$0xff]
          %v4684 = vld [vmem:[%s4 + $0x1e8] sm:$0xff]
          %v4685 = vld [vmem:[%s4 + $0x1f0] sm:$0xff]
          %v4686 = vld [vmem:[%s4 + $0x1f8] sm:$0xff]
          %v4687 = vld [vmem:[%s4 + $0x200] sm:$0xff]
          %v4688 = vld [vmem:[%s4 + $0x208] sm:$0xff]
          %v4689 = vld [vmem:[%s4 + $0x210] sm:$0xff]
          %v4690 = vld [vmem:[%s4 + $0x218] sm:$0xff]
          %v4691 = vld [vmem:[%s4 + $0x220] sm:$0xff]
          %v4692 = vld [vmem:[%s4 + $0x228] sm:$0xff]
          %v4693 = vld [vmem:[%s4 + $0x230] sm:$0xff]
          %v4694 = vld [vmem:[%s4 + $0x238] sm:$0xff]
          %v4695 = vld [vmem:[%s4 + $0x240] sm:$0xff]
          %v4696 = vld [vmem:[%s4 + $0x248] sm:$0xff]
          %v4697 = vld [vmem:[%s4 + $0x250] sm:$0xff]
          %v4698 = vld [vmem:[%s4 + $0x258] sm:$0xff]
          %v4699 = vld [vmem:[%s4 + $0x260] sm:$0xff]
          %v4700 = vld [vmem:[%s4 + $0x268] sm:$0xff]
          %v4701 = vld [vmem:[%s4 + $0x270] sm:$0xff]
          %v4702 = vld [vmem:[%s4 + $0x278] sm:$0xff]
          %v4703 = vld [vmem:[%s4 + $0x280] sm:$0xff]
          %v4704 = vld [vmem:[%s4 + $0x288] sm:$0xff]
          %v4705 = vld [vmem:[%s4 + $0x290] sm:$0xff]
          %v4706 = vld [vmem:[%s4 + $0x298] sm:$0xff]
          %v4707 = vld [vmem:[%s4 + $0x2a0] sm:$0xff]
          %v4708 = vld [vmem:[%s4 + $0x2a8] sm:$0xff]
          %v4709 = vld [vmem:[%s4 + $0x2b0] sm:$0xff]
          %v4710 = vld [vmem:[%s4 + $0x2b8] sm:$0xff]
          %v4711 = vld [vmem:[%s4 + $0x2c0] sm:$0xff]
          %v4712 = vld [vmem:[%s4 + $0x2c8] sm:$0xff]
          %v4713 = vld [vmem:[%s4 + $0x2d0] sm:$0xff]
          %v4714 = vld [vmem:[%s4 + $0x2d8] sm:$0xff]
          %v4715 = vld [vmem:[%s4 + $0x2e0] sm:$0xff]
          %v4716 = vld [vmem:[%s4 + $0x2e8] sm:$0xff]
          %v4717 = vld [vmem:[%s4 + $0x2f0] sm:$0xff]
          %v4718 = vld [vmem:[%s4 + $0x2f8] sm:$0xff]
          %v4719 = vld [vmem:[%s4 + $0x300] sm:$0xff]
          %v4720 = vld [vmem:[%s4 + $0x308] sm:$0xff]
          %v4721 = vld [vmem:[%s4 + $0x310] sm:$0xff]
          %v4722 = vld [vmem:[%s4 + $0x318] sm:$0xff]
          %v4723 = vld [vmem:[%s4 + $0x320] sm:$0xff]
          %v4724 = vld [vmem:[%s4 + $0x328] sm:$0xff]
          %v4725 = vld [vmem:[%s4 + $0x330] sm:$0xff]
          %v4726 = vld [vmem:[%s4 + $0x338] sm:$0xff]
          %v4727 = vld [vmem:[%s4 + $0x340] sm:$0xff]
          %v4728 = vld [vmem:[%s4 + $0x348] sm:$0xff]
          %v4729 = vld [vmem:[%s4 + $0x350] sm:$0xff]
          %v4730 = vld [vmem:[%s4 + $0x358] sm:$0xff]
          %v4731 = vld [vmem:[%s4 + $0x360] sm:$0xff]
          %v4732 = vld [vmem:[%s4 + $0x368] sm:$0xff]
          %v4733 = vld [vmem:[%s4 + $0x370] sm:$0xff]
          %v4734 = vld [vmem:[%s4 + $0x378] sm:$0xff]
          %v4735 = vld [vmem:[%s4 + $0x380] sm:$0xff]
          %v4736 = vld [vmem:[%s4 + $0x388] sm:$0xff]
          %v4737 = vld [vmem:[%s4 + $0x390] sm:$0xff]
          %v4738 = vld [vmem:[%s4 + $0x398] sm:$0xff]
          %v4739 = vld [vmem:[%s4 + $0x3a0] sm:$0xff]
          %v4740 = vld [vmem:[%s4 + $0x3a8] sm:$0xff]
          %v4741 = vld [vmem:[%s4 + $0x3b0] sm:$0xff]
          %v4742 = vld [vmem:[%s4 + $0x3b8] sm:$0xff]
          %v4743 = vld [vmem:[%s4 + $0x3c0] sm:$0xff]
          %v4744 = vld [vmem:[%s4 + $0x3c8] sm:$0xff]
          %v4745 = vld [vmem:[%s4 + $0x3d0] sm:$0xff]
          %v4746 = vld [vmem:[%s4 + $0x3d8] sm:$0xff]
          %v4747 = vld [vmem:[%s4 + $0x3e0] sm:$0xff]
          %v4748 = vld [vmem:[%s4 + $0x3e8] sm:$0xff]
          %v4749 = vld [vmem:[%s4 + $0x3f0] sm:$0xff]
          %v4750 = vld [vmem:[%s4 + $0x3f8] sm:$0xff]
          %v4751 = vld [vmem:[%s4 + $0x400] sm:$0xff]
          %v4752 = vld [vmem:[%s4 + $0x408] sm:$0xff]
          %v4753 = vld [vmem:[%s4 + $0x410] sm:$0xff]
          %v4754 = vld [vmem:[%s4 + $0x418] sm:$0xff]
          %v4755 = vld [vmem:[%s4 + $0x420] sm:$0xff]
          %v4756 = vld [vmem:[%s4 + $0x428] sm:$0xff]
          %v4757 = vld [vmem:[%s4 + $0x430] sm:$0xff]
          %v4758 = vld [vmem:[%s4 + $0x438] sm:$0xff]
          %v4759 = vld [vmem:[%s4 + $0x440] sm:$0xff]
          %v4760 = vld [vmem:[%s4 + $0x448] sm:$0xff]
          %v4761 = vld [vmem:[%s4 + $0x450] sm:$0xff]
          %v4762 = vld [vmem:[%s4 + $0x458] sm:$0xff]
          %v4763 = vld [vmem:[%s4 + $0x460] sm:$0xff]
          %v4764 = vld [vmem:[%s4 + $0x468] sm:$0xff]
          %v4765 = vld [vmem:[%s4 + $0x470] sm:$0xff]
          %v4766 = vld [vmem:[%s4 + $0x478] sm:$0xff]
          %v4767 = vld [vmem:[%s4 + $0x480] sm:$0xff]
          %v4768 = vld [vmem:[%s4 + $0x488] sm:$0xff]
          %v4769 = vld [vmem:[%s4 + $0x490] sm:$0xff]
          %v4770 = vld [vmem:[%s4 + $0x498] sm:$0xff]
          %v4771 = vld [vmem:[%s4 + $0x4a0] sm:$0xff]
          %v4772 = vld [vmem:[%s4 + $0x4a8] sm:$0xff]
          %v4773 = vld [vmem:[%s4 + $0x4b0] sm:$0xff]
          %v4774 = vld [vmem:[%s4 + $0x4b8] sm:$0xff]
          %v4775 = vld [vmem:[%s4 + $0x4c0] sm:$0xff]
          %v4776 = vld [vmem:[%s4 + $0x4c8] sm:$0xff]
          %v4777 = vld [vmem:[%s4 + $0x4d0] sm:$0xff]
          %v4778 = vld [vmem:[%s4 + $0x4d8] sm:$0xff]
          %v4779 = vld [vmem:[%s4 + $0x4e0] sm:$0xff]
          %v4780 = vld [vmem:[%s4 + $0x4e8] sm:$0xff]
          %v4781 = vld [vmem:[%s4 + $0x4f0] sm:$0xff]
          %v4782 = vld [vmem:[%s4 + $0x4f8] sm:$0xff]
          %v4783 = vld [vmem:[%s4 + $0x500] sm:$0xff]
          %v4784 = vld [vmem:[%s4 + $0x508] sm:$0xff]
          %v4785 = vld [vmem:[%s4 + $0x510] sm:$0xff]
          %v4786 = vld [vmem:[%s4 + $0x518] sm:$0xff]
          %v4787 = vld [vmem:[%s4 + $0x520] sm:$0xff]
          %v4788 = vld [vmem:[%s4 + $0x528] sm:$0xff]
          %v4789 = vld [vmem:[%s4 + $0x530] sm:$0xff]
          %v4790 = vld [vmem:[%s4 + $0x538] sm:$0xff]
          %v4791 = vld [vmem:[%s4 + $0x540] sm:$0xff]
          %v4792 = vld [vmem:[%s4 + $0x548] sm:$0xff]
          %v4793 = vld [vmem:[%s4 + $0x550] sm:$0xff]
          %v4794 = vld [vmem:[%s4 + $0x558] sm:$0xff]
          %v4795 = vld [vmem:[%s4 + $0x560] sm:$0xff]
          %v4796 = vld [vmem:[%s4 + $0x568] sm:$0xff]
          %v4797 = vld [vmem:[%s4 + $0x570] sm:$0xff]
          %v4798 = vld [vmem:[%s4 + $0x578] sm:$0xff]
          %v4799 = vld [vmem:[%s4 + $0x580] sm:$0xff]
          %v4800 = vld [vmem:[%s4 + $0x588] sm:$0xff]
          %v4801 = vld [vmem:[%s4 + $0x590] sm:$0xff]
          %v4802 = vld [vmem:[%s4 + $0x598] sm:$0xff]
          %v4803 = vld [vmem:[%s4 + $0x5a0] sm:$0xff]
          %v4804 = vld [vmem:[%s4 + $0x5a8] sm:$0xff]
          %v4805 = vld [vmem:[%s4 + $0x5b0] sm:$0xff]
          %v4806 = vld [vmem:[%s4 + $0x5b8] sm:$0xff]
          %v4807 = vld [vmem:[%s4 + $0x5c0] sm:$0xff]
          %v4808 = vld [vmem:[%s4 + $0x5c8] sm:$0xff]
          %v4809 = vld [vmem:[%s4 + $0x5d0] sm:$0xff]
          %v4810 = vld [vmem:[%s4 + $0x5d8] sm:$0xff]
          %v4811 = vld [vmem:[%s4 + $0x5e0] sm:$0xff]
          %v4812 = vld [vmem:[%s4 + $0x5e8] sm:$0xff]
          %v4813 = vld [vmem:[%s4 + $0x5f0] sm:$0xff]
          %v4814 = vld [vmem:[%s4 + $0x5f8] sm:$0xff]
          %v4815 = vld [vmem:[%s4 + $0x600] sm:$0xff]
          %v4816 = vld [vmem:[%s4 + $0x608] sm:$0xff]
          %v4817 = vld [vmem:[%s4 + $0x610] sm:$0xff]
          %v4818 = vld [vmem:[%s4 + $0x618] sm:$0xff]
          %v4819 = vld [vmem:[%s4 + $0x620] sm:$0xff]
          %v4820 = vld [vmem:[%s4 + $0x628] sm:$0xff]
          %v4821 = vld [vmem:[%s4 + $0x630] sm:$0xff]
          %v4822 = vld [vmem:[%s4 + $0x638] sm:$0xff]
          %v4823 = vld [vmem:[%s4 + $0x640] sm:$0xff]
          %v4824 = vld [vmem:[%s4 + $0x648] sm:$0xff]
          %v4825 = vld [vmem:[%s4 + $0x650] sm:$0xff]
          %v4826 = vld [vmem:[%s4 + $0x658] sm:$0xff]
          %v4827 = vld [vmem:[%s4 + $0x660] sm:$0xff]
          %v4828 = vld [vmem:[%s4 + $0x668] sm:$0xff]
          %v4829 = vld [vmem:[%s4 + $0x670] sm:$0xff]
          %v4830 = vld [vmem:[%s4 + $0x678] sm:$0xff]
          %v4831 = vld [vmem:[%s4 + $0x680] sm:$0xff]
          %v4832 = vld [vmem:[%s4 + $0x688] sm:$0xff]
          %v4833 = vld [vmem:[%s4 + $0x690] sm:$0xff]
          %v4834 = vld [vmem:[%s4 + $0x698] sm:$0xff]
          %v4835 = vld [vmem:[%s4 + $0x6a0] sm:$0xff]
          %v4836 = vld [vmem:[%s4 + $0x6a8] sm:$0xff]
          %v4837 = vld [vmem:[%s4 + $0x6b0] sm:$0xff]
          %v4838 = vld [vmem:[%s4 + $0x6b8] sm:$0xff]
          %v4839 = vld [vmem:[%s4 + $0x6c0] sm:$0xff]
          %v4840 = vld [vmem:[%s4 + $0x6c8] sm:$0xff]
          %v4841 = vld [vmem:[%s4 + $0x6d0] sm:$0xff]
          %v4842 = vld [vmem:[%s4 + $0x6d8] sm:$0xff]
          %v4843 = vld [vmem:[%s4 + $0x6e0] sm:$0xff]
          %v4844 = vld [vmem:[%s4 + $0x6e8] sm:$0xff]
          %v4845 = vld [vmem:[%s4 + $0x6f0] sm:$0xff]
          %v4846 = vld [vmem:[%s4 + $0x6f8] sm:$0xff]
          %v4847 = vld [vmem:[%s4 + $0x700] sm:$0xff]
          %v4848 = vld [vmem:[%s4 + $0x708] sm:$0xff]
          %v4849 = vld [vmem:[%s4 + $0x710] sm:$0xff]
          %v4850 = vld [vmem:[%s4 + $0x718] sm:$0xff]
          %v4851 = vld [vmem:[%s4 + $0x720] sm:$0xff]
          %v4852 = vld [vmem:[%s4 + $0x728] sm:$0xff]
          %v4853 = vld [vmem:[%s4 + $0x730] sm:$0xff]
          %v4854 = vld [vmem:[%s4 + $0x738] sm:$0xff]
          %v4855 = vld [vmem:[%s4 + $0x740] sm:$0xff]
          %v4856 = vld [vmem:[%s4 + $0x748] sm:$0xff]
          %v4857 = vld [vmem:[%s4 + $0x750] sm:$0xff]
          %v4858 = vld [vmem:[%s4 + $0x758] sm:$0xff]
          %v4859 = vld [vmem:[%s4 + $0x760] sm:$0xff]
          %v4860 = vld [vmem:[%s4 + $0x768] sm:$0xff]
          %v4861 = vld [vmem:[%s4 + $0x770] sm:$0xff]
          %v4862 = vld [vmem:[%s4 + $0x778] sm:$0xff]
          %v4863 = vld [vmem:[%s4 + $0x780] sm:$0xff]
          %v4864 = vld [vmem:[%s4 + $0x788] sm:$0xff]
          %v4865 = vld [vmem:[%s4 + $0x790] sm:$0xff]
          %v4866 = vld [vmem:[%s4 + $0x798] sm:$0xff]
          %v4867 = vld [vmem:[%s4 + $0x7a0] sm:$0xff]
          %v4868 = vld [vmem:[%s4 + $0x7a8] sm:$0xff]
          %v4869 = vld [vmem:[%s4 + $0x7b0] sm:$0xff]
          %v4870 = vld [vmem:[%s4 + $0x7b8] sm:$0xff]
          %v4871 = vld [vmem:[%s4 + $0x7c0] sm:$0xff]
          %v4872 = vld [vmem:[%s4 + $0x7c8] sm:$0xff]
          %v4873 = vld [vmem:[%s4 + $0x7d0] sm:$0xff]
          %v4874 = vld [vmem:[%s4 + $0x7d8] sm:$0xff]
          %v4875 = vld [vmem:[%s4 + $0x7e0] sm:$0xff]
          %v4876 = vld [vmem:[%s4 + $0x7e8] sm:$0xff]
          %v4877 = vld [vmem:[%s4 + $0x7f0] sm:$0xff]
          %v4878 = vld [vmem:[%s4 + $0x7f8] sm:$0xff]
          %v4879 = vld [vmem:[%s5] sm:$0xf]
          %v4881 = vlaneseq
          %v4882 = vshrl.u32 %v4881, 7
          %v4883 = vsub.s32 0, %v4882
          %v4884 = vrot.slane %v4879, %v4883
          %v4885 = vlaneseq
          %v4886 = vshrl.u32 %v4885, 7
          %v4887 = vsub.s32 1, %v4886
          %v4888 = vrot.slane %v4879, %v4887
          %v4889 = vlaneseq
          %v4890 = vshrl.u32 %v4889, 7
          %v4891 = vsub.s32 2, %v4890
          %v4892 = vrot.slane %v4879, %v4891
          %v4893 = vlaneseq
          %v4894 = vshrl.u32 %v4893, 7
          %v4895 = vsub.s32 3, %v4894
          %v4896 = vrot.slane %v4879, %v4895
          %v4902 = vcombine.high %v4622, %v4622
          %v4904 = vunpack.c.l.s4 1983009808
          %v4905 = vunpack.c.0.s8 %v4904
          %v4906 = vlaneseq
          %v4907 = vshrl.u32 %v4906, 7
          %v4908 = vsub.s32 %v4905, %v4907
          %v4909 = vrot.slane %v4622, %v4908
          %v4911 = vunpack.c.l.s4 1983009808
          %v4912 = vunpack.c.0.s8 %v4911
          %v4913 = vlaneseq
          %v4914 = vshrl.u32 %v4913, 7
          %v4915 = vsub.s32 %v4912, %v4914
          %v4916 = vrot.slane %v4902, %v4915
          %v4917 = vcombine.high %v4909, %v4909
          %v4918 = vcombine.high %v4916, %v4916
          %4923 = vmatprep.subr.mxu0 %v4624
          %4924 = vmatpush1.msra.mxu0 %v4623
          %4925 = vmatprep.subr.mxu0 %v4628
          %4926 = vmatpush1.msra.mxu0 %v4627
          %4927 = vmatprep.subr.mxu0 %v4632
          %4928 = vmatpush1.msra.mxu0 %v4631
          %4929 = vmatprep.subr.mxu0 %v4636
          %4930 = vmatpush1.msra.mxu0 %v4635
          %4931 = vmatprep.subr.mxu0 %v4640
          %4932 = vmatpush1.msra.mxu0 %v4639
          %4933 = vmatprep.subr.mxu0 %v4644
          %4934 = vmatpush1.msra.mxu0 %v4643
          %4935 = vmatprep.subr.mxu0 %v4648
          %4936 = vmatpush1.msra.mxu0 %v4647
          %4937 = vmatprep.subr.mxu0 %v4652
          %4938 = vmatpush1.msra.mxu0 %v4651
          %4939 = vmatprep.subr.mxu0 %v4656
          %4940 = vmatpush1.msra.mxu0 %v4655
          %4941 = vmatprep.subr.mxu0 %v4660
          %4942 = vmatpush1.msra.mxu0 %v4659
          %4943 = vmatprep.subr.mxu0 %v4664
          %4944 = vmatpush1.msra.mxu0 %v4663
          %4945 = vmatprep.subr.mxu0 %v4668
          %4946 = vmatpush1.msra.mxu0 %v4667
          %4947 = vmatprep.subr.mxu0 %v4672
          %4948 = vmatpush1.msra.mxu0 %v4671
          %4949 = vmatprep.subr.mxu0 %v4676
          %4950 = vmatpush1.msra.mxu0 %v4675
          %4951 = vmatprep.subr.mxu0 %v4680
          %4952 = vmatpush1.msra.mxu0 %v4679
          %4953 = vmatprep.subr.mxu0 %v4684
          %4954 = vmatpush1.msra.mxu0 %v4683
          %4955 = vmatprep.subr.mxu0 %v4688
          %4956 = vmatpush1.msra.mxu0 %v4687
          %4957 = vmatprep.subr.mxu0 %v4692
          %4958 = vmatpush1.msra.mxu0 %v4691
          %4959 = vmatprep.subr.mxu0 %v4696
          %4960 = vmatpush1.msra.mxu0 %v4695
          %4961 = vmatprep.subr.mxu0 %v4700
          %4962 = vmatpush1.msra.mxu0 %v4699
          %4963 = vmatprep.subr.mxu0 %v4704
          %4964 = vmatpush1.msra.mxu0 %v4703
          %4965 = vmatprep.subr.mxu0 %v4708
          %4966 = vmatpush1.msra.mxu0 %v4707
          %4967 = vmatprep.subr.mxu0 %v4712
          %4968 = vmatpush1.msra.mxu0 %v4711
          %4969 = vmatprep.subr.mxu0 %v4716
          %4970 = vmatpush1.msra.mxu0 %v4715
          %4971 = vmatprep.subr.mxu0 %v4720
          %4972 = vmatpush1.msra.mxu0 %v4719
          %4973 = vmatprep.subr.mxu0 %v4724
          %4974 = vmatpush1.msra.mxu0 %v4723
          %4975 = vmatprep.subr.mxu0 %v4728
          %4976 = vmatpush1.msra.mxu0 %v4727
          %4977 = vmatprep.subr.mxu0 %v4732
          %4978 = vmatpush1.msra.mxu0 %v4731
          %4979 = vmatprep.subr.mxu0 %v4736
          %4980 = vmatpush1.msra.mxu0 %v4735
          %4981 = vmatprep.subr.mxu0 %v4740
          %4982 = vmatpush1.msra.mxu0 %v4739
          %4983 = vmatprep.subr.mxu0 %v4744
          %4984 = vmatpush1.msra.mxu0 %v4743
          %4985 = vmatprep.subr.mxu0 %v4748
          %4986 = vmatpush1.msra.mxu0 %v4747
          %4987 = vmatprep.mubr.f32.mxu0 %v4917
          %4988 = vmatmul.mubr.f32.gmra.mrb[0].mxu0 %v4909
          %v4989 = vpop.f32.mrb[0].mxu0
          %v4990 = vadd.f32 %v4884, %v4989
          %v4991 = vpop.f32.mrb[0].mxu0
          %v4992 = vadd.f32 %v4888, %v4991
          %4993 = vdwg.mxu0
          %4994 = vmatprep.subr.mxu0 %v4752
          %4995 = vmatpush1.msra.mxu0 %v4751
          %4996 = vmatprep.subr.mxu0 %v4756
          %4997 = vmatpush1.msra.mxu0 %v4755
          %4998 = vmatprep.subr.mxu0 %v4760
          %4999 = vmatpush1.msra.mxu0 %v4759
          %5000 = vmatprep.subr.mxu0 %v4764
          %5001 = vmatpush1.msra.mxu0 %v4763
          %5002 = vmatprep.subr.mxu0 %v4768
          %5003 = vmatpush1.msra.mxu0 %v4767
          %5004 = vmatprep.subr.mxu0 %v4772
          %5005 = vmatpush1.msra.mxu0 %v4771
          %5006 = vmatprep.subr.mxu0 %v4776
          %5007 = vmatpush1.msra.mxu0 %v4775
          %5008 = vmatprep.subr.mxu0 %v4780
          %5009 = vmatpush1.msra.mxu0 %v4779
          %5010 = vmatprep.subr.mxu0 %v4784
          %5011 = vmatpush1.msra.mxu0 %v4783
          %5012 = vmatprep.subr.mxu0 %v4788
          %5013 = vmatpush1.msra.mxu0 %v4787
          %5014 = vmatprep.subr.mxu0 %v4792
          %5015 = vmatpush1.msra.mxu0 %v4791
          %5016 = vmatprep.subr.mxu0 %v4796
          %5017 = vmatpush1.msra.mxu0 %v4795
          %5018 = vmatprep.subr.mxu0 %v4800
          %5019 = vmatpush1.msra.mxu0 %v4799
          %5020 = vmatprep.subr.mxu0 %v4804
          %5021 = vmatpush1.msra.mxu0 %v4803
          %5022 = vmatprep.subr.mxu0 %v4808
          %5023 = vmatpush1.msra.mxu0 %v4807
          %5024 = vmatprep.subr.mxu0 %v4812
          %5025 = vmatpush1.msra.mxu0 %v4811
          %5026 = vmatprep.subr.mxu0 %v4816
          %5027 = vmatpush1.msra.mxu0 %v4815
          %5028 = vmatprep.subr.mxu0 %v4820
          %5029 = vmatpush1.msra.mxu0 %v4819
          %5030 = vmatprep.subr.mxu0 %v4824
          %5031 = vmatpush1.msra.mxu0 %v4823
          %5032 = vmatprep.subr.mxu0 %v4828
          %5033 = vmatpush1.msra.mxu0 %v4827
          %5034 = vmatprep.subr.mxu0 %v4832
          %5035 = vmatpush1.msra.mxu0 %v4831
          %5036 = vmatprep.subr.mxu0 %v4836
          %5037 = vmatpush1.msra.mxu0 %v4835
          %5038 = vmatprep.subr.mxu0 %v4840
          %5039 = vmatpush1.msra.mxu0 %v4839
          %5040 = vmatprep.subr.mxu0 %v4844
          %5041 = vmatpush1.msra.mxu0 %v4843
          %5042 = vmatprep.subr.mxu0 %v4848
          %5043 = vmatpush1.msra.mxu0 %v4847
          %5044 = vmatprep.subr.mxu0 %v4852
          %5045 = vmatpush1.msra.mxu0 %v4851
          %5046 = vmatprep.subr.mxu0 %v4856
          %5047 = vmatpush1.msra.mxu0 %v4855
          %5048 = vmatprep.subr.mxu0 %v4860
          %5049 = vmatpush1.msra.mxu0 %v4859
          %5050 = vmatprep.subr.mxu0 %v4864
          %5051 = vmatpush1.msra.mxu0 %v4863
          %5052 = vmatprep.subr.mxu0 %v4868
          %5053 = vmatpush1.msra.mxu0 %v4867
          %5054 = vmatprep.subr.mxu0 %v4872
          %5055 = vmatpush1.msra.mxu0 %v4871
          %5056 = vmatprep.subr.mxu0 %v4876
          %5057 = vmatpush1.msra.mxu0 %v4875
          %5058 = vmatprep.mubr.f32.mxu0 %v4918
          %5059 = vmatmul.mubr.f32.gmra.mrb[0].mxu0 %v4916
          %v5060 = vpop.f32.mrb[0].mxu0
          %v5061 = vadd.f32 %v4990, %v5060
          %v5062 = vpop.f32.mrb[0].mxu0
          %v5063 = vadd.f32 %v4992, %v5062
          %5064 = vdwg.mxu0
          %5065 = vmatprep.subr.mxu0 %v4626
          %5066 = vmatpush1.msra.mxu0 %v4625
          %5067 = vmatprep.subr.mxu0 %v4630
          %5068 = vmatpush1.msra.mxu0 %v4629
          %5069 = vmatprep.subr.mxu0 %v4634
          %5070 = vmatpush1.msra.mxu0 %v4633
          %5071 = vmatprep.subr.mxu0 %v4638
          %5072 = vmatpush1.msra.mxu0 %v4637
          %5073 = vmatprep.subr.mxu0 %v4642
          %5074 = vmatpush1.msra.mxu0 %v4641
          %5075 = vmatprep.subr.mxu0 %v4646
          %5076 = vmatpush1.msra.mxu0 %v4645
          %5077 = vmatprep.subr.mxu0 %v4650
          %5078 = vmatpush1.msra.mxu0 %v4649
          %5079 = vmatprep.subr.mxu0 %v4654
          %5080 = vmatpush1.msra.mxu0 %v4653
          %5081 = vmatprep.subr.mxu0 %v4658
          %5082 = vmatpush1.msra.mxu0 %v4657
          %5083 = vmatprep.subr.mxu0 %v4662
          %5084 = vmatpush1.msra.mxu0 %v4661
          %5085 = vmatprep.subr.mxu0 %v4666
          %5086 = vmatpush1.msra.mxu0 %v4665
          %5087 = vmatprep.subr.mxu0 %v4670
          %5088 = vmatpush1.msra.mxu0 %v4669
          %5089 = vmatprep.subr.mxu0 %v4674
          %5090 = vmatpush1.msra.mxu0 %v4673
          %5091 = vmatprep.subr.mxu0 %v4678
          %5092 = vmatpush1.msra.mxu0 %v4677
          %5093 = vmatprep.subr.mxu0 %v4682
          %5094 = vmatpush1.msra.mxu0 %v4681
          %5095 = vmatprep.subr.mxu0 %v4686
          %5096 = vmatpush1.msra.mxu0 %v4685
          %5097 = vmatprep.subr.mxu0 %v4690
          %5098 = vmatpush1.msra.mxu0 %v4689
          %5099 = vmatprep.subr.mxu0 %v4694
          %5100 = vmatpush1.msra.mxu0 %v4693
          %5101 = vmatprep.subr.mxu0 %v4698
          %5102 = vmatpush1.msra.mxu0 %v4697
          %5103 = vmatprep.subr.mxu0 %v4702
          %5104 = vmatpush1.msra.mxu0 %v4701
          %5105 = vmatprep.subr.mxu0 %v4706
          %5106 = vmatpush1.msra.mxu0 %v4705
          %5107 = vmatprep.subr.mxu0 %v4710
          %5108 = vmatpush1.msra.mxu0 %v4709
          %5109 = vmatprep.subr.mxu0 %v4714
          %5110 = vmatpush1.msra.mxu0 %v4713
          %5111 = vmatprep.subr.mxu0 %v4718
          %5112 = vmatpush1.msra.mxu0 %v4717
          %5113 = vmatprep.subr.mxu0 %v4722
          %5114 = vmatpush1.msra.mxu0 %v4721
          %5115 = vmatprep.subr.mxu0 %v4726
          %5116 = vmatpush1.msra.mxu0 %v4725
          %5117 = vmatprep.subr.mxu0 %v4730
          %5118 = vmatpush1.msra.mxu0 %v4729
          %5119 = vmatprep.subr.mxu0 %v4734
          %5120 = vmatpush1.msra.mxu0 %v4733
          %5121 = vmatprep.subr.mxu0 %v4738
          %5122 = vmatpush1.msra.mxu0 %v4737
          %5123 = vmatprep.subr.mxu0 %v4742
          %5124 = vmatpush1.msra.mxu0 %v4741
          %5125 = vmatprep.subr.mxu0 %v4746
          %5126 = vmatpush1.msra.mxu0 %v4745
          %5127 = vmatprep.subr.mxu0 %v4750
          %5128 = vmatpush1.msra.mxu0 %v4749
          %5129 = vmatprep.mubr.f32.mxu0 %v4917
          %5130 = vmatmul.mubr.f32.gmra.mrb[0].mxu0 %v4909
          %v5131 = vpop.f32.mrb[0].mxu0
          %v5132 = vadd.f32 %v4892, %v5131
          %v5133 = vpop.f32.mrb[0].mxu0
          %v5134 = vadd.f32 %v4896, %v5133
          %5135 = vdwg.mxu0
          %5136 = vmatprep.subr.mxu0 %v4754
          %5137 = vmatpush1.msra.mxu0 %v4753
          %5138 = vmatprep.subr.mxu0 %v4758
          %5139 = vmatpush1.msra.mxu0 %v4757
          %5140 = vmatprep.subr.mxu0 %v4762
          %5141 = vmatpush1.msra.mxu0 %v4761
          %5142 = vmatprep.subr.mxu0 %v4766
          %5143 = vmatpush1.msra.mxu0 %v4765
          %5144 = vmatprep.subr.mxu0 %v4770
          %5145 = vmatpush1.msra.mxu0 %v4769
          %5146 = vmatprep.subr.mxu0 %v4774
          %5147 = vmatpush1.msra.mxu0 %v4773
          %5148 = vmatprep.subr.mxu0 %v4778
          %5149 = vmatpush1.msra.mxu0 %v4777
          %5150 = vmatprep.subr.mxu0 %v4782
          %5151 = vmatpush1.msra.mxu0 %v4781
          %5152 = vmatprep.subr.mxu0 %v4786
          %5153 = vmatpush1.msra.mxu0 %v4785
          %5154 = vmatprep.subr.mxu0 %v4790
          %5155 = vmatpush1.msra.mxu0 %v4789
          %5156 = vmatprep.subr.mxu0 %v4794
          %5157 = vmatpush1.msra.mxu0 %v4793
          %5158 = vmatprep.subr.mxu0 %v4798
          %5159 = vmatpush1.msra.mxu0 %v4797
          %5160 = vmatprep.subr.mxu0 %v4802
          %5161 = vmatpush1.msra.mxu0 %v4801
          %5162 = vmatprep.subr.mxu0 %v4806
          %5163 = vmatpush1.msra.mxu0 %v4805
          %5164 = vmatprep.subr.mxu0 %v4810
          %5165 = vmatpush1.msra.mxu0 %v4809
          %5166 = vmatprep.subr.mxu0 %v4814
          %5167 = vmatpush1.msra.mxu0 %v4813
          %5168 = vmatprep.subr.mxu0 %v4818
          %5169 = vmatpush1.msra.mxu0 %v4817
          %5170 = vmatprep.subr.mxu0 %v4822
          %5171 = vmatpush1.msra.mxu0 %v4821
          %5172 = vmatprep.subr.mxu0 %v4826
          %5173 = vmatpush1.msra.mxu0 %v4825
          %5174 = vmatprep.subr.mxu0 %v4830
          %5175 = vmatpush1.msra.mxu0 %v4829
          %5176 = vmatprep.subr.mxu0 %v4834
          %5177 = vmatpush1.msra.mxu0 %v4833
          %5178 = vmatprep.subr.mxu0 %v4838
          %5179 = vmatpush1.msra.mxu0 %v4837
          %5180 = vmatprep.subr.mxu0 %v4842
          %5181 = vmatpush1.msra.mxu0 %v4841
          %5182 = vmatprep.subr.mxu0 %v4846
          %5183 = vmatpush1.msra.mxu0 %v4845
          %5184 = vmatprep.subr.mxu0 %v4850
          %5185 = vmatpush1.msra.mxu0 %v4849
          %5186 = vmatprep.subr.mxu0 %v4854
          %5187 = vmatpush1.msra.mxu0 %v4853
          %5188 = vmatprep.subr.mxu0 %v4858
          %5189 = vmatpush1.msra.mxu0 %v4857
          %5190 = vmatprep.subr.mxu0 %v4862
          %5191 = vmatpush1.msra.mxu0 %v4861
          %5192 = vmatprep.subr.mxu0 %v4866
          %5193 = vmatpush1.msra.mxu0 %v4865
          %5194 = vmatprep.subr.mxu0 %v4870
          %5195 = vmatpush1.msra.mxu0 %v4869
          %5196 = vmatprep.subr.mxu0 %v4874
          %5197 = vmatpush1.msra.mxu0 %v4873
          %5198 = vmatprep.subr.mxu0 %v4878
          %5199 = vmatpush1.msra.mxu0 %v4877
          %5200 = vmatprep.mubr.f32.mxu0 %v4918
          %5201 = vmatmul.mubr.f32.gmra.mrb[0].mxu0 %v4916
          %v5202 = vpop.f32.mrb[0].mxu0
          %v5203 = vadd.f32 %v5132, %v5202
          %v5204 = vpop.f32.mrb[0].mxu0
          %v5205 = vadd.f32 %v5134, %v5204
          %5206 = vdwg.mxu0
          %vm5207 = vcmp.ge.f32.partialorder %v5061, 0.0
          %vm5208 = vcmp.ge.f32.partialorder %v5063, 0.0
          %vm5209 = vcmp.ge.f32.partialorder %v5203, 0.0
          %vm5210 = vcmp.ge.f32.partialorder %v5205, 0.0
          %v5211 = vmul.f32 %v4620, %v5061
          %v5212 = vmul.f32 %v4620, %v5063
          %v5213 = vmul.f32 %v4620, %v5203
          %v5214 = vmul.f32 %v4620, %v5205
          %v5215 = vsel %vm5207, %v5061, %v5211
          %v5216 = vsel %vm5208, %v5063, %v5212
          %v5217 = vsel %vm5209, %v5203, %v5213
          %v5218 = vsel %vm5210, %v5205, %v5214
          %v5219 = vld [vmem:[%s6] sm:$0xf]
          %v5221 = vlaneseq
          %v5222 = vshrl.u32 %v5221, 7
          %v5223 = vsub.s32 0, %v5222
          %v5224 = vrot.slane %v5219, %v5223
          %v5225 = vlaneseq
          %v5226 = vshrl.u32 %v5225, 7
          %v5227 = vsub.s32 1, %v5226
          %v5228 = vrot.slane %v5219, %v5227
          %v5229 = vlaneseq
          %v5230 = vshrl.u32 %v5229, 7
          %v5231 = vsub.s32 2, %v5230
          %v5232 = vrot.slane %v5219, %v5231
          %v5233 = vlaneseq
          %v5234 = vshrl.u32 %v5233, 7
          %v5235 = vsub.s32 3, %v5234
          %v5236 = vrot.slane %v5219, %v5235
          %v5241 = vmul.f32 %v5215, %v5224
          %v5242 = vmul.f32 %v5216, %v5228
          %v5243 = vmul.f32 %v5217, %v5232
          %v5244 = vmul.f32 %v5218, %v5236
          %vm5245 = vcmask 1041408
          %v5246 = vsel %vm5245, %v5241, 0.0
          %v5247 = vsel %vm5245, %v5242, 0.0
          %v5248 = vadd.f32 %v5246, %v5247
          %v5249 = vsel %vm5245, %v5243, 0.0
          %v5250 = vadd.f32 %v5248, %v5249
          %v5251 = vsel %vm5245, %v5244, 0.0
          %v5252 = vadd.f32 %v5250, %v5251
          %5253 = vadd.xlane.f32.xlu0 %v5252
          %v5254 = vpop.xlane.xlu0 %5253
          %v5255 = vstv %s4580
          %v5256 = vadd.f32 %v5254, %v5255
          %vm5257 = vcmask 1024
          %5258 = vst.msk [vmem:[%s7] sm:$0x3] %vm5257, %v5256
        $region64: #{feature_discriminator.1} parent=47 // pred_fallthru
          _
        // Predicated region
        $region65: #{feature_discriminator.1} parent=47 // pred_check
          %p5259 = pneg %p192
        $region66: #{feature_discriminator.1} parent=47 // pred_check_branch
          %5261 = sbr.rel (%p5259) target = $region68
        $region67: #{feature_discriminator.1} parent=47 // pred_region
          _
        $region68: #{feature_discriminator.1} parent=47 // pred_fallthru
          _
        // Predicated region
        $region69: #{feature_discriminator.1} parent=47 // pred_check
          %p5262 = pneg %p192
        $region70: #{feature_discriminator.1} parent=47 // pred_check_branch
          %5264 = sbr.rel (%p5262) target = $region72
        $region71: #{feature_discriminator.1} parent=47 // pred_region
          _
        $region72: #{feature_discriminator.1} parent=47 // pred_fallthru
          _
      $region48: #{feature_discriminator.1} parent=5 // pred_fallthru
        _
      %p5265 = scmp.le.s32.totalorder 2, %s17
      // Predicated region
      $region73: #{feature_discriminator.1} parent=5 // pred_check
        %p5266 = pneg %p5265
      $region74: #{feature_discriminator.1} parent=5 // pred_check_branch
        %5268 = sbr.rel (%p5266) target = $region76
      $region75: #{feature_discriminator.1} parent=5 // pred_region
        %s5269 = ssub.s32 %s17, 2
      $region76: #{feature_discriminator.1} parent=5 // pred_fallthru
        _
    $region6: #{feature_discriminator.1} parent=1 // loop_footer
      %s21 = sadd.s32 1, %s17
    $region7: #{feature_discriminator.1} parent=1 // loop_footer_branch
      %16 = sbr.rel target = $region3
    $region8: #{feature_discriminator.1} parent=1 // loop_exit
      _
    %5270 = vsyncpa [#allocation4], 1
    %s5271 = scalar_lea.sflag [#allocation4], 1
    %5272 = vsyncpa %s5271, 1
    %5273 = vsyncpa [#allocation5], 1
    %s5274 = scalar_lea.sflag [#allocation5], 1
    %5275 = vsyncpa %s5274, 1

</llo_original>
